<compile_context>
chip_gen: v5e
topology: v5e:2x2
jax: 0.10.0
libtpu: 0.0.40
codegen_flags: <defaults>
</compile_context>

<pallas_src>
import functools

import jax
import jax.numpy as jnp
from jax import lax
from jax.experimental import pallas as pl
from jax.experimental.pallas import tpu as pltpu

EMBED_DIM = 128
HIDDEN = 128
RATIO = 0.9            # TopKPooling ratio (Python float -> literal, never a captured const)
NEG_FILL = -1e30       # finite fill for masked max (Python float)

VMEM = pl.BlockSpec(memory_space=pltpu.MemorySpace.VMEM)


# ------------------------------ fused kernel ------------------------------- #

def fused_net_kernel(a_ref, x0_ref, same_ref, bbn_ref, bnb_ref,
                     wc1_ref, b1_ref, pw1_ref,
                     wc2_ref, b2_ref, pw2_ref,
                     wc3_ref, b3_ref, pw3_ref,
                     lw1_ref, lb1_ref, lw2_ref, lb2_ref,
                     emb_ref, out_ref):
    """conv1..3 + pool1..3 + readouts + MLP + per-node sigmoid scores, all fused."""
    a_bf = a_ref[...]                                   # [N,N] bf16, DMA'd once
    same = same_ref[...]                                # [N,N] 1 iff same graph & valid
    bbn = bbn_ref[...]                                  # [B,N] graph one-hot (row layout)
    bnb = bnb_ref[...]                                  # [N,B] graph one-hot (col layout)
    n = same.shape[0]

    rows = lax.broadcasted_iota(jnp.int32, (n, n), 0)
    cols = lax.broadcasted_iota(jnp.int32, (n, n), 1)
    peers = same * (rows != cols).astype(jnp.float32)   # same-graph, excluding self

    # initial alive masks (valid = belongs to some graph), in both orientations
    alive_row = jnp.sum(bbn, axis=0, keepdims=True)     # [1,N]
    alive_col = jnp.sum(bnb, axis=1, keepdims=True)     # [N,1]

    def graphconv_relu(x_bf, wcat_bf, b):
        # relu( concat([A@x, x],1) @ concat([Wrel,Wroot],0) + b )   (bf16 MXU, f32 acc)
        agg = jnp.dot(a_bf, x_bf, preferred_element_type=jnp.float32)
        xa = jnp.concatenate([agg.astype(jnp.bfloat16), x_bf], axis=1)
        h = jnp.dot(xa, wcat_bf, preferred_element_type=jnp.float32) + b
        return jnp.maximum(h, 0.0)

    def pool_readout(h, pw_row, alive_col, alive_row):
        # scores (weight already unit-normalized in JAX) in both orientations so the
        # [N,N] rank compare needs no in-kernel transpose.
        s_col = jnp.sum(h * pw_row, axis=-1, keepdims=True)                     # [N,1]
        s_row = lax.dot_general(pw_row, h, (((1,), (1,)), ((), ())),
                                preferred_element_type=jnp.float32)             # [1,N]
        # per-node alive same-graph count -> k = ceil(ratio * count)
        cnt_col = jnp.sum(same * alive_row, axis=1, keepdims=True)
        cnt_row = jnp.sum(same * alive_col, axis=0, keepdims=True)
        k_col = jnp.ceil(RATIO * cnt_col)
        k_row = jnp.ceil(RATIO * cnt_row)
        # rank-by-counting: #alive same-graph peers with strictly greater score.
        # (ties may keep >k nodes; measure-zero for float scores)
        rank_col = jnp.sum(jnp.where(s_row > s_col, peers * alive_row, 0.0),
                           axis=1, keepdims=True)                               # [N,1]
        rank_row = jnp.sum(jnp.where(s_col > s_row, peers * alive_col, 0.0),
                           axis=0, keepdims=True)                               # [1,N]
        keep_col = jnp.where((rank_col < k_col) & (alive_col > 0.5), 1.0, 0.0)
        keep_row = jnp.where((rank_row < k_row) & (alive_row > 0.5), 1.0, 0.0)
        # survivors gated by tanh(score) (PyG: x[perm] * score[perm]); dropped rows -> 0
        xp = h * (jnp.tanh(s_col) * keep_col)                                   # [N,F] f32
        xp_bf = xp.astype(jnp.bfloat16)       # cast once; reused by gap + next conv
        # readout [gmp | gap] over surviving nodes
        alive_bn = bbn * keep_row                                               # [B,N]
        cnt_b = jnp.maximum(jnp.sum(alive_bn, axis=1, keepdims=True), 1.0)
        gap = jnp.dot(alive_bn.astype(jnp.bfloat16), xp_bf,
                      preferred_element_type=jnp.float32) / cnt_b               # [B,F]
        gmp_rows = []
        for g in range(bbn.shape[0]):         # static unroll over B=2 graphs
            # TODO(synk): for large B replace with a fori_loop / segment-max formulation.
            m = (bnb[:, g:g + 1] * keep_col) > 0.5
            gmp_rows.append(jnp.max(jnp.where(m, xp, NEG_FILL), axis=0, keepdims=True))
        gmp = jnp.concatenate(gmp_rows, axis=0)                                 # [B,F]
        ro = jnp.concatenate([gmp, gap], axis=1)                                # [B,2F]
        return xp_bf, keep_col, keep_row, ro

    # ---- three conv + pool + readout stages (all VMEM-resident) ------------
    h1 = graphconv_relu(x0_ref[...], wc1_ref[...], b1_ref[...])
    xp1, alive_col, alive_row, ro1 = pool_readout(h1, pw1_ref[...], alive_col, alive_row)
    h2 = graphconv_relu(xp1, wc2_ref[...], b2_ref[...])
    xp2, alive_col, alive_row, ro2 = pool_readout(h2, pw2_ref[...], alive_col, alive_row)
    h3 = graphconv_relu(xp2, wc3_ref[...], b3_ref[...])
    _, _, _, ro3 = pool_readout(h3, pw3_ref[...], alive_col, alive_row)

    # ---- MLP head -----------------------------------------------------------
    x = ro1 + ro2 + ro3                                                         # [B,256]
    hm = jnp.dot(x.astype(jnp.bfloat16), lw1_ref[...],
                 preferred_element_type=jnp.float32) + lb1_ref[...]
    hm = jnp.maximum(hm, 0.0)
    xg = jnp.dot(hm.astype(jnp.bfloat16), lw2_ref[...],
                 preferred_element_type=jnp.float32) + lb2_ref[...]
    # TODO(synk): F.dropout(p=0.5) implemented as eval-mode identity (training path omitted).
    xg = jnp.maximum(xg, 0.0)                                                   # [B,128]

    # per-node score: sigmoid( emb_item[n] . xg[batch[n]] ), lane-dense [1,N]
    m = lax.dot_general(xg.astype(jnp.bfloat16), emb_ref[...],
                        (((1,), (1,)), ((), ())),
                        preferred_element_type=jnp.float32)                     # [B,N]
    logits = jnp.sum(m * bbn, axis=0, keepdims=True)                            # [1,N]
    sig = pl.reciprocal(1.0 + jnp.exp(-logits), approx=True)                    # EUP path
    out_ref[...] = jnp.minimum(sig, 1.0)       # only upper clamp (approx overshoot)


# ----------------------------- Pallas wrapper ------------------------------ #

def fused_forward(args, npad, num_graphs):
    bytes_accessed = sum(int(a.size) * a.dtype.itemsize for a in args) + 4 * npad
    flops = (2 * npad * npad * (2 * EMBED_DIM)                  # conv1 aggregation
             + 2 * npad * (4 * EMBED_DIM) * HIDDEN              # conv1 merged matmul
             + 2 * (2 * npad * npad * HIDDEN
                    + 2 * npad * (2 * HIDDEN) * HIDDEN)         # conv2/3
             + 12 * npad * npad                                 # rank/count passes
             + 2 * num_graphs * (256 * 256 + 256 * 128 + EMBED_DIM * npad))
    return pl.pallas_call(
        fused_net_kernel,
        out_shape=jax.ShapeDtypeStruct((1, npad), jnp.float32),
        in_specs=[VMEM] * len(args),
        out_specs=VMEM,
        cost_estimate=pl.CostEstimate(flops=int(flops),
                                      transcendentals=int(5 * npad),
                                      bytes_accessed=int(bytes_accessed)),
    )(*args)


# ------------------------------- JAX glue ---------------------------------- #

@functools.partial(jax.jit, static_argnums=(4,))
def net_forward(params, x_nodes, edge_index, batch, num_graphs):
    N = x_nodes.shape[0]
    NPAD = ((N + 127) // 128) * 128            # lane-dense padded node count

    item_id = x_nodes[:, 0, 0]
    category = x_nodes[:, 0, 1]
    emb_item = jnp.take(params['item_emb'], item_id, axis=0)       # [N,128]
    emb_cat = jnp.take(params['cat_emb'], category, axis=0)        # [N,128]

    def pad_rows(a):
        return jnp.zeros((NPAD,) + a.shape[1:], a.dtype).at[:N].set(a)

    x0 = pad_rows(jnp.concatenate([emb_item, emb_cat], axis=1)).astype(jnp.bfloat16)
    emb_item_p = pad_rows(emb_item).astype(jnp.bfloat16)

    # dense aggregation matrix: agg[i] = sum over edges (src -> i) of x[src]
    A = jnp.zeros((NPAD, NPAD), jnp.float32).at[edge_index[1], edge_index[0]].add(1.0)
    a_bf = A.astype(jnp.bfloat16)              # exact for small integer edge counts

    batch_pad = jnp.full((NPAD,), -1, jnp.int32).at[:N].set(batch)
    bbn = (batch_pad[None, :] == jnp.arange(num_graphs)[:, None]).astype(jnp.float32)
    bnb = bbn.T
    same = jnp.dot(bnb, bbn)                   # [NPAD,NPAD]: same graph & both valid

    # one-time per-forward parameter prep (hoisted out of the kernel)
    wcat = [jnp.concatenate([c['wrel'], c['wroot']], axis=0).astype(jnp.bfloat16)
            for c in params['convs']]
    bias = [c['b'] for c in params['convs']]
    pw = [(w / jnp.sqrt(jnp.sum(w * w))).reshape(1, -1)            # [1,F], unit norm
          for w in params['pool_w']]

    args = (a_bf, x0, same, bbn, bnb,
            wcat[0], bias[0], pw[0],
            wcat[1], bias[1], pw[1],
            wcat[2], bias[2], pw[2],
            params['lin1_w'].astype(jnp.bfloat16), params['lin1_b'],
            params['lin2_w'].astype(jnp.bfloat16), params['lin2_b'],
            emb_item_p)

    out_pad = fused_forward(args, NPAD, num_graphs)                # [1, NPAD]
    return out_pad[0, :N]                                          # [N]


def init_params(key, num_items, num_categories):
    ks = jax.random.split(key, 16)

    def lin(k, fin, fout):
        return jax.random.normal(k, (fin, fout), jnp.float32) / jnp.sqrt(float(fin))

    params = {
        'item_emb': jax.random.normal(ks[0], (num_items, EMBED_DIM), jnp.float32) * 0.1,
        'cat_emb': jax.random.normal(ks[1], (num_categories, EMBED_DIM), jnp.float32) * 0.1,
        'convs': [],
        'pool_w': [],
    }
    fins = [2 * EMBED_DIM, HIDDEN, HIDDEN]
    for i, fin in enumerate(fins):
        params['convs'].append({
            'wrel': lin(ks[2 + 3 * i], fin, HIDDEN),
            'wroot': lin(ks[3 + 3 * i], fin, HIDDEN),
            'b': jnp.full((1, HIDDEN), 0.01, jnp.float32),
        })
        params['pool_w'].append(
            jax.random.normal(ks[4 + 3 * i], (HIDDEN, 1), jnp.float32) * 0.1)
    params['lin1_w'] = lin(ks[11], 256, 256)
    params['lin1_b'] = jnp.zeros((1, 256), jnp.float32)
    params['lin2_w'] = lin(ks[12], 256, 128)
    params['lin2_b'] = jnp.zeros((1, 128), jnp.float32)
    # note: bn1 / bn2 exist in __init__ but are unused in forward.
    return params


def build_edges(graph_ranges):
    src, dst = [], []
    for lo, hi in graph_ranges:
        for n in range(lo, hi - 1):            # bidirectional chain within each graph
            src += [n, n + 1]
            dst += [n + 1, n]
        src += [lo, hi - 1]                    # wrap-around edge pair
        dst += [hi - 1, lo]
    return jnp.array([src, dst], dtype=jnp.int32)


if __name__ == "__main__":
    key = jax.random.PRNGKey(0)
    k_params, k_item, k_cat = jax.random.split(key, 3)

    NUM_ITEMS = 50
    NUM_CATEGORIES = 20
    NUM_GRAPHS = 2
    graph_ranges = [(0, 11), (11, 16)]         # graph sizes 11 and 5 -> N = 16 nodes
    N = 16

    params = init_params(k_params, NUM_ITEMS, NUM_CATEGORIES)

    # data.x : [N, 1, 2] int32 -> (item_id, category) per node
    item_ids = jax.random.randint(k_item, (N, 1), 0, NUM_ITEMS, jnp.int32)
    cats = jax.random.randint(k_cat, (N, 1), 0, NUM_CATEGORIES, jnp.int32)
    x_nodes = jnp.stack([item_ids, cats], axis=-1)                 # [N,1,2]

    edge_index = build_edges(graph_ranges)                         # [2,E]
    batch = jnp.concatenate([jnp.zeros((11,), jnp.int32),
                             jnp.ones((5,), jnp.int32)])           # [N]

    out = net_forward(params, x_nodes, edge_index, batch, NUM_GRAPHS)
    out = jax.block_until_ready(out)
    assert out.shape == (N,)
    assert bool(jnp.all(jnp.isfinite(out)))
    assert bool(jnp.all((out >= 0.0) & (out <= 1.0)))
    print("KERNEL_OK")
</pallas_src>

<mosaic_0001>
module attributes {stable_mosaic.version = 11 : i64} {
  func.func @fused_net_kernel(%arg0: memref<128x128xbf16, #tpu.memory_space<vmem>>, %arg1: memref<128x256xbf16, #tpu.memory_space<vmem>>, %arg2: memref<128x128xf32, #tpu.memory_space<vmem>>, %arg3: memref<2x128xf32, #tpu.memory_space<vmem>>, %arg4: memref<128x2xf32, #tpu.memory_space<vmem>>, %arg5: memref<512x128xbf16, #tpu.memory_space<vmem>>, %arg6: memref<1x128xf32, #tpu.memory_space<vmem>>, %arg7: memref<1x128xf32, #tpu.memory_space<vmem>>, %arg8: memref<256x128xbf16, #tpu.memory_space<vmem>>, %arg9: memref<1x128xf32, #tpu.memory_space<vmem>>, %arg10: memref<1x128xf32, #tpu.memory_space<vmem>>, %arg11: memref<256x128xbf16, #tpu.memory_space<vmem>>, %arg12: memref<1x128xf32, #tpu.memory_space<vmem>>, %arg13: memref<1x128xf32, #tpu.memory_space<vmem>>, %arg14: memref<256x256xbf16, #tpu.memory_space<vmem>>, %arg15: memref<1x256xf32, #tpu.memory_space<vmem>>, %arg16: memref<256x128xbf16, #tpu.memory_space<vmem>>, %arg17: memref<1x128xf32, #tpu.memory_space<vmem>>, %arg18: memref<128x128xbf16, #tpu.memory_space<vmem>>, %arg19: memref<1x128xf32, #tpu.memory_space<vmem>>) attributes {dimension_semantics = [], scalar_prefetch = 0 : i64, scratch_operands = 0 : i64, tpu.core_type = #tpu.core_type<tc>} {
    %c0 = arith.constant 0 : index
    %c0_0 = arith.constant 0 : index
    %0 = vector.load %arg0[%c0, %c0_0] : memref<128x128xbf16, #tpu.memory_space<vmem>>, vector<128x128xbf16>
    %c0_1 = arith.constant 0 : index
    %c0_2 = arith.constant 0 : index
    %1 = vector.load %arg2[%c0_1, %c0_2] : memref<128x128xf32, #tpu.memory_space<vmem>>, vector<128x128xf32>
    %c0_3 = arith.constant 0 : index
    %c0_4 = arith.constant 0 : index
    %2 = vector.load %arg3[%c0_3, %c0_4] : memref<2x128xf32, #tpu.memory_space<vmem>>, vector<2x128xf32>
    %c0_5 = arith.constant 0 : index
    %c0_6 = arith.constant 0 : index
    %3 = vector.load %arg4[%c0_5, %c0_6] : memref<128x2xf32, #tpu.memory_space<vmem>>, vector<128x2xf32>
    %4 = tpu.iota {dimensions = array<i32: 0>} : vector<128x128xi32>
    %5 = tpu.iota {dimensions = array<i32: 1>} : vector<128x128xi32>
    %6 = arith.cmpi ne, %4, %5 : vector<128x128xi32>
    %7 = arith.extui %6 : vector<128x128xi1> to vector<128x128xi32>
    %8 = arith.sitofp %7 : vector<128x128xi32> to vector<128x128xf32>
    %9 = arith.mulf %1, %8 : vector<128x128xf32>
    %cst = arith.constant dense<0.000000e+00> : vector<128xf32>
    %10 = vector.multi_reduction <add>, %2, %cst [0] : vector<2x128xf32> to vector<128xf32>
    %11 = vector.shape_cast %10 : vector<128xf32> to vector<1x128xf32>
    %cst_7 = arith.constant dense<0.000000e+00> : vector<128xf32>
    %12 = vector.multi_reduction <add>, %3, %cst_7 [1] : vector<128x2xf32> to vector<128xf32>
    %13 = vector.shape_cast %12 : vector<128xf32> to vector<128x1xf32>
    %c0_8 = arith.constant 0 : index
    %c0_9 = arith.constant 0 : index
    %14 = vector.load %arg1[%c0_8, %c0_9] : memref<128x256xbf16, #tpu.memory_space<vmem>>, vector<128x256xbf16>
    %c0_10 = arith.constant 0 : index
    %c0_11 = arith.constant 0 : index
    %15 = vector.load %arg5[%c0_10, %c0_11] : memref<512x128xbf16, #tpu.memory_space<vmem>>, vector<512x128xbf16>
    %c0_12 = arith.constant 0 : index
    %c0_13 = arith.constant 0 : index
    %16 = vector.load %arg6[%c0_12, %c0_13] : memref<1x128xf32, #tpu.memory_space<vmem>>, vector<1x128xf32>
    %cst_14 = arith.constant dense<0.000000e+00> : vector<128x256xf32>
    %17 = tpu.matmul %0, %14, %cst_14 {dimension_numbers = #tpu.dot_dimension_numbers<[1], [0], [0], [1], [0, 0, 1, 1], [], []>} : vector<128x128xbf16>, vector<128x256xbf16>, vector<128x256xf32> -> vector<128x256xf32>
    %18 = arith.truncf %17 : vector<128x256xf32> to vector<128x256xbf16>
    %19 = tpu.concatenate %18, %14 in 1 : vector<128x256xbf16>, vector<128x256xbf16> -> vector<128x512xbf16>
    %cst_15 = arith.constant dense<0.000000e+00> : vector<128x128xf32>
    %20 = tpu.matmul %19, %15, %cst_15 {dimension_numbers = #tpu.dot_dimension_numbers<[1], [0], [0], [1], [0, 0, 1, 1], [], []>} : vector<128x512xbf16>, vector<512x128xbf16>, vector<128x128xf32> -> vector<128x128xf32>
    %21 = vector.broadcast %16 : vector<1x128xf32> to vector<128x128xf32>
    %22 = arith.addf %20, %21 : vector<128x128xf32>
    %cst_16 = arith.constant 0.000000e+00 : f32
    %23 = vector.broadcast %cst_16 : f32 to vector<128x128xf32>
    %24 = arith.maximumf %22, %23 : vector<128x128xf32>
    %c0_17 = arith.constant 0 : index
    %c0_18 = arith.constant 0 : index
    %25 = vector.load %arg7[%c0_17, %c0_18] : memref<1x128xf32, #tpu.memory_space<vmem>>, vector<1x128xf32>
    %26 = vector.broadcast %25 : vector<1x128xf32> to vector<128x128xf32>
    %27 = arith.mulf %24, %26 : vector<128x128xf32>
    %cst_19 = arith.constant dense<0.000000e+00> : vector<128xf32>
    %28 = vector.multi_reduction <add>, %27, %cst_19 [1] : vector<128x128xf32> to vector<128xf32>
    %29 = vector.shape_cast %28 : vector<128xf32> to vector<128x1xf32>
    %cst_20 = arith.constant dense<0.000000e+00> : vector<1x128xf32>
    %30 = tpu.matmul %25, %24, %cst_20 {dimension_numbers = #tpu.dot_dimension_numbers<[1], [1], [0], [0], [0, 0, 1, 0], [], []>} : vector<1x128xf32>, vector<128x128xf32>, vector<1x128xf32> -> vector<1x128xf32>
    %31 = vector.broadcast %11 : vector<1x128xf32> to vector<128x128xf32>
    %32 = arith.mulf %1, %31 : vector<128x128xf32>
    %cst_21 = arith.constant dense<0.000000e+00> : vector<128xf32>
    %33 = vector.multi_reduction <add>, %32, %cst_21 [1] : vector<128x128xf32> to vector<128xf32>
    %34 = vector.shape_cast %33 : vector<128xf32> to vector<128x1xf32>
    %35 = vector.broadcast %13 : vector<128x1xf32> to vector<128x128xf32>
    %36 = arith.mulf %1, %35 : vector<128x128xf32>
    %cst_22 = arith.constant dense<0.000000e+00> : vector<128xf32>
    %37 = vector.multi_reduction <add>, %36, %cst_22 [0] : vector<128x128xf32> to vector<128xf32>
    %38 = vector.shape_cast %37 : vector<128xf32> to vector<1x128xf32>
    %cst_23 = arith.constant 0.899999976 : f32
    %39 = vector.broadcast %cst_23 : f32 to vector<128x1xf32>
    %40 = arith.mulf %39, %34 : vector<128x1xf32>
    %41 = math.ceil %40 : vector<128x1xf32>
    %cst_24 = arith.constant 0.899999976 : f32
    %42 = vector.broadcast %cst_24 : f32 to vector<1x128xf32>
    %43 = arith.mulf %42, %38 : vector<1x128xf32>
    %44 = math.ceil %43 : vector<1x128xf32>
    %45 = vector.broadcast %30 : vector<1x128xf32> to vector<128x128xf32>
    %46 = vector.broadcast %29 : vector<128x1xf32> to vector<128x128xf32>
    %47 = arith.cmpf ogt, %45, %46 : vector<128x128xf32>
    %48 = vector.broadcast %11 : vector<1x128xf32> to vector<128x128xf32>
    %49 = arith.mulf %9, %48 : vector<128x128xf32>
    %cst_25 = arith.constant 0.000000e+00 : f32
    %50 = vector.broadcast %cst_25 : f32 to vector<128x128xf32>
    %51 = arith.select %47, %49, %50 : vector<128x128xi1>, vector<128x128xf32>
    %cst_26 = arith.constant dense<0.000000e+00> : vector<128xf32>
    %52 = vector.multi_reduction <add>, %51, %cst_26 [1] : vector<128x128xf32> to vector<128xf32>
    %53 = vector.shape_cast %52 : vector<128xf32> to vector<128x1xf32>
    %54 = vector.broadcast %29 : vector<128x1xf32> to vector<128x128xf32>
    %55 = vector.broadcast %30 : vector<1x128xf32> to vector<128x128xf32>
    %56 = arith.cmpf ogt, %54, %55 : vector<128x128xf32>
    %57 = vector.broadcast %13 : vector<128x1xf32> to vector<128x128xf32>
    %58 = arith.mulf %9, %57 : vector<128x128xf32>
    %cst_27 = arith.constant 0.000000e+00 : f32
    %59 = vector.broadcast %cst_27 : f32 to vector<128x128xf32>
    %60 = arith.select %56, %58, %59 : vector<128x128xi1>, vector<128x128xf32>
    %cst_28 = arith.constant dense<0.000000e+00> : vector<128xf32>
    %61 = vector.multi_reduction <add>, %60, %cst_28 [0] : vector<128x128xf32> to vector<128xf32>
    %62 = vector.shape_cast %61 : vector<128xf32> to vector<1x128xf32>
    %63 = arith.cmpf olt, %53, %41 : vector<128x1xf32>
    %cst_29 = arith.constant 5.000000e-01 : f32
    %64 = vector.broadcast %cst_29 : f32 to vector<128x1xf32>
    %65 = arith.cmpf ogt, %13, %64 : vector<128x1xf32>
    %66 = arith.andi %63, %65 : vector<128x1xi1>
    %cst_30 = arith.constant 1.000000e+00 : f32
    %cst_31 = arith.constant 0.000000e+00 : f32
    %67 = vector.broadcast %cst_30 : f32 to vector<128x1xf32>
    %68 = vector.broadcast %cst_31 : f32 to vector<128x1xf32>
    %69 = arith.select %66, %67, %68 : vector<128x1xi1>, vector<128x1xf32>
    %70 = arith.cmpf olt, %62, %44 : vector<1x128xf32>
    %cst_32 = arith.constant 5.000000e-01 : f32
    %71 = vector.broadcast %cst_32 : f32 to vector<1x128xf32>
    %72 = arith.cmpf ogt, %11, %71 : vector<1x128xf32>
    %73 = arith.andi %70, %72 : vector<1x128xi1>
    %cst_33 = arith.constant 1.000000e+00 : f32
    %cst_34 = arith.constant 0.000000e+00 : f32
    %74 = vector.broadcast %cst_33 : f32 to vector<1x128xf32>
    %75 = vector.broadcast %cst_34 : f32 to vector<1x128xf32>
    %76 = arith.select %73, %74, %75 : vector<1x128xi1>, vector<1x128xf32>
    %77 = math.tanh %29 : vector<128x1xf32>
    %78 = arith.mulf %77, %69 : vector<128x1xf32>
    %79 = vector.broadcast %78 : vector<128x1xf32> to vector<128x128xf32>
    %80 = arith.mulf %24, %79 : vector<128x128xf32>
    %81 = arith.truncf %80 : vector<128x128xf32> to vector<128x128xbf16>
    %82 = vector.broadcast %76 : vector<1x128xf32> to vector<2x128xf32>
    %83 = arith.mulf %2, %82 : vector<2x128xf32>
    %cst_35 = arith.constant dense<0.000000e+00> : vector<2xf32>
    %84 = vector.multi_reduction <add>, %83, %cst_35 [1] : vector<2x128xf32> to vector<2xf32>
    %85 = vector.shape_cast %84 : vector<2xf32> to vector<2x1xf32>
    %cst_36 = arith.constant 1.000000e+00 : f32
    %86 = vector.broadcast %cst_36 : f32 to vector<2x1xf32>
    %87 = arith.maximumf %85, %86 : vector<2x1xf32>
    %88 = arith.truncf %83 : vector<2x128xf32> to vector<2x128xbf16>
    %cst_37 = arith.constant dense<0.000000e+00> : vector<2x128xf32>
    %89 = tpu.matmul %88, %81, %cst_37 {dimension_numbers = #tpu.dot_dimension_numbers<[1], [0], [0], [1], [0, 0, 1, 1], [], []>} : vector<2x128xbf16>, vector<128x128xbf16>, vector<2x128xf32> -> vector<2x128xf32>
    %90 = vector.broadcast %87 : vector<2x1xf32> to vector<2x128xf32>
    %91 = arith.divf %89, %90 : vector<2x128xf32>
    %92 = vector.extract_strided_slice %3 {offsets = [0, 0], sizes = [128, 1], strides = [1, 1]} : vector<128x2xf32> to vector<128x1xf32>
    %93 = arith.mulf %92, %69 : vector<128x1xf32>
    %cst_38 = arith.constant 5.000000e-01 : f32
    %94 = vector.broadcast %cst_38 : f32 to vector<128x1xf32>
    %95 = arith.cmpf ogt, %93, %94 : vector<128x1xf32>
    %cst_39 = arith.constant -1.000000e+30 : f32
    %96 = vector.shape_cast %95 : vector<128x1xi1> to vector<128x1xi1>
    %97 = vector.broadcast %96 : vector<128x1xi1> to vector<128x128xi1>
    %98 = vector.broadcast %cst_39 : f32 to vector<128x128xf32>
    %99 = arith.select %97, %80, %98 : vector<128x128xi1>, vector<128x128xf32>
    %cst_40 = arith.constant dense<0xFF800000> : vector<128xf32>
    %100 = vector.multi_reduction <maximumf>, %99, %cst_40 [0] : vector<128x128xf32> to vector<128xf32>
    %101 = vector.shape_cast %100 : vector<128xf32> to vector<1x128xf32>
    %102 = vector.extract_strided_slice %3 {offsets = [0, 1], sizes = [128, 1], strides = [1, 1]} : vector<128x2xf32> to vector<128x1xf32>
    %103 = arith.mulf %102, %69 : vector<128x1xf32>
    %cst_41 = arith.constant 5.000000e-01 : f32
    %104 = vector.broadcast %cst_41 : f32 to vector<128x1xf32>
    %105 = arith.cmpf ogt, %103, %104 : vector<128x1xf32>
    %cst_42 = arith.constant -1.000000e+30 : f32
    %106 = vector.shape_cast %105 : vector<128x1xi1> to vector<128x1xi1>
    %107 = vector.broadcast %106 : vector<128x1xi1> to vector<128x128xi1>
    %108 = vector.broadcast %cst_42 : f32 to vector<128x128xf32>
    %109 = arith.select %107, %80, %108 : vector<128x128xi1>, vector<128x128xf32>
    %cst_43 = arith.constant dense<0xFF800000> : vector<128xf32>
    %110 = vector.multi_reduction <maximumf>, %109, %cst_43 [0] : vector<128x128xf32> to vector<128xf32>
    %111 = vector.shape_cast %110 : vector<128xf32> to vector<1x128xf32>
    %112 = tpu.concatenate %101, %111 in 0 : vector<1x128xf32>, vector<1x128xf32> -> vector<2x128xf32>
    %113 = tpu.concatenate %112, %91 in 1 : vector<2x128xf32>, vector<2x128xf32> -> vector<2x256xf32>
    %c0_44 = arith.constant 0 : index
    %c0_45 = arith.constant 0 : index
    %114 = vector.load %arg8[%c0_44, %c0_45] : memref<256x128xbf16, #tpu.memory_space<vmem>>, vector<256x128xbf16>
    %c0_46 = arith.constant 0 : index
    %c0_47 = arith.constant 0 : index
    %115 = vector.load %arg9[%c0_46, %c0_47] : memref<1x128xf32, #tpu.memory_space<vmem>>, vector<1x128xf32>
    %cst_48 = arith.constant dense<0.000000e+00> : vector<128x128xf32>
    %116 = tpu.matmul %0, %81, %cst_48 {dimension_numbers = #tpu.dot_dimension_numbers<[1], [0], [0], [1], [0, 0, 1, 1], [], []>} : vector<128x128xbf16>, vector<128x128xbf16>, vector<128x128xf32> -> vector<128x128xf32>
    %117 = arith.truncf %116 : vector<128x128xf32> to vector<128x128xbf16>
    %118 = tpu.concatenate %117, %81 in 1 : vector<128x128xbf16>, vector<128x128xbf16> -> vector<128x256xbf16>
    %cst_49 = arith.constant dense<0.000000e+00> : vector<128x128xf32>
    %119 = tpu.matmul %118, %114, %cst_49 {dimension_numbers = #tpu.dot_dimension_numbers<[1], [0], [0], [1], [0, 0, 1, 1], [], []>} : vector<128x256xbf16>, vector<256x128xbf16>, vector<128x128xf32> -> vector<128x128xf32>
    %120 = vector.broadcast %115 : vector<1x128xf32> to vector<128x128xf32>
    %121 = arith.addf %119, %120 : vector<128x128xf32>
    %cst_50 = arith.constant 0.000000e+00 : f32
    %122 = vector.broadcast %cst_50 : f32 to vector<128x128xf32>
    %123 = arith.maximumf %121, %122 : vector<128x128xf32>
    %c0_51 = arith.constant 0 : index
    %c0_52 = arith.constant 0 : index
    %124 = vector.load %arg10[%c0_51, %c0_52] : memref<1x128xf32, #tpu.memory_space<vmem>>, vector<1x128xf32>
    %125 = vector.broadcast %124 : vector<1x128xf32> to vector<128x128xf32>
    %126 = arith.mulf %123, %125 : vector<128x128xf32>
    %cst_53 = arith.constant dense<0.000000e+00> : vector<128xf32>
    %127 = vector.multi_reduction <add>, %126, %cst_53 [1] : vector<128x128xf32> to vector<128xf32>
    %128 = vector.shape_cast %127 : vector<128xf32> to vector<128x1xf32>
    %cst_54 = arith.constant dense<0.000000e+00> : vector<1x128xf32>
    %129 = tpu.matmul %124, %123, %cst_54 {dimension_numbers = #tpu.dot_dimension_numbers<[1], [1], [0], [0], [0, 0, 1, 0], [], []>} : vector<1x128xf32>, vector<128x128xf32>, vector<1x128xf32> -> vector<1x128xf32>
    %130 = vector.broadcast %76 : vector<1x128xf32> to vector<128x128xf32>
    %131 = arith.mulf %1, %130 : vector<128x128xf32>
    %cst_55 = arith.constant dense<0.000000e+00> : vector<128xf32>
    %132 = vector.multi_reduction <add>, %131, %cst_55 [1] : vector<128x128xf32> to vector<128xf32>
    %133 = vector.shape_cast %132 : vector<128xf32> to vector<128x1xf32>
    %134 = vector.broadcast %69 : vector<128x1xf32> to vector<128x128xf32>
    %135 = arith.mulf %1, %134 : vector<128x128xf32>
    %cst_56 = arith.constant dense<0.000000e+00> : vector<128xf32>
    %136 = vector.multi_reduction <add>, %135, %cst_56 [0] : vector<128x128xf32> to vector<128xf32>
    %137 = vector.shape_cast %136 : vector<128xf32> to vector<1x128xf32>
    %cst_57 = arith.constant 0.899999976 : f32
    %138 = vector.broadcast %cst_57 : f32 to vector<128x1xf32>
    %139 = arith.mulf %138, %133 : vector<128x1xf32>
    %140 = math.ceil %139 : vector<128x1xf32>
    %cst_58 = arith.constant 0.899999976 : f32
    %141 = vector.broadcast %cst_58 : f32 to vector<1x128xf32>
    %142 = arith.mulf %141, %137 : vector<1x128xf32>
    %143 = math.ceil %142 : vector<1x128xf32>
    %144 = vector.broadcast %129 : vector<1x128xf32> to vector<128x128xf32>
    %145 = vector.broadcast %128 : vector<128x1xf32> to vector<128x128xf32>
    %146 = arith.cmpf ogt, %144, %145 : vector<128x128xf32>
    %147 = vector.broadcast %76 : vector<1x128xf32> to vector<128x128xf32>
    %148 = arith.mulf %9, %147 : vector<128x128xf32>
    %cst_59 = arith.constant 0.000000e+00 : f32
    %149 = vector.broadcast %cst_59 : f32 to vector<128x128xf32>
    %150 = arith.select %146, %148, %149 : vector<128x128xi1>, vector<128x128xf32>
    %cst_60 = arith.constant dense<0.000000e+00> : vector<128xf32>
    %151 = vector.multi_reduction <add>, %150, %cst_60 [1] : vector<128x128xf32> to vector<128xf32>
    %152 = vector.shape_cast %151 : vector<128xf32> to vector<128x1xf32>
    %153 = vector.broadcast %128 : vector<128x1xf32> to vector<128x128xf32>
    %154 = vector.broadcast %129 : vector<1x128xf32> to vector<128x128xf32>
    %155 = arith.cmpf ogt, %153, %154 : vector<128x128xf32>
    %156 = vector.broadcast %69 : vector<128x1xf32> to vector<128x128xf32>
    %157 = arith.mulf %9, %156 : vector<128x128xf32>
    %cst_61 = arith.constant 0.000000e+00 : f32
    %158 = vector.broadcast %cst_61 : f32 to vector<128x128xf32>
    %159 = arith.select %155, %157, %158 : vector<128x128xi1>, vector<128x128xf32>
    %cst_62 = arith.constant dense<0.000000e+00> : vector<128xf32>
    %160 = vector.multi_reduction <add>, %159, %cst_62 [0] : vector<128x128xf32> to vector<128xf32>
    %161 = vector.shape_cast %160 : vector<128xf32> to vector<1x128xf32>
    %162 = arith.cmpf olt, %152, %140 : vector<128x1xf32>
    %cst_63 = arith.constant 5.000000e-01 : f32
    %163 = vector.broadcast %cst_63 : f32 to vector<128x1xf32>
    %164 = arith.cmpf ogt, %69, %163 : vector<128x1xf32>
    %165 = arith.andi %162, %164 : vector<128x1xi1>
    %cst_64 = arith.constant 1.000000e+00 : f32
    %cst_65 = arith.constant 0.000000e+00 : f32
    %166 = vector.broadcast %cst_64 : f32 to vector<128x1xf32>
    %167 = vector.broadcast %cst_65 : f32 to vector<128x1xf32>
    %168 = arith.select %165, %166, %167 : vector<128x1xi1>, vector<128x1xf32>
    %169 = arith.cmpf olt, %161, %143 : vector<1x128xf32>
    %cst_66 = arith.constant 5.000000e-01 : f32
    %170 = vector.broadcast %cst_66 : f32 to vector<1x128xf32>
    %171 = arith.cmpf ogt, %76, %170 : vector<1x128xf32>
    %172 = arith.andi %169, %171 : vector<1x128xi1>
    %cst_67 = arith.constant 1.000000e+00 : f32
    %cst_68 = arith.constant 0.000000e+00 : f32
    %173 = vector.broadcast %cst_67 : f32 to vector<1x128xf32>
    %174 = vector.broadcast %cst_68 : f32 to vector<1x128xf32>
    %175 = arith.select %172, %173, %174 : vector<1x128xi1>, vector<1x128xf32>
    %176 = math.tanh %128 : vector<128x1xf32>
    %177 = arith.mulf %176, %168 : vector<128x1xf32>
    %178 = vector.broadcast %177 : vector<128x1xf32> to vector<128x128xf32>
    %179 = arith.mulf %123, %178 : vector<128x128xf32>
    %180 = arith.truncf %179 : vector<128x128xf32> to vector<128x128xbf16>
    %181 = vector.broadcast %175 : vector<1x128xf32> to vector<2x128xf32>
    %182 = arith.mulf %2, %181 : vector<2x128xf32>
    %cst_69 = arith.constant dense<0.000000e+00> : vector<2xf32>
    %183 = vector.multi_reduction <add>, %182, %cst_69 [1] : vector<2x128xf32> to vector<2xf32>
    %184 = vector.shape_cast %183 : vector<2xf32> to vector<2x1xf32>
    %cst_70 = arith.constant 1.000000e+00 : f32
    %185 = vector.broadcast %cst_70 : f32 to vector<2x1xf32>
    %186 = arith.maximumf %184, %185 : vector<2x1xf32>
    %187 = arith.truncf %182 : vector<2x128xf32> to vector<2x128xbf16>
    %cst_71 = arith.constant dense<0.000000e+00> : vector<2x128xf32>
    %188 = tpu.matmul %187, %180, %cst_71 {dimension_numbers = #tpu.dot_dimension_numbers<[1], [0], [0], [1], [0, 0, 1, 1], [], []>} : vector<2x128xbf16>, vector<128x128xbf16>, vector<2x128xf32> -> vector<2x128xf32>
    %189 = vector.broadcast %186 : vector<2x1xf32> to vector<2x128xf32>
    %190 = arith.divf %188, %189 : vector<2x128xf32>
    %191 = vector.extract_strided_slice %3 {offsets = [0, 0], sizes = [128, 1], strides = [1, 1]} : vector<128x2xf32> to vector<128x1xf32>
    %192 = arith.mulf %191, %168 : vector<128x1xf32>
    %cst_72 = arith.constant 5.000000e-01 : f32
    %193 = vector.broadcast %cst_72 : f32 to vector<128x1xf32>
    %194 = arith.cmpf ogt, %192, %193 : vector<128x1xf32>
    %cst_73 = arith.constant -1.000000e+30 : f32
    %195 = vector.shape_cast %194 : vector<128x1xi1> to vector<128x1xi1>
    %196 = vector.broadcast %195 : vector<128x1xi1> to vector<128x128xi1>
    %197 = vector.broadcast %cst_73 : f32 to vector<128x128xf32>
    %198 = arith.select %196, %179, %197 : vector<128x128xi1>, vector<128x128xf32>
    %cst_74 = arith.constant dense<0xFF800000> : vector<128xf32>
    %199 = vector.multi_reduction <maximumf>, %198, %cst_74 [0] : vector<128x128xf32> to vector<128xf32>
    %200 = vector.shape_cast %199 : vector<128xf32> to vector<1x128xf32>
    %201 = vector.extract_strided_slice %3 {offsets = [0, 1], sizes = [128, 1], strides = [1, 1]} : vector<128x2xf32> to vector<128x1xf32>
    %202 = arith.mulf %201, %168 : vector<128x1xf32>
    %cst_75 = arith.constant 5.000000e-01 : f32
    %203 = vector.broadcast %cst_75 : f32 to vector<128x1xf32>
    %204 = arith.cmpf ogt, %202, %203 : vector<128x1xf32>
    %cst_76 = arith.constant -1.000000e+30 : f32
    %205 = vector.shape_cast %204 : vector<128x1xi1> to vector<128x1xi1>
    %206 = vector.broadcast %205 : vector<128x1xi1> to vector<128x128xi1>
    %207 = vector.broadcast %cst_76 : f32 to vector<128x128xf32>
    %208 = arith.select %206, %179, %207 : vector<128x128xi1>, vector<128x128xf32>
    %cst_77 = arith.constant dense<0xFF800000> : vector<128xf32>
    %209 = vector.multi_reduction <maximumf>, %208, %cst_77 [0] : vector<128x128xf32> to vector<128xf32>
    %210 = vector.shape_cast %209 : vector<128xf32> to vector<1x128xf32>
    %211 = tpu.concatenate %200, %210 in 0 : vector<1x128xf32>, vector<1x128xf32> -> vector<2x128xf32>
    %212 = tpu.concatenate %211, %190 in 1 : vector<2x128xf32>, vector<2x128xf32> -> vector<2x256xf32>
    %c0_78 = arith.constant 0 : index
    %c0_79 = arith.constant 0 : index
    %213 = vector.load %arg11[%c0_78, %c0_79] : memref<256x128xbf16, #tpu.memory_space<vmem>>, vector<256x128xbf16>
    %c0_80 = arith.constant 0 : index
    %c0_81 = arith.constant 0 : index
    %214 = vector.load %arg12[%c0_80, %c0_81] : memref<1x128xf32, #tpu.memory_space<vmem>>, vector<1x128xf32>
    %cst_82 = arith.constant dense<0.000000e+00> : vector<128x128xf32>
    %215 = tpu.matmul %0, %180, %cst_82 {dimension_numbers = #tpu.dot_dimension_numbers<[1], [0], [0], [1], [0, 0, 1, 1], [], []>} : vector<128x128xbf16>, vector<128x128xbf16>, vector<128x128xf32> -> vector<128x128xf32>
    %216 = arith.truncf %215 : vector<128x128xf32> to vector<128x128xbf16>
    %217 = tpu.concatenate %216, %180 in 1 : vector<128x128xbf16>, vector<128x128xbf16> -> vector<128x256xbf16>
    %cst_83 = arith.constant dense<0.000000e+00> : vector<128x128xf32>
    %218 = tpu.matmul %217, %213, %cst_83 {dimension_numbers = #tpu.dot_dimension_numbers<[1], [0], [0], [1], [0, 0, 1, 1], [], []>} : vector<128x256xbf16>, vector<256x128xbf16>, vector<128x128xf32> -> vector<128x128xf32>
    %219 = vector.broadcast %214 : vector<1x128xf32> to vector<128x128xf32>
    %220 = arith.addf %218, %219 : vector<128x128xf32>
    %cst_84 = arith.constant 0.000000e+00 : f32
    %221 = vector.broadcast %cst_84 : f32 to vector<128x128xf32>
    %222 = arith.maximumf %220, %221 : vector<128x128xf32>
    %c0_85 = arith.constant 0 : index
    %c0_86 = arith.constant 0 : index
    %223 = vector.load %arg13[%c0_85, %c0_86] : memref<1x128xf32, #tpu.memory_space<vmem>>, vector<1x128xf32>
    %224 = vector.broadcast %223 : vector<1x128xf32> to vector<128x128xf32>
    %225 = arith.mulf %222, %224 : vector<128x128xf32>
    %cst_87 = arith.constant dense<0.000000e+00> : vector<128xf32>
    %226 = vector.multi_reduction <add>, %225, %cst_87 [1] : vector<128x128xf32> to vector<128xf32>
    %227 = vector.shape_cast %226 : vector<128xf32> to vector<128x1xf32>
    %cst_88 = arith.constant dense<0.000000e+00> : vector<1x128xf32>
    %228 = tpu.matmul %223, %222, %cst_88 {dimension_numbers = #tpu.dot_dimension_numbers<[1], [1], [0], [0], [0, 0, 1, 0], [], []>} : vector<1x128xf32>, vector<128x128xf32>, vector<1x128xf32> -> vector<1x128xf32>
    %229 = vector.broadcast %175 : vector<1x128xf32> to vector<128x128xf32>
    %230 = arith.mulf %1, %229 : vector<128x128xf32>
    %cst_89 = arith.constant dense<0.000000e+00> : vector<128xf32>
    %231 = vector.multi_reduction <add>, %230, %cst_89 [1] : vector<128x128xf32> to vector<128xf32>
    %232 = vector.shape_cast %231 : vector<128xf32> to vector<128x1xf32>
    %233 = vector.broadcast %168 : vector<128x1xf32> to vector<128x128xf32>
    %234 = arith.mulf %1, %233 : vector<128x128xf32>
    %cst_90 = arith.constant dense<0.000000e+00> : vector<128xf32>
    %235 = vector.multi_reduction <add>, %234, %cst_90 [0] : vector<128x128xf32> to vector<128xf32>
    %236 = vector.shape_cast %235 : vector<128xf32> to vector<1x128xf32>
    %cst_91 = arith.constant 0.899999976 : f32
    %237 = vector.broadcast %cst_91 : f32 to vector<128x1xf32>
    %238 = arith.mulf %237, %232 : vector<128x1xf32>
    %239 = math.ceil %238 : vector<128x1xf32>
    %cst_92 = arith.constant 0.899999976 : f32
    %240 = vector.broadcast %cst_92 : f32 to vector<1x128xf32>
    %241 = arith.mulf %240, %236 : vector<1x128xf32>
    %242 = math.ceil %241 : vector<1x128xf32>
    %243 = vector.broadcast %228 : vector<1x128xf32> to vector<128x128xf32>
    %244 = vector.broadcast %227 : vector<128x1xf32> to vector<128x128xf32>
    %245 = arith.cmpf ogt, %243, %244 : vector<128x128xf32>
    %246 = vector.broadcast %175 : vector<1x128xf32> to vector<128x128xf32>
    %247 = arith.mulf %9, %246 : vector<128x128xf32>
    %cst_93 = arith.constant 0.000000e+00 : f32
    %248 = vector.broadcast %cst_93 : f32 to vector<128x128xf32>
    %249 = arith.select %245, %247, %248 : vector<128x128xi1>, vector<128x128xf32>
    %cst_94 = arith.constant dense<0.000000e+00> : vector<128xf32>
    %250 = vector.multi_reduction <add>, %249, %cst_94 [1] : vector<128x128xf32> to vector<128xf32>
    %251 = vector.shape_cast %250 : vector<128xf32> to vector<128x1xf32>
    %252 = vector.broadcast %227 : vector<128x1xf32> to vector<128x128xf32>
    %253 = vector.broadcast %228 : vector<1x128xf32> to vector<128x128xf32>
    %254 = arith.cmpf ogt, %252, %253 : vector<128x128xf32>
    %255 = vector.broadcast %168 : vector<128x1xf32> to vector<128x128xf32>
    %256 = arith.mulf %9, %255 : vector<128x128xf32>
    %cst_95 = arith.constant 0.000000e+00 : f32
    %257 = vector.broadcast %cst_95 : f32 to vector<128x128xf32>
    %258 = arith.select %254, %256, %257 : vector<128x128xi1>, vector<128x128xf32>
    %cst_96 = arith.constant dense<0.000000e+00> : vector<128xf32>
    %259 = vector.multi_reduction <add>, %258, %cst_96 [0] : vector<128x128xf32> to vector<128xf32>
    %260 = vector.shape_cast %259 : vector<128xf32> to vector<1x128xf32>
    %261 = arith.cmpf olt, %251, %239 : vector<128x1xf32>
    %cst_97 = arith.constant 5.000000e-01 : f32
    %262 = vector.broadcast %cst_97 : f32 to vector<128x1xf32>
    %263 = arith.cmpf ogt, %168, %262 : vector<128x1xf32>
    %264 = arith.andi %261, %263 : vector<128x1xi1>
    %cst_98 = arith.constant 1.000000e+00 : f32
    %cst_99 = arith.constant 0.000000e+00 : f32
    %265 = vector.broadcast %cst_98 : f32 to vector<128x1xf32>
    %266 = vector.broadcast %cst_99 : f32 to vector<128x1xf32>
    %267 = arith.select %264, %265, %266 : vector<128x1xi1>, vector<128x1xf32>
    %268 = arith.cmpf olt, %260, %242 : vector<1x128xf32>
    %cst_100 = arith.constant 5.000000e-01 : f32
    %269 = vector.broadcast %cst_100 : f32 to vector<1x128xf32>
    %270 = arith.cmpf ogt, %175, %269 : vector<1x128xf32>
    %271 = arith.andi %268, %270 : vector<1x128xi1>
    %cst_101 = arith.constant 1.000000e+00 : f32
    %cst_102 = arith.constant 0.000000e+00 : f32
    %272 = vector.broadcast %cst_101 : f32 to vector<1x128xf32>
    %273 = vector.broadcast %cst_102 : f32 to vector<1x128xf32>
    %274 = arith.select %271, %272, %273 : vector<1x128xi1>, vector<1x128xf32>
    %275 = math.tanh %227 : vector<128x1xf32>
    %276 = arith.mulf %275, %267 : vector<128x1xf32>
    %277 = vector.broadcast %276 : vector<128x1xf32> to vector<128x128xf32>
    %278 = arith.mulf %222, %277 : vector<128x128xf32>
    %279 = arith.truncf %278 : vector<128x128xf32> to vector<128x128xbf16>
    %280 = vector.broadcast %274 : vector<1x128xf32> to vector<2x128xf32>
    %281 = arith.mulf %2, %280 : vector<2x128xf32>
    %cst_103 = arith.constant dense<0.000000e+00> : vector<2xf32>
    %282 = vector.multi_reduction <add>, %281, %cst_103 [1] : vector<2x128xf32> to vector<2xf32>
    %283 = vector.shape_cast %282 : vector<2xf32> to vector<2x1xf32>
    %cst_104 = arith.constant 1.000000e+00 : f32
    %284 = vector.broadcast %cst_104 : f32 to vector<2x1xf32>
    %285 = arith.maximumf %283, %284 : vector<2x1xf32>
    %286 = arith.truncf %281 : vector<2x128xf32> to vector<2x128xbf16>
    %cst_105 = arith.constant dense<0.000000e+00> : vector<2x128xf32>
    %287 = tpu.matmul %286, %279, %cst_105 {dimension_numbers = #tpu.dot_dimension_numbers<[1], [0], [0], [1], [0, 0, 1, 1], [], []>} : vector<2x128xbf16>, vector<128x128xbf16>, vector<2x128xf32> -> vector<2x128xf32>
    %288 = vector.broadcast %285 : vector<2x1xf32> to vector<2x128xf32>
    %289 = arith.divf %287, %288 : vector<2x128xf32>
    %290 = vector.extract_strided_slice %3 {offsets = [0, 0], sizes = [128, 1], strides = [1, 1]} : vector<128x2xf32> to vector<128x1xf32>
    %291 = arith.mulf %290, %267 : vector<128x1xf32>
    %cst_106 = arith.constant 5.000000e-01 : f32
    %292 = vector.broadcast %cst_106 : f32 to vector<128x1xf32>
    %293 = arith.cmpf ogt, %291, %292 : vector<128x1xf32>
    %cst_107 = arith.constant -1.000000e+30 : f32
    %294 = vector.shape_cast %293 : vector<128x1xi1> to vector<128x1xi1>
    %295 = vector.broadcast %294 : vector<128x1xi1> to vector<128x128xi1>
    %296 = vector.broadcast %cst_107 : f32 to vector<128x128xf32>
    %297 = arith.select %295, %278, %296 : vector<128x128xi1>, vector<128x128xf32>
    %cst_108 = arith.constant dense<0xFF800000> : vector<128xf32>
    %298 = vector.multi_reduction <maximumf>, %297, %cst_108 [0] : vector<128x128xf32> to vector<128xf32>
    %299 = vector.shape_cast %298 : vector<128xf32> to vector<1x128xf32>
    %300 = vector.extract_strided_slice %3 {offsets = [0, 1], sizes = [128, 1], strides = [1, 1]} : vector<128x2xf32> to vector<128x1xf32>
    %301 = arith.mulf %300, %267 : vector<128x1xf32>
    %cst_109 = arith.constant 5.000000e-01 : f32
    %302 = vector.broadcast %cst_109 : f32 to vector<128x1xf32>
    %303 = arith.cmpf ogt, %301, %302 : vector<128x1xf32>
    %cst_110 = arith.constant -1.000000e+30 : f32
    %304 = vector.shape_cast %303 : vector<128x1xi1> to vector<128x1xi1>
    %305 = vector.broadcast %304 : vector<128x1xi1> to vector<128x128xi1>
    %306 = vector.broadcast %cst_110 : f32 to vector<128x128xf32>
    %307 = arith.select %305, %278, %306 : vector<128x128xi1>, vector<128x128xf32>
    %cst_111 = arith.constant dense<0xFF800000> : vector<128xf32>
    %308 = vector.multi_reduction <maximumf>, %307, %cst_111 [0] : vector<128x128xf32> to vector<128xf32>
    %309 = vector.shape_cast %308 : vector<128xf32> to vector<1x128xf32>
    %310 = tpu.concatenate %299, %309 in 0 : vector<1x128xf32>, vector<1x128xf32> -> vector<2x128xf32>
    %311 = tpu.concatenate %310, %289 in 1 : vector<2x128xf32>, vector<2x128xf32> -> vector<2x256xf32>
    %312 = arith.addf %113, %212 : vector<2x256xf32>
    %313 = arith.addf %312, %311 : vector<2x256xf32>
    %314 = arith.truncf %313 : vector<2x256xf32> to vector<2x256xbf16>
    %c0_112 = arith.constant 0 : index
    %c0_113 = arith.constant 0 : index
    %315 = vector.load %arg14[%c0_112, %c0_113] : memref<256x256xbf16, #tpu.memory_space<vmem>>, vector<256x256xbf16>
    %cst_114 = arith.constant dense<0.000000e+00> : vector<2x256xf32>
    %316 = tpu.matmul %314, %315, %cst_114 {dimension_numbers = #tpu.dot_dimension_numbers<[1], [0], [0], [1], [0, 0, 1, 1], [], []>} : vector<2x256xbf16>, vector<256x256xbf16>, vector<2x256xf32> -> vector<2x256xf32>
    %c0_115 = arith.constant 0 : index
    %c0_116 = arith.constant 0 : index
    %317 = vector.load %arg15[%c0_115, %c0_116] : memref<1x256xf32, #tpu.memory_space<vmem>>, vector<1x256xf32>
    %318 = vector.broadcast %317 : vector<1x256xf32> to vector<2x256xf32>
    %319 = arith.addf %316, %318 : vector<2x256xf32>
    %cst_117 = arith.constant 0.000000e+00 : f32
    %320 = vector.broadcast %cst_117 : f32 to vector<2x256xf32>
    %321 = arith.maximumf %319, %320 : vector<2x256xf32>
    %322 = arith.truncf %321 : vector<2x256xf32> to vector<2x256xbf16>
    %c0_118 = arith.constant 0 : index
    %c0_119 = arith.constant 0 : index
    %323 = vector.load %arg16[%c0_118, %c0_119] : memref<256x128xbf16, #tpu.memory_space<vmem>>, vector<256x128xbf16>
    %cst_120 = arith.constant dense<0.000000e+00> : vector<2x128xf32>
    %324 = tpu.matmul %322, %323, %cst_120 {dimension_numbers = #tpu.dot_dimension_numbers<[1], [0], [0], [1], [0, 0, 1, 1], [], []>} : vector<2x256xbf16>, vector<256x128xbf16>, vector<2x128xf32> -> vector<2x128xf32>
    %c0_121 = arith.constant 0 : index
    %c0_122 = arith.constant 0 : index
    %325 = vector.load %arg17[%c0_121, %c0_122] : memref<1x128xf32, #tpu.memory_space<vmem>>, vector<1x128xf32>
    %326 = vector.broadcast %325 : vector<1x128xf32> to vector<2x128xf32>
    %327 = arith.addf %324, %326 : vector<2x128xf32>
    %cst_123 = arith.constant 0.000000e+00 : f32
    %328 = vector.broadcast %cst_123 : f32 to vector<2x128xf32>
    %329 = arith.maximumf %327, %328 : vector<2x128xf32>
    %330 = arith.truncf %329 : vector<2x128xf32> to vector<2x128xbf16>
    %c0_124 = arith.constant 0 : index
    %c0_125 = arith.constant 0 : index
    %331 = vector.load %arg18[%c0_124, %c0_125] : memref<128x128xbf16, #tpu.memory_space<vmem>>, vector<128x128xbf16>
    %cst_126 = arith.constant dense<0.000000e+00> : vector<2x128xf32>
    %332 = tpu.matmul %330, %331, %cst_126 {dimension_numbers = #tpu.dot_dimension_numbers<[1], [1], [0], [0], [0, 0, 1, 0], [], []>} : vector<2x128xbf16>, vector<128x128xbf16>, vector<2x128xf32> -> vector<2x128xf32>
    %333 = arith.mulf %332, %2 : vector<2x128xf32>
    %cst_127 = arith.constant dense<0.000000e+00> : vector<128xf32>
    %334 = vector.multi_reduction <add>, %333, %cst_127 [0] : vector<2x128xf32> to vector<128xf32>
    %335 = vector.shape_cast %334 : vector<128xf32> to vector<1x128xf32>
    %cst_128 = arith.constant 0.000000e+00 : f32
    %336 = vector.broadcast %cst_128 : f32 to vector<1x128xf32>
    %337 = arith.subf %336, %335 : vector<1x128xf32>
    %338 = math.exp %337 : vector<1x128xf32>
    %cst_129 = arith.constant 1.000000e+00 : f32
    %339 = vector.broadcast %cst_129 : f32 to vector<1x128xf32>
    %340 = arith.addf %339, %338 : vector<1x128xf32>
    %341 = tpu.reciprocal %340 {approx = true} : vector<1x128xf32> -> vector<1x128xf32>
    %cst_130 = arith.constant 1.000000e+00 : f32
    %342 = vector.broadcast %cst_130 : f32 to vector<1x128xf32>
    %343 = arith.minimumf %341, %342 : vector<1x128xf32>
    %c0_131 = arith.constant 0 : index
    %c0_132 = arith.constant 0 : index
    %344 = vector.load %arg19[%c0_131, %c0_132] : memref<1x128xf32, #tpu.memory_space<vmem>>, vector<1x128xf32>
    tpu.vector_store %arg19[%c0_131, %c0_132], %343 {strides = array<i32>} : memref<1x128xf32, #tpu.memory_space<vmem>>, vector<1x128xf32>,
    return
  }
}

</mosaic_0001>

<llo_original>
// kernel: net_forward.1
$region0: #{net_forward.1}
  #allocation0 [shape = 'u32[]', space=smem, size = 0x4, offset = 0x4, fixed_abs, tag = 'smem constant byte address 0x4 - core index']
  #allocation1 [shape = 'u32[72,128]{1,0:T(1,128)}', space=vmem, size = 0x9000, scoped, tag = 'internal scratch']
  %s0 = inlined_call_operand.vmem [shape: bf16[128,128], index: 0, kind: input, shape index: {}]
  %s1 = inlined_call_operand.vmem [shape: bf16[128,256], index: 1, kind: input, shape index: {}]
  %s2 = inlined_call_operand.vmem [shape: f32[128,128], index: 2, kind: input, shape index: {}]
  %s3 = inlined_call_operand.vmem [shape: f32[2,128], index: 3, kind: input, shape index: {}]
  %s4 = inlined_call_operand.vmem [shape: f32[128,2], index: 4, kind: input, shape index: {}]
  %s5 = inlined_call_operand.vmem [shape: bf16[512,128], index: 5, kind: input, shape index: {}]
  %s6 = inlined_call_operand.vmem [shape: f32[1,128], index: 6, kind: input, shape index: {}]
  %s7 = inlined_call_operand.vmem [shape: f32[1,128], index: 7, kind: input, shape index: {}]
  %s8 = inlined_call_operand.vmem [shape: bf16[256,128], index: 8, kind: input, shape index: {}]
  %s9 = inlined_call_operand.vmem [shape: f32[1,128], index: 9, kind: input, shape index: {}]
  %s10 = inlined_call_operand.vmem [shape: f32[1,128], index: 10, kind: input, shape index: {}]
  %s11 = inlined_call_operand.vmem [shape: bf16[256,128], index: 11, kind: input, shape index: {}]
  %s12 = inlined_call_operand.vmem [shape: f32[1,128], index: 12, kind: input, shape index: {}]
  %s13 = inlined_call_operand.vmem [shape: f32[1,128], index: 13, kind: input, shape index: {}]
  %s14 = inlined_call_operand.vmem [shape: bf16[256,256], index: 14, kind: input, shape index: {}]
  %s15 = inlined_call_operand.vmem [shape: f32[1,256], index: 15, kind: input, shape index: {}]
  %s16 = inlined_call_operand.vmem [shape: bf16[256,128], index: 16, kind: input, shape index: {}]
  %s17 = inlined_call_operand.vmem [shape: f32[1,128], index: 17, kind: input, shape index: {}]
  %s18 = inlined_call_operand.vmem [shape: bf16[128,128], index: 18, kind: input, shape index: {}]
  %s19 = inlined_call_operand.vmem [shape: f32[1,128], index: 19, kind: output, shape index: {}]
  %s20 = sld [smem:[#allocation0]]
  $region86: #{net_forward.1} parent=0
    _
  %s22 = ssub.s32 1, %s20
  %s23 = scalar_select 0, %s22, %s20
  // Predicated region
  $region2: #{net_forward.1} parent=0 // pred_check
    _
  $region3: #{net_forward.1} parent=0 // pred_check_branch
    %25 = sbr.rel (0) target = $region5
  $region4: #{net_forward.1} parent=0 // pred_region
    _
  $region5: #{net_forward.1} parent=0 // pred_fallthru
    _
  // Predicated region
  $region6: #{net_forward.1} parent=0 // pred_check
    _
  $region7: #{net_forward.1} parent=0 // pred_check_branch
    %27 = sbr.rel (0) target = $region9
  $region8: #{net_forward.1} parent=0 // pred_region
    _
  $region9: #{net_forward.1} parent=0 // pred_fallthru
    _
  // Predicated region
  $region10: #{net_forward.1} parent=0 // pred_check
    _
  $region11: #{net_forward.1} parent=0 // pred_check_branch
    %29 = sbr.rel (0) target = $region13
  $region12: #{net_forward.1} parent=0 // pred_region
    _
  $region13: #{net_forward.1} parent=0 // pred_fallthru
    _
  // Predicated region
  $region14: #{net_forward.1} parent=0 // pred_check
    _
  $region15: #{net_forward.1} parent=0 // pred_check_branch
    %31 = sbr.rel (0) target = $region17
  $region16: #{net_forward.1} parent=0 // pred_region
    _
  $region17: #{net_forward.1} parent=0 // pred_fallthru
    _
  // Predicated region
  $region18: #{net_forward.1} parent=0 // pred_check
    _
  $region19: #{net_forward.1} parent=0 // pred_check_branch
    %33 = sbr.rel (0) target = $region21
  $region20: #{net_forward.1} parent=0 // pred_region
    _
  $region21: #{net_forward.1} parent=0 // pred_fallthru
    _
  // Predicated region
  $region22: #{net_forward.1} parent=0 // pred_check
    _
  $region23: #{net_forward.1} parent=0 // pred_check_branch
    %35 = sbr.rel (0) target = $region25
  $region24: #{net_forward.1} parent=0 // pred_region
    _
  $region25: #{net_forward.1} parent=0 // pred_fallthru
    _
  // Predicated region
  $region26: #{net_forward.1} parent=0 // pred_check
    _
  $region27: #{net_forward.1} parent=0 // pred_check_branch
    %37 = sbr.rel (0) target = $region29
  $region28: #{net_forward.1} parent=0 // pred_region
    _
  $region29: #{net_forward.1} parent=0 // pred_fallthru
    _
  // Predicated region
  $region30: #{net_forward.1} parent=0 // pred_check
    _
  $region31: #{net_forward.1} parent=0 // pred_check_branch
    %39 = sbr.rel (0) target = $region33
  $region32: #{net_forward.1} parent=0 // pred_region
    _
  $region33: #{net_forward.1} parent=0 // pred_fallthru
    _
  // Predicated region
  $region34: #{net_forward.1} parent=0 // pred_check
    _
  $region35: #{net_forward.1} parent=0 // pred_check_branch
    %41 = sbr.rel (0) target = $region37
  $region36: #{net_forward.1} parent=0 // pred_region
    _
  $region37: #{net_forward.1} parent=0 // pred_fallthru
    _
  // Predicated region
  $region38: #{net_forward.1} parent=0 // pred_check
    _
  $region39: #{net_forward.1} parent=0 // pred_check_branch
    %43 = sbr.rel (0) target = $region41
  $region40: #{net_forward.1} parent=0 // pred_region
    _
  $region41: #{net_forward.1} parent=0 // pred_fallthru
    _
  // Predicated region
  $region42: #{net_forward.1} parent=0 // pred_check
    _
  $region43: #{net_forward.1} parent=0 // pred_check_branch
    %45 = sbr.rel (0) target = $region45
  $region44: #{net_forward.1} parent=0 // pred_region
    _
  $region45: #{net_forward.1} parent=0 // pred_fallthru
    _
  // Predicated region
  $region46: #{net_forward.1} parent=0 // pred_check
    _
  $region47: #{net_forward.1} parent=0 // pred_check_branch
    %47 = sbr.rel (0) target = $region49
  $region48: #{net_forward.1} parent=0 // pred_region
    _
  $region49: #{net_forward.1} parent=0 // pred_fallthru
    _
  // Predicated region
  $region50: #{net_forward.1} parent=0 // pred_check
    _
  $region51: #{net_forward.1} parent=0 // pred_check_branch
    %49 = sbr.rel (0) target = $region53
  $region52: #{net_forward.1} parent=0 // pred_region
    _
  $region53: #{net_forward.1} parent=0 // pred_fallthru
    _
  // Predicated region
  $region54: #{net_forward.1} parent=0 // pred_check
    _
  $region55: #{net_forward.1} parent=0 // pred_check_branch
    %51 = sbr.rel (0) target = $region57
  $region56: #{net_forward.1} parent=0 // pred_region
    _
  $region57: #{net_forward.1} parent=0 // pred_fallthru
    _
  // Predicated region
  $region58: #{net_forward.1} parent=0 // pred_check
    _
  $region59: #{net_forward.1} parent=0 // pred_check_branch
    %53 = sbr.rel (0) target = $region61
  $region60: #{net_forward.1} parent=0 // pred_region
    _
  $region61: #{net_forward.1} parent=0 // pred_fallthru
    _
  // Predicated region
  $region62: #{net_forward.1} parent=0 // pred_check
    _
  $region63: #{net_forward.1} parent=0 // pred_check_branch
    %55 = sbr.rel (0) target = $region65
  $region64: #{net_forward.1} parent=0 // pred_region
    _
  $region65: #{net_forward.1} parent=0 // pred_fallthru
    _
  // Predicated region
  $region66: #{net_forward.1} parent=0 // pred_check
    _
  $region67: #{net_forward.1} parent=0 // pred_check_branch
    %57 = sbr.rel (0) target = $region69
  $region68: #{net_forward.1} parent=0 // pred_region
    _
  $region69: #{net_forward.1} parent=0 // pred_fallthru
    _
  // Predicated region
  $region70: #{net_forward.1} parent=0 // pred_check
    _
  $region71: #{net_forward.1} parent=0 // pred_check_branch
    %59 = sbr.rel (0) target = $region73
  $region72: #{net_forward.1} parent=0 // pred_region
    _
  $region73: #{net_forward.1} parent=0 // pred_fallthru
    _
  // Predicated region
  $region74: #{net_forward.1} parent=0 // pred_check
    _
  $region75: #{net_forward.1} parent=0 // pred_check_branch
    %61 = sbr.rel (0) target = $region77
  $region76: #{net_forward.1} parent=0 // pred_region
    _
  $region77: #{net_forward.1} parent=0 // pred_fallthru
    _
  %v62 = vld [vmem:[%s0] sm:$0xf]
  %v63 = vld [vmem:[%s0 + $0x4] sm:$0xf]
  %v64 = vld [vmem:[%s0 + $0x8] sm:$0xf]
  %v65 = vld [vmem:[%s0 + $0xc] sm:$0xf]
  %v66 = vld [vmem:[%s0 + $0x10] sm:$0xf]
  %v67 = vld [vmem:[%s0 + $0x14] sm:$0xf]
  %v68 = vld [vmem:[%s0 + $0x18] sm:$0xf]
  %v69 = vld [vmem:[%s0 + $0x1c] sm:$0xf]
  %v70 = vld [vmem:[%s0 + $0x20] sm:$0xf]
  %v71 = vld [vmem:[%s0 + $0x24] sm:$0xf]
  %v72 = vld [vmem:[%s0 + $0x28] sm:$0xf]
  %v73 = vld [vmem:[%s0 + $0x2c] sm:$0xf]
  %v74 = vld [vmem:[%s0 + $0x30] sm:$0xf]
  %v75 = vld [vmem:[%s0 + $0x34] sm:$0xf]
  %v76 = vld [vmem:[%s0 + $0x38] sm:$0xf]
  %v77 = vld [vmem:[%s0 + $0x3c] sm:$0xf]
  %v78 = vld [vmem:[%s2] sm:$0xff]
  %v79 = vld [vmem:[%s2 + $0x8] sm:$0xff]
  %v80 = vld [vmem:[%s2 + $0x10] sm:$0xff]
  %v81 = vld [vmem:[%s2 + $0x18] sm:$0xff]
  %v82 = vld [vmem:[%s2 + $0x20] sm:$0xff]
  %v83 = vld [vmem:[%s2 + $0x28] sm:$0xff]
  %v84 = vld [vmem:[%s2 + $0x30] sm:$0xff]
  %v85 = vld [vmem:[%s2 + $0x38] sm:$0xff]
  %v86 = vld [vmem:[%s2 + $0x40] sm:$0xff]
  %v87 = vld [vmem:[%s2 + $0x48] sm:$0xff]
  %v88 = vld [vmem:[%s2 + $0x50] sm:$0xff]
  %v89 = vld [vmem:[%s2 + $0x58] sm:$0xff]
  %v90 = vld [vmem:[%s2 + $0x60] sm:$0xff]
  %v91 = vld [vmem:[%s2 + $0x68] sm:$0xff]
  %v92 = vld [vmem:[%s2 + $0x70] sm:$0xff]
  %v93 = vld [vmem:[%s2 + $0x78] sm:$0xff]
  %v94 = vld [vmem:[%s3] sm:$0x3]
  %v95 = vld [vmem:[%s4] sm:$0xff]
  %v96 = vld [vmem:[%s4 + $0x8] sm:$0xff]
  %v97 = vld [vmem:[%s4 + $0x10] sm:$0xff]
  %v98 = vld [vmem:[%s4 + $0x18] sm:$0xff]
  %v99 = vld [vmem:[%s4 + $0x20] sm:$0xff]
  %v100 = vld [vmem:[%s4 + $0x28] sm:$0xff]
  %v101 = vld [vmem:[%s4 + $0x30] sm:$0xff]
  %v102 = vld [vmem:[%s4 + $0x38] sm:$0xff]
  %v103 = vld [vmem:[%s4 + $0x40] sm:$0xff]
  %v104 = vld [vmem:[%s4 + $0x48] sm:$0xff]
  %v105 = vld [vmem:[%s4 + $0x50] sm:$0xff]
  %v106 = vld [vmem:[%s4 + $0x58] sm:$0xff]
  %v107 = vld [vmem:[%s4 + $0x60] sm:$0xff]
  %v108 = vld [vmem:[%s4 + $0x68] sm:$0xff]
  %v109 = vld [vmem:[%s4 + $0x70] sm:$0xff]
  %v110 = vld [vmem:[%s4 + $0x78] sm:$0xff]
  %v111 = vlaneseq
  %v112 = vshrl.u32 %v111, 7
  %v113 = vadd.s32 %v112, 8
  %v114 = vadd.s32 %v112, 16
  %v115 = vadd.s32 %v112, 24
  %v116 = vadd.s32 %v112, 32
  %v117 = vadd.s32 %v112, 40
  %v118 = vadd.s32 %v112, 48
  %v119 = vadd.s32 %v112, 56
  %v120 = vadd.s32 %v112, 64
  %v121 = vadd.s32 %v112, 72
  %v122 = vadd.s32 %v112, 80
  %v123 = vadd.s32 %v112, 88
  %v124 = vadd.s32 %v112, 96
  %v125 = vadd.s32 %v112, 104
  %v126 = vadd.s32 %v112, 112
  %v127 = vadd.s32 %v112, 120
  %v128 = vlaneseq
  %v129 = vand.u32 %v128, 127
  %vm130 = vcmp.ne.s32.totalorder %v112, %v129
  %vm131 = vcmp.ne.s32.totalorder %v113, %v129
  %vm132 = vcmp.ne.s32.totalorder %v114, %v129
  %vm133 = vcmp.ne.s32.totalorder %v115, %v129
  %vm134 = vcmp.ne.s32.totalorder %v116, %v129
  %vm135 = vcmp.ne.s32.totalorder %v117, %v129
  %vm136 = vcmp.ne.s32.totalorder %v118, %v129
  %vm137 = vcmp.ne.s32.totalorder %v119, %v129
  %vm138 = vcmp.ne.s32.totalorder %v120, %v129
  %vm139 = vcmp.ne.s32.totalorder %v121, %v129
  %vm140 = vcmp.ne.s32.totalorder %v122, %v129
  %vm141 = vcmp.ne.s32.totalorder %v123, %v129
  %vm142 = vcmp.ne.s32.totalorder %v124, %v129
  %vm143 = vcmp.ne.s32.totalorder %v125, %v129
  %vm144 = vcmp.ne.s32.totalorder %v126, %v129
  %vm145 = vcmp.ne.s32.totalorder %v127, %v129
  %v146 = vsel %vm130, 1, 0
  %v147 = vsel %vm131, 1, 0
  %v148 = vsel %vm132, 1, 0
  %v149 = vsel %vm133, 1, 0
  %v150 = vsel %vm134, 1, 0
  %v151 = vsel %vm135, 1, 0
  %v152 = vsel %vm136, 1, 0
  %v153 = vsel %vm137, 1, 0
  %v154 = vsel %vm138, 1, 0
  %v155 = vsel %vm139, 1, 0
  %v156 = vsel %vm140, 1, 0
  %v157 = vsel %vm141, 1, 0
  %v158 = vsel %vm142, 1, 0
  %v159 = vsel %vm143, 1, 0
  %v160 = vsel %vm144, 1, 0
  %v161 = vsel %vm145, 1, 0
  %v162 = vcvt.s32.f32 %v146
  %v163 = vcvt.s32.f32 %v147
  %v164 = vcvt.s32.f32 %v148
  %v165 = vcvt.s32.f32 %v149
  %v166 = vcvt.s32.f32 %v150
  %v167 = vcvt.s32.f32 %v151
  %v168 = vcvt.s32.f32 %v152
  %v169 = vcvt.s32.f32 %v153
  %v170 = vcvt.s32.f32 %v154
  %v171 = vcvt.s32.f32 %v155
  %v172 = vcvt.s32.f32 %v156
  %v173 = vcvt.s32.f32 %v157
  %v174 = vcvt.s32.f32 %v158
  %v175 = vcvt.s32.f32 %v159
  %v176 = vcvt.s32.f32 %v160
  %v177 = vcvt.s32.f32 %v161
  %v178 = vmul.f32 %v78, %v162
  %v179 = vmul.f32 %v79, %v163
  %v180 = vmul.f32 %v80, %v164
  %v181 = vmul.f32 %v81, %v165
  %v182 = vmul.f32 %v82, %v166
  %v183 = vmul.f32 %v83, %v167
  %v184 = vmul.f32 %v84, %v168
  %v185 = vmul.f32 %v85, %v169
  %v186 = vmul.f32 %v86, %v170
  %v187 = vmul.f32 %v87, %v171
  %v188 = vmul.f32 %v88, %v172
  %v189 = vmul.f32 %v89, %v173
  %v190 = vmul.f32 %v90, %v174
  %v191 = vmul.f32 %v91, %v175
  %v192 = vmul.f32 %v92, %v176
  %v193 = vmul.f32 %v93, %v177
  %vm194 = vcmask 1041408
  %v195 = vsel %vm194, %v94, 0.0
  %v196 = vrot.slane %v195, 4
  %v197 = vadd.f32 %v195, %v196
  %v198 = vrot.slane %v197, 2
  %v199 = vadd.f32 %v197, %v198
  %v200 = vrot.slane %v199, 1
  %v201 = vadd.f32 %v199, %v200
  %vm202 = vcmask 15360
  %v203 = vsel %vm202, %v95, 0.0
  %204 = vadd.xlane.f32.xlu0 %v203
  %v205 = vpop.xlane.xlu0 %204
  %v206 = vsel %vm202, %v96, 0.0
  %207 = vadd.xlane.f32.xlu0 %v206
  %v208 = vpop.xlane.xlu0 %207
  %v209 = vsel %vm202, %v97, 0.0
  %210 = vadd.xlane.f32.xlu0 %v209
  %v211 = vpop.xlane.xlu0 %210
  %v212 = vsel %vm202, %v98, 0.0
  %213 = vadd.xlane.f32.xlu0 %v212
  %v214 = vpop.xlane.xlu0 %213
  %v215 = vsel %vm202, %v99, 0.0
  %216 = vadd.xlane.f32.xlu0 %v215
  %v217 = vpop.xlane.xlu0 %216
  %v218 = vsel %vm202, %v100, 0.0
  %219 = vadd.xlane.f32.xlu0 %v218
  %v220 = vpop.xlane.xlu0 %219
  %v221 = vsel %vm202, %v101, 0.0
  %222 = vadd.xlane.f32.xlu0 %v221
  %v223 = vpop.xlane.xlu0 %222
  %v224 = vsel %vm202, %v102, 0.0
  %225 = vadd.xlane.f32.xlu0 %v224
  %v226 = vpop.xlane.xlu0 %225
  %v227 = vsel %vm202, %v103, 0.0
  %228 = vadd.xlane.f32.xlu0 %v227
  %v229 = vpop.xlane.xlu0 %228
  %v230 = vsel %vm202, %v104, 0.0
  %231 = vadd.xlane.f32.xlu0 %v230
  %v232 = vpop.xlane.xlu0 %231
  %v233 = vsel %vm202, %v105, 0.0
  %234 = vadd.xlane.f32.xlu0 %v233
  %v235 = vpop.xlane.xlu0 %234
  %v236 = vsel %vm202, %v106, 0.0
  %237 = vadd.xlane.f32.xlu0 %v236
  %v238 = vpop.xlane.xlu0 %237
  %v239 = vsel %vm202, %v107, 0.0
  %240 = vadd.xlane.f32.xlu0 %v239
  %v241 = vpop.xlane.xlu0 %240
  %v242 = vsel %vm202, %v108, 0.0
  %243 = vadd.xlane.f32.xlu0 %v242
  %v244 = vpop.xlane.xlu0 %243
  %v245 = vsel %vm202, %v109, 0.0
  %246 = vadd.xlane.f32.xlu0 %v245
  %v247 = vpop.xlane.xlu0 %246
  %v248 = vsel %vm202, %v110, 0.0
  %249 = vadd.xlane.f32.xlu0 %v248
  %v250 = vpop.xlane.xlu0 %249
  %v251 = vld [vmem:[%s1] sm:$0xff]
  %v252 = vld [vmem:[%s1 + $0x8] sm:$0xff]
  %v253 = vld [vmem:[%s1 + $0x10] sm:$0xff]
  %v254 = vld [vmem:[%s1 + $0x18] sm:$0xff]
  %v255 = vld [vmem:[%s1 + $0x20] sm:$0xff]
  %v256 = vld [vmem:[%s1 + $0x28] sm:$0xff]
  %v257 = vld [vmem:[%s1 + $0x30] sm:$0xff]
  %v258 = vld [vmem:[%s1 + $0x38] sm:$0xff]
  %v259 = vld [vmem:[%s1 + $0x40] sm:$0xff]
  %v260 = vld [vmem:[%s1 + $0x48] sm:$0xff]
  %v261 = vld [vmem:[%s1 + $0x50] sm:$0xff]
  %v262 = vld [vmem:[%s1 + $0x58] sm:$0xff]
  %v263 = vld [vmem:[%s1 + $0x60] sm:$0xff]
  %v264 = vld [vmem:[%s1 + $0x68] sm:$0xff]
  %v265 = vld [vmem:[%s1 + $0x70] sm:$0xff]
  %v266 = vld [vmem:[%s1 + $0x78] sm:$0xff]
  %v267 = vld [vmem:[%s5] sm:$0xf]
  %v268 = vld [vmem:[%s5 + $0x4] sm:$0xf]
  %v269 = vld [vmem:[%s5 + $0x8] sm:$0xf]
  %v270 = vld [vmem:[%s5 + $0xc] sm:$0xf]
  %v271 = vld [vmem:[%s5 + $0x10] sm:$0xf]
  %v272 = vld [vmem:[%s5 + $0x14] sm:$0xf]
  %v273 = vld [vmem:[%s5 + $0x18] sm:$0xf]
  %v274 = vld [vmem:[%s5 + $0x1c] sm:$0xf]
  %v275 = vld [vmem:[%s5 + $0x20] sm:$0xf]
  %v276 = vld [vmem:[%s5 + $0x24] sm:$0xf]
  %v277 = vld [vmem:[%s5 + $0x28] sm:$0xf]
  %v278 = vld [vmem:[%s5 + $0x2c] sm:$0xf]
  %v279 = vld [vmem:[%s5 + $0x30] sm:$0xf]
  %v280 = vld [vmem:[%s5 + $0x34] sm:$0xf]
  %v281 = vld [vmem:[%s5 + $0x38] sm:$0xf]
  %v282 = vld [vmem:[%s5 + $0x3c] sm:$0xf]
  %v283 = vld [vmem:[%s5 + $0x40] sm:$0xf]
  %v284 = vld [vmem:[%s5 + $0x44] sm:$0xf]
  %v285 = vld [vmem:[%s5 + $0x48] sm:$0xf]
  %v286 = vld [vmem:[%s5 + $0x4c] sm:$0xf]
  %v287 = vld [vmem:[%s5 + $0x50] sm:$0xf]
  %v288 = vld [vmem:[%s5 + $0x54] sm:$0xf]
  %v289 = vld [vmem:[%s5 + $0x58] sm:$0xf]
  %v290 = vld [vmem:[%s5 + $0x5c] sm:$0xf]
  %v291 = vld [vmem:[%s5 + $0x60] sm:$0xf]
  %v292 = vld [vmem:[%s5 + $0x64] sm:$0xf]
  %v293 = vld [vmem:[%s5 + $0x68] sm:$0xf]
  %v294 = vld [vmem:[%s5 + $0x6c] sm:$0xf]
  %v295 = vld [vmem:[%s5 + $0x70] sm:$0xf]
  %v296 = vld [vmem:[%s5 + $0x74] sm:$0xf]
  %v297 = vld [vmem:[%s5 + $0x78] sm:$0xf]
  %v298 = vld [vmem:[%s5 + $0x7c] sm:$0xf]
  %v299 = vld [vmem:[%s5 + $0x80] sm:$0xf]
  %v300 = vld [vmem:[%s5 + $0x84] sm:$0xf]
  %v301 = vld [vmem:[%s5 + $0x88] sm:$0xf]
  %v302 = vld [vmem:[%s5 + $0x8c] sm:$0xf]
  %v303 = vld [vmem:[%s5 + $0x90] sm:$0xf]
  %v304 = vld [vmem:[%s5 + $0x94] sm:$0xf]
  %v305 = vld [vmem:[%s5 + $0x98] sm:$0xf]
  %v306 = vld [vmem:[%s5 + $0x9c] sm:$0xf]
  %v307 = vld [vmem:[%s5 + $0xa0] sm:$0xf]
  %v308 = vld [vmem:[%s5 + $0xa4] sm:$0xf]
  %v309 = vld [vmem:[%s5 + $0xa8] sm:$0xf]
  %v310 = vld [vmem:[%s5 + $0xac] sm:$0xf]
  %v311 = vld [vmem:[%s5 + $0xb0] sm:$0xf]
  %v312 = vld [vmem:[%s5 + $0xb4] sm:$0xf]
  %v313 = vld [vmem:[%s5 + $0xb8] sm:$0xf]
  %v314 = vld [vmem:[%s5 + $0xbc] sm:$0xf]
  %v315 = vld [vmem:[%s5 + $0xc0] sm:$0xf]
  %v316 = vld [vmem:[%s5 + $0xc4] sm:$0xf]
  %v317 = vld [vmem:[%s5 + $0xc8] sm:$0xf]
  %v318 = vld [vmem:[%s5 + $0xcc] sm:$0xf]
  %v319 = vld [vmem:[%s5 + $0xd0] sm:$0xf]
  %v320 = vld [vmem:[%s5 + $0xd4] sm:$0xf]
  %v321 = vld [vmem:[%s5 + $0xd8] sm:$0xf]
  %v322 = vld [vmem:[%s5 + $0xdc] sm:$0xf]
  %v323 = vld [vmem:[%s5 + $0xe0] sm:$0xf]
  %v324 = vld [vmem:[%s5 + $0xe4] sm:$0xf]
  %v325 = vld [vmem:[%s5 + $0xe8] sm:$0xf]
  %v326 = vld [vmem:[%s5 + $0xec] sm:$0xf]
  %v327 = vld [vmem:[%s5 + $0xf0] sm:$0xf]
  %v328 = vld [vmem:[%s5 + $0xf4] sm:$0xf]
  %v329 = vld [vmem:[%s5 + $0xf8] sm:$0xf]
  %v330 = vld [vmem:[%s5 + $0xfc] sm:$0xf]
  %v331 = vld [vmem:[%s6] sm:$0x1]
  %v348 = vunpack.c.l.b16 %v62
  %v349 = vunpack.c.l.b16 %v63
  %v350 = vunpack.c.l.b16 %v64
  %v351 = vunpack.c.l.b16 %v65
  %v352 = vunpack.c.l.b16 %v66
  %v353 = vunpack.c.l.b16 %v67
  %v354 = vunpack.c.l.b16 %v68
  %v355 = vunpack.c.l.b16 %v69
  %v356 = vunpack.c.l.b16 %v70
  %v357 = vunpack.c.l.b16 %v71
  %v358 = vunpack.c.l.b16 %v72
  %v359 = vunpack.c.l.b16 %v73
  %v360 = vunpack.c.l.b16 %v74
  %v361 = vunpack.c.l.b16 %v75
  %v362 = vunpack.c.l.b16 %v76
  %v363 = vunpack.c.l.b16 %v77
  %v364 = vpack.c.b16 %v349, %v348
  %v365 = vpack.c.b16 %v351, %v350
  %v366 = vpack.c.b16 %v353, %v352
  %v367 = vpack.c.b16 %v355, %v354
  %v368 = vpack.c.b16 %v357, %v356
  %v369 = vpack.c.b16 %v359, %v358
  %v370 = vpack.c.b16 %v361, %v360
  %v371 = vpack.c.b16 %v363, %v362
  %v396 = vunpack.c.l.b16 %v251
  %v397 = vunpack.c.h.b16 %v251
  %v398 = vunpack.c.l.b16 %v252
  %v399 = vunpack.c.h.b16 %v252
  %v400 = vunpack.c.l.b16 %v253
  %v401 = vunpack.c.h.b16 %v253
  %v402 = vunpack.c.l.b16 %v254
  %v403 = vunpack.c.h.b16 %v254
  %v404 = vunpack.c.l.b16 %v255
  %v405 = vunpack.c.h.b16 %v255
  %v406 = vunpack.c.l.b16 %v256
  %v407 = vunpack.c.h.b16 %v256
  %v408 = vunpack.c.l.b16 %v257
  %v409 = vunpack.c.h.b16 %v257
  %v410 = vunpack.c.l.b16 %v258
  %v411 = vunpack.c.h.b16 %v258
  %v412 = vunpack.c.l.b16 %v259
  %v413 = vunpack.c.h.b16 %v259
  %v414 = vunpack.c.l.b16 %v260
  %v415 = vunpack.c.h.b16 %v260
  %v416 = vunpack.c.l.b16 %v261
  %v417 = vunpack.c.h.b16 %v261
  %v418 = vunpack.c.l.b16 %v262
  %v419 = vunpack.c.h.b16 %v262
  %v420 = vunpack.c.l.b16 %v263
  %v421 = vunpack.c.h.b16 %v263
  %v422 = vunpack.c.l.b16 %v264
  %v423 = vunpack.c.h.b16 %v264
  %v424 = vunpack.c.l.b16 %v265
  %v425 = vunpack.c.h.b16 %v265
  %v426 = vunpack.c.l.b16 %v266
  %v427 = vunpack.c.h.b16 %v266
  %v428 = vpack.c.b16 %v398, %v396
  %v429 = vpack.c.b16 %v399, %v397
  %v430 = vpack.c.b16 %v402, %v400
  %v431 = vpack.c.b16 %v403, %v401
  %v432 = vpack.c.b16 %v406, %v404
  %v433 = vpack.c.b16 %v407, %v405
  %v434 = vpack.c.b16 %v410, %v408
  %v435 = vpack.c.b16 %v411, %v409
  %v436 = vpack.c.b16 %v414, %v412
  %v437 = vpack.c.b16 %v415, %v413
  %v438 = vpack.c.b16 %v418, %v416
  %v439 = vpack.c.b16 %v419, %v417
  %v440 = vpack.c.b16 %v422, %v420
  %v441 = vpack.c.b16 %v423, %v421
  %v442 = vpack.c.b16 %v426, %v424
  %v443 = vpack.c.b16 %v427, %v425
  %460 = vmatpush.bf16.msra.mxu0 %v442
  %461 = vmatpush.bf16.msra.mxu0 %v440
  %462 = vmatpush.bf16.msra.mxu0 %v438
  %463 = vmatpush.bf16.msra.mxu0 %v436
  %464 = vmatpush.bf16.msra.mxu0 %v434
  %465 = vmatpush.bf16.msra.mxu0 %v432
  %466 = vmatpush.bf16.msra.mxu0 %v430
  %467 = vmatpush.bf16.msra.mxu0 %v428
  %468 = vmatmul.bf16.gmra.mxu0 %v364
  %v469 = vpop.f32.mrf.mxu0
  %v470 = vadd.f32 0.0, %v469
  %v471 = vpop.f32.mrf.mxu0
  %v472 = vadd.f32 0.0, %v471
  %473 = vmatmul.bf16.gmra.mxu0 %v365
  %v474 = vpop.f32.mrf.mxu0
  %v475 = vadd.f32 0.0, %v474
  %v476 = vpop.f32.mrf.mxu0
  %v477 = vadd.f32 0.0, %v476
  %478 = vmatmul.bf16.gmra.mxu0 %v366
  %v479 = vpop.f32.mrf.mxu0
  %v480 = vadd.f32 0.0, %v479
  %v481 = vpop.f32.mrf.mxu0
  %v482 = vadd.f32 0.0, %v481
  %483 = vmatmul.bf16.gmra.mxu0 %v367
  %v484 = vpop.f32.mrf.mxu0
  %v485 = vadd.f32 0.0, %v484
  %v486 = vpop.f32.mrf.mxu0
  %v487 = vadd.f32 0.0, %v486
  %488 = vmatmul.bf16.gmra.mxu0 %v368
  %v489 = vpop.f32.mrf.mxu0
  %v490 = vadd.f32 0.0, %v489
  %v491 = vpop.f32.mrf.mxu0
  %v492 = vadd.f32 0.0, %v491
  %493 = vmatmul.bf16.gmra.mxu0 %v369
  %v494 = vpop.f32.mrf.mxu0
  %v495 = vadd.f32 0.0, %v494
  %v496 = vpop.f32.mrf.mxu0
  %v497 = vadd.f32 0.0, %v496
  %498 = vmatmul.bf16.gmra.mxu0 %v370
  %v499 = vpop.f32.mrf.mxu0
  %v500 = vadd.f32 0.0, %v499
  %v501 = vpop.f32.mrf.mxu0
  %v502 = vadd.f32 0.0, %v501
  %503 = vmatmul.bf16.gmra.mxu0 %v371
  %v504 = vpop.f32.mrf.mxu0
  %v505 = vadd.f32 0.0, %v504
  %v506 = vpop.f32.mrf.mxu0
  %v507 = vadd.f32 0.0, %v506
  %508 = vdwg.mxu0
  %509 = vmatpush.bf16.msra.mxu0 %v443
  %510 = vmatpush.bf16.msra.mxu0 %v441
  %511 = vmatpush.bf16.msra.mxu0 %v439
  %512 = vmatpush.bf16.msra.mxu0 %v437
  %513 = vmatpush.bf16.msra.mxu0 %v435
  %514 = vmatpush.bf16.msra.mxu0 %v433
  %515 = vmatpush.bf16.msra.mxu0 %v431
  %516 = vmatpush.bf16.msra.mxu0 %v429
  %517 = vmatmul.bf16.gmra.mxu0 %v364
  %v518 = vpop.f32.mrf.mxu0
  %v519 = vadd.f32 0.0, %v518
  %v520 = vpop.f32.mrf.mxu0
  %v521 = vadd.f32 0.0, %v520
  %522 = vmatmul.bf16.gmra.mxu0 %v365
  %v523 = vpop.f32.mrf.mxu0
  %v524 = vadd.f32 0.0, %v523
  %v525 = vpop.f32.mrf.mxu0
  %v526 = vadd.f32 0.0, %v525
  %527 = vmatmul.bf16.gmra.mxu0 %v366
  %v528 = vpop.f32.mrf.mxu0
  %v529 = vadd.f32 0.0, %v528
  %v530 = vpop.f32.mrf.mxu0
  %v531 = vadd.f32 0.0, %v530
  %532 = vmatmul.bf16.gmra.mxu0 %v367
  %v533 = vpop.f32.mrf.mxu0
  %v534 = vadd.f32 0.0, %v533
  %v535 = vpop.f32.mrf.mxu0
  %v536 = vadd.f32 0.0, %v535
  %537 = vmatmul.bf16.gmra.mxu0 %v368
  %v538 = vpop.f32.mrf.mxu0
  %v539 = vadd.f32 0.0, %v538
  %v540 = vpop.f32.mrf.mxu0
  %v541 = vadd.f32 0.0, %v540
  %542 = vmatmul.bf16.gmra.mxu0 %v369
  %v543 = vpop.f32.mrf.mxu0
  %v544 = vadd.f32 0.0, %v543
  %v545 = vpop.f32.mrf.mxu0
  %v546 = vadd.f32 0.0, %v545
  %547 = vmatmul.bf16.gmra.mxu0 %v370
  %v548 = vpop.f32.mrf.mxu0
  %v549 = vadd.f32 0.0, %v548
  %v550 = vpop.f32.mrf.mxu0
  %v551 = vadd.f32 0.0, %v550
  %552 = vmatmul.bf16.gmra.mxu0 %v371
  %v553 = vpop.f32.mrf.mxu0
  %v554 = vadd.f32 0.0, %v553
  %v555 = vpop.f32.mrf.mxu0
  %v556 = vadd.f32 0.0, %v555
  %557 = vdwg.mxu0
  %v558 = vpack.c.bf16 %v519, %v470
  %v559 = vpack.c.bf16 %v521, %v472
  %v560 = vpack.c.bf16 %v524, %v475
  %v561 = vpack.c.bf16 %v526, %v477
  %v562 = vpack.c.bf16 %v529, %v480
  %v563 = vpack.c.bf16 %v531, %v482
  %v564 = vpack.c.bf16 %v534, %v485
  %v565 = vpack.c.bf16 %v536, %v487
  %v566 = vpack.c.bf16 %v539, %v490
  %v567 = vpack.c.bf16 %v541, %v492
  %v568 = vpack.c.bf16 %v544, %v495
  %v569 = vpack.c.bf16 %v546, %v497
  %v570 = vpack.c.bf16 %v549, %v500
  %v571 = vpack.c.bf16 %v551, %v502
  %v572 = vpack.c.bf16 %v554, %v505
  %v573 = vpack.c.bf16 %v556, %v507
  %v590 = vunpack.c.l.b16 %v558
  %v591 = vunpack.c.h.b16 %v558
  %v592 = vunpack.c.l.b16 %v559
  %v593 = vunpack.c.h.b16 %v559
  %v594 = vunpack.c.l.b16 %v560
  %v595 = vunpack.c.h.b16 %v560
  %v596 = vunpack.c.l.b16 %v561
  %v597 = vunpack.c.h.b16 %v561
  %v598 = vunpack.c.l.b16 %v562
  %v599 = vunpack.c.h.b16 %v562
  %v600 = vunpack.c.l.b16 %v563
  %v601 = vunpack.c.h.b16 %v563
  %v602 = vunpack.c.l.b16 %v564
  %v603 = vunpack.c.h.b16 %v564
  %v604 = vunpack.c.l.b16 %v565
  %v605 = vunpack.c.h.b16 %v565
  %v606 = vunpack.c.l.b16 %v566
  %v607 = vunpack.c.h.b16 %v566
  %v608 = vunpack.c.l.b16 %v567
  %v609 = vunpack.c.h.b16 %v567
  %v610 = vunpack.c.l.b16 %v568
  %v611 = vunpack.c.h.b16 %v568
  %v612 = vunpack.c.l.b16 %v569
  %v613 = vunpack.c.h.b16 %v569
  %v614 = vunpack.c.l.b16 %v570
  %v615 = vunpack.c.h.b16 %v570
  %v616 = vunpack.c.l.b16 %v571
  %v617 = vunpack.c.h.b16 %v571
  %v618 = vunpack.c.l.b16 %v572
  %v619 = vunpack.c.h.b16 %v572
  %v620 = vunpack.c.l.b16 %v573
  %v621 = vunpack.c.h.b16 %v573
  %v622 = vpack.c.b16 %v592, %v590
  %v623 = vpack.c.b16 %v593, %v591
  %v624 = vpack.c.b16 %v596, %v594
  %v625 = vpack.c.b16 %v597, %v595
  %v626 = vpack.c.b16 %v600, %v598
  %v627 = vpack.c.b16 %v601, %v599
  %v628 = vpack.c.b16 %v604, %v602
  %v629 = vpack.c.b16 %v605, %v603
  %v630 = vpack.c.b16 %v608, %v606
  %v631 = vpack.c.b16 %v609, %v607
  %v632 = vpack.c.b16 %v612, %v610
  %v633 = vpack.c.b16 %v613, %v611
  %v634 = vpack.c.b16 %v616, %v614
  %v635 = vpack.c.b16 %v617, %v615
  %v636 = vpack.c.b16 %v620, %v618
  %v637 = vpack.c.b16 %v621, %v619
  %v655 = vperm.slane %v331, 0
  %v721 = vunpack.c.l.b16 %v267
  %v722 = vunpack.c.l.b16 %v268
  %v723 = vunpack.c.l.b16 %v269
  %v724 = vunpack.c.l.b16 %v270
  %v725 = vunpack.c.l.b16 %v271
  %v726 = vunpack.c.l.b16 %v272
  %v727 = vunpack.c.l.b16 %v273
  %v728 = vunpack.c.l.b16 %v274
  %v729 = vunpack.c.l.b16 %v275
  %v730 = vunpack.c.l.b16 %v276
  %v731 = vunpack.c.l.b16 %v277
  %v732 = vunpack.c.l.b16 %v278
  %v733 = vunpack.c.l.b16 %v279
  %v734 = vunpack.c.l.b16 %v280
  %v735 = vunpack.c.l.b16 %v281
  %v736 = vunpack.c.l.b16 %v282
  %v737 = vunpack.c.l.b16 %v283
  %v738 = vunpack.c.l.b16 %v284
  %v739 = vunpack.c.l.b16 %v285
  %v740 = vunpack.c.l.b16 %v286
  %v741 = vunpack.c.l.b16 %v287
  %v742 = vunpack.c.l.b16 %v288
  %v743 = vunpack.c.l.b16 %v289
  %v744 = vunpack.c.l.b16 %v290
  %v745 = vunpack.c.l.b16 %v291
  %v746 = vunpack.c.l.b16 %v292
  %v747 = vunpack.c.l.b16 %v293
  %v748 = vunpack.c.l.b16 %v294
  %v749 = vunpack.c.l.b16 %v295
  %v750 = vunpack.c.l.b16 %v296
  %v751 = vunpack.c.l.b16 %v297
  %v752 = vunpack.c.l.b16 %v298
  %v753 = vunpack.c.l.b16 %v299
  %v754 = vunpack.c.l.b16 %v300
  %v755 = vunpack.c.l.b16 %v301
  %v756 = vunpack.c.l.b16 %v302
  %v757 = vunpack.c.l.b16 %v303
  %v758 = vunpack.c.l.b16 %v304
  %v759 = vunpack.c.l.b16 %v305
  %v760 = vunpack.c.l.b16 %v306
  %v761 = vunpack.c.l.b16 %v307
  %v762 = vunpack.c.l.b16 %v308
  %v763 = vunpack.c.l.b16 %v309
  %v764 = vunpack.c.l.b16 %v310
  %v765 = vunpack.c.l.b16 %v311
  %v766 = vunpack.c.l.b16 %v312
  %v767 = vunpack.c.l.b16 %v313
  %v768 = vunpack.c.l.b16 %v314
  %v769 = vunpack.c.l.b16 %v315
  %v770 = vunpack.c.l.b16 %v316
  %v771 = vunpack.c.l.b16 %v317
  %v772 = vunpack.c.l.b16 %v318
  %v773 = vunpack.c.l.b16 %v319
  %v774 = vunpack.c.l.b16 %v320
  %v775 = vunpack.c.l.b16 %v321
  %v776 = vunpack.c.l.b16 %v322
  %v777 = vunpack.c.l.b16 %v323
  %v778 = vunpack.c.l.b16 %v324
  %v779 = vunpack.c.l.b16 %v325
  %v780 = vunpack.c.l.b16 %v326
  %v781 = vunpack.c.l.b16 %v327
  %v782 = vunpack.c.l.b16 %v328
  %v783 = vunpack.c.l.b16 %v329
  %v784 = vunpack.c.l.b16 %v330
  %v785 = vpack.c.b16 %v722, %v721
  %v786 = vpack.c.b16 %v724, %v723
  %v787 = vpack.c.b16 %v726, %v725
  %v788 = vpack.c.b16 %v728, %v727
  %v789 = vpack.c.b16 %v730, %v729
  %v790 = vpack.c.b16 %v732, %v731
  %v791 = vpack.c.b16 %v734, %v733
  %v792 = vpack.c.b16 %v736, %v735
  %v793 = vpack.c.b16 %v738, %v737
  %v794 = vpack.c.b16 %v740, %v739
  %v795 = vpack.c.b16 %v742, %v741
  %v796 = vpack.c.b16 %v744, %v743
  %v797 = vpack.c.b16 %v746, %v745
  %v798 = vpack.c.b16 %v748, %v747
  %v799 = vpack.c.b16 %v750, %v749
  %v800 = vpack.c.b16 %v752, %v751
  %v801 = vpack.c.b16 %v754, %v753
  %v802 = vpack.c.b16 %v756, %v755
  %v803 = vpack.c.b16 %v758, %v757
  %v804 = vpack.c.b16 %v760, %v759
  %v805 = vpack.c.b16 %v762, %v761
  %v806 = vpack.c.b16 %v764, %v763
  %v807 = vpack.c.b16 %v766, %v765
  %v808 = vpack.c.b16 %v768, %v767
  %v809 = vpack.c.b16 %v770, %v769
  %v810 = vpack.c.b16 %v772, %v771
  %v811 = vpack.c.b16 %v774, %v773
  %v812 = vpack.c.b16 %v776, %v775
  %v813 = vpack.c.b16 %v778, %v777
  %v814 = vpack.c.b16 %v780, %v779
  %v815 = vpack.c.b16 %v782, %v781
  %v816 = vpack.c.b16 %v784, %v783
  %849 = vmatpush.bf16.msra.mxu0 %v792
  %850 = vmatpush.bf16.msra.mxu0 %v791
  %851 = vmatpush.bf16.msra.mxu0 %v790
  %852 = vmatpush.bf16.msra.mxu0 %v789
  %853 = vmatpush.bf16.msra.mxu0 %v788
  %854 = vmatpush.bf16.msra.mxu0 %v787
  %855 = vmatpush.bf16.msra.mxu0 %v786
  %856 = vmatpush.bf16.msra.mxu0 %v785
  %857 = vmatmul.bf16.gmra.mxu0 %v622
  %v858 = vpop.f32.mrf.mxu0
  %v859 = vadd.f32 %v655, %v858
  %v860 = vpop.f32.mrf.mxu0
  %v861 = vadd.f32 %v655, %v860
  %862 = vmatmul.bf16.gmra.mxu0 %v624
  %v863 = vpop.f32.mrf.mxu0
  %v864 = vadd.f32 %v655, %v863
  %v865 = vpop.f32.mrf.mxu0
  %v866 = vadd.f32 %v655, %v865
  %867 = vmatmul.bf16.gmra.mxu0 %v626
  %v868 = vpop.f32.mrf.mxu0
  %v869 = vadd.f32 %v655, %v868
  %v870 = vpop.f32.mrf.mxu0
  %v871 = vadd.f32 %v655, %v870
  %872 = vmatmul.bf16.gmra.mxu0 %v628
  %v873 = vpop.f32.mrf.mxu0
  %v874 = vadd.f32 %v655, %v873
  %v875 = vpop.f32.mrf.mxu0
  %v876 = vadd.f32 %v655, %v875
  %877 = vmatmul.bf16.gmra.mxu0 %v630
  %v878 = vpop.f32.mrf.mxu0
  %v879 = vadd.f32 %v655, %v878
  %v880 = vpop.f32.mrf.mxu0
  %v881 = vadd.f32 %v655, %v880
  %882 = vmatmul.bf16.gmra.mxu0 %v632
  %v883 = vpop.f32.mrf.mxu0
  %v884 = vadd.f32 %v655, %v883
  %v885 = vpop.f32.mrf.mxu0
  %v886 = vadd.f32 %v655, %v885
  %887 = vmatmul.bf16.gmra.mxu0 %v634
  %v888 = vpop.f32.mrf.mxu0
  %v889 = vadd.f32 %v655, %v888
  %v890 = vpop.f32.mrf.mxu0
  %v891 = vadd.f32 %v655, %v890
  %892 = vmatmul.bf16.gmra.mxu0 %v636
  %v893 = vpop.f32.mrf.mxu0
  %v894 = vadd.f32 %v655, %v893
  %v895 = vpop.f32.mrf.mxu0
  %v896 = vadd.f32 %v655, %v895
  %897 = vdwg.mxu0
  %898 = vmatpush.bf16.msra.mxu0 %v800
  %899 = vmatpush.bf16.msra.mxu0 %v799
  %900 = vmatpush.bf16.msra.mxu0 %v798
  %901 = vmatpush.bf16.msra.mxu0 %v797
  %902 = vmatpush.bf16.msra.mxu0 %v796
  %903 = vmatpush.bf16.msra.mxu0 %v795
  %904 = vmatpush.bf16.msra.mxu0 %v794
  %905 = vmatpush.bf16.msra.mxu0 %v793
  %906 = vmatmul.bf16.gmra.mxu0 %v623
  %v907 = vpop.f32.mrf.mxu0
  %v908 = vadd.f32 %v859, %v907
  %v909 = vpop.f32.mrf.mxu0
  %v910 = vadd.f32 %v861, %v909
  %911 = vmatmul.bf16.gmra.mxu0 %v625
  %v912 = vpop.f32.mrf.mxu0
  %v913 = vadd.f32 %v864, %v912
  %v914 = vpop.f32.mrf.mxu0
  %v915 = vadd.f32 %v866, %v914
  %916 = vmatmul.bf16.gmra.mxu0 %v627
  %v917 = vpop.f32.mrf.mxu0
  %v918 = vadd.f32 %v869, %v917
  %v919 = vpop.f32.mrf.mxu0
  %v920 = vadd.f32 %v871, %v919
  %921 = vmatmul.bf16.gmra.mxu0 %v629
  %v922 = vpop.f32.mrf.mxu0
  %v923 = vadd.f32 %v874, %v922
  %v924 = vpop.f32.mrf.mxu0
  %v925 = vadd.f32 %v876, %v924
  %926 = vmatmul.bf16.gmra.mxu0 %v631
  %v927 = vpop.f32.mrf.mxu0
  %v928 = vadd.f32 %v879, %v927
  %v929 = vpop.f32.mrf.mxu0
  %v930 = vadd.f32 %v881, %v929
  %931 = vmatmul.bf16.gmra.mxu0 %v633
  %v932 = vpop.f32.mrf.mxu0
  %v933 = vadd.f32 %v884, %v932
  %v934 = vpop.f32.mrf.mxu0
  %v935 = vadd.f32 %v886, %v934
  %936 = vmatmul.bf16.gmra.mxu0 %v635
  %v937 = vpop.f32.mrf.mxu0
  %v938 = vadd.f32 %v889, %v937
  %v939 = vpop.f32.mrf.mxu0
  %v940 = vadd.f32 %v891, %v939
  %941 = vmatmul.bf16.gmra.mxu0 %v637
  %v942 = vpop.f32.mrf.mxu0
  %v943 = vadd.f32 %v894, %v942
  %v944 = vpop.f32.mrf.mxu0
  %v945 = vadd.f32 %v896, %v944
  %946 = vdwg.mxu0
  %947 = vmatpush.bf16.msra.mxu0 %v808
  %948 = vmatpush.bf16.msra.mxu0 %v807
  %949 = vmatpush.bf16.msra.mxu0 %v806
  %950 = vmatpush.bf16.msra.mxu0 %v805
  %951 = vmatpush.bf16.msra.mxu0 %v804
  %952 = vmatpush.bf16.msra.mxu0 %v803
  %953 = vmatpush.bf16.msra.mxu0 %v802
  %954 = vmatpush.bf16.msra.mxu0 %v801
  %955 = vmatmul.bf16.gmra.mxu0 %v428
  %v956 = vpop.f32.mrf.mxu0
  %v957 = vadd.f32 %v908, %v956
  %v958 = vpop.f32.mrf.mxu0
  %v959 = vadd.f32 %v910, %v958
  %960 = vmatmul.bf16.gmra.mxu0 %v430
  %v961 = vpop.f32.mrf.mxu0
  %v962 = vadd.f32 %v913, %v961
  %v963 = vpop.f32.mrf.mxu0
  %v964 = vadd.f32 %v915, %v963
  %965 = vmatmul.bf16.gmra.mxu0 %v432
  %v966 = vpop.f32.mrf.mxu0
  %v967 = vadd.f32 %v918, %v966
  %v968 = vpop.f32.mrf.mxu0
  %v969 = vadd.f32 %v920, %v968
  %970 = vmatmul.bf16.gmra.mxu0 %v434
  %v971 = vpop.f32.mrf.mxu0
  %v972 = vadd.f32 %v923, %v971
  %v973 = vpop.f32.mrf.mxu0
  %v974 = vadd.f32 %v925, %v973
  %975 = vmatmul.bf16.gmra.mxu0 %v436
  %v976 = vpop.f32.mrf.mxu0
  %v977 = vadd.f32 %v928, %v976
  %v978 = vpop.f32.mrf.mxu0
  %v979 = vadd.f32 %v930, %v978
  %980 = vmatmul.bf16.gmra.mxu0 %v438
  %v981 = vpop.f32.mrf.mxu0
  %v982 = vadd.f32 %v933, %v981
  %v983 = vpop.f32.mrf.mxu0
  %v984 = vadd.f32 %v935, %v983
  %985 = vmatmul.bf16.gmra.mxu0 %v440
  %v986 = vpop.f32.mrf.mxu0
  %v987 = vadd.f32 %v938, %v986
  %v988 = vpop.f32.mrf.mxu0
  %v989 = vadd.f32 %v940, %v988
  %990 = vmatmul.bf16.gmra.mxu0 %v442
  %v991 = vpop.f32.mrf.mxu0
  %v992 = vadd.f32 %v943, %v991
  %v993 = vpop.f32.mrf.mxu0
  %v994 = vadd.f32 %v945, %v993
  %995 = vdwg.mxu0
  %996 = vmatpush.bf16.msra.mxu0 %v816
  %997 = vmatpush.bf16.msra.mxu0 %v815
  %998 = vmatpush.bf16.msra.mxu0 %v814
  %999 = vmatpush.bf16.msra.mxu0 %v813
  %1000 = vmatpush.bf16.msra.mxu0 %v812
  %1001 = vmatpush.bf16.msra.mxu0 %v811
  %1002 = vmatpush.bf16.msra.mxu0 %v810
  %1003 = vmatpush.bf16.msra.mxu0 %v809
  %1004 = vmatmul.bf16.gmra.mxu0 %v429
  %v1005 = vpop.f32.mrf.mxu0
  %v1006 = vadd.f32 %v957, %v1005
  %v1007 = vpop.f32.mrf.mxu0
  %v1008 = vadd.f32 %v959, %v1007
  %1009 = vmatmul.bf16.gmra.mxu0 %v431
  %v1010 = vpop.f32.mrf.mxu0
  %v1011 = vadd.f32 %v962, %v1010
  %v1012 = vpop.f32.mrf.mxu0
  %v1013 = vadd.f32 %v964, %v1012
  %1014 = vmatmul.bf16.gmra.mxu0 %v433
  %v1015 = vpop.f32.mrf.mxu0
  %v1016 = vadd.f32 %v967, %v1015
  %v1017 = vpop.f32.mrf.mxu0
  %v1018 = vadd.f32 %v969, %v1017
  %1019 = vmatmul.bf16.gmra.mxu0 %v435
  %v1020 = vpop.f32.mrf.mxu0
  %v1021 = vadd.f32 %v972, %v1020
  %v1022 = vpop.f32.mrf.mxu0
  %v1023 = vadd.f32 %v974, %v1022
  %1024 = vmatmul.bf16.gmra.mxu0 %v437
  %v1025 = vpop.f32.mrf.mxu0
  %v1026 = vadd.f32 %v977, %v1025
  %v1027 = vpop.f32.mrf.mxu0
  %v1028 = vadd.f32 %v979, %v1027
  %1029 = vmatmul.bf16.gmra.mxu0 %v439
  %v1030 = vpop.f32.mrf.mxu0
  %v1031 = vadd.f32 %v982, %v1030
  %v1032 = vpop.f32.mrf.mxu0
  %v1033 = vadd.f32 %v984, %v1032
  %1034 = vmatmul.bf16.gmra.mxu0 %v441
  %v1035 = vpop.f32.mrf.mxu0
  %v1036 = vadd.f32 %v987, %v1035
  %v1037 = vpop.f32.mrf.mxu0
  %v1038 = vadd.f32 %v989, %v1037
  %1039 = vmatmul.bf16.gmra.mxu0 %v443
  %v1040 = vpop.f32.mrf.mxu0
  %v1041 = vadd.f32 %v992, %v1040
  %v1042 = vpop.f32.mrf.mxu0
  %v1043 = vadd.f32 %v994, %v1042
  %1044 = vdwg.mxu0
  %v1045 = vmax.f32 %v1006, 0.0
  %v1046 = vmax.f32 %v1008, 0.0
  %v1047 = vmax.f32 %v1011, 0.0
  %v1048 = vmax.f32 %v1013, 0.0
  %v1049 = vmax.f32 %v1016, 0.0
  %v1050 = vmax.f32 %v1018, 0.0
  %v1051 = vmax.f32 %v1021, 0.0
  %v1052 = vmax.f32 %v1023, 0.0
  %v1053 = vmax.f32 %v1026, 0.0
  %v1054 = vmax.f32 %v1028, 0.0
  %v1055 = vmax.f32 %v1031, 0.0
  %v1056 = vmax.f32 %v1033, 0.0
  %v1057 = vmax.f32 %v1036, 0.0
  %v1058 = vmax.f32 %v1038, 0.0
  %v1059 = vmax.f32 %v1041, 0.0
  %v1060 = vmax.f32 %v1043, 0.0
  %v1061 = vld [vmem:[%s7] sm:$0x1]
  %v1063 = vperm.slane %v1061, 0
  %v1065 = vmul.f32 %v1045, %v1063
  %v1066 = vmul.f32 %v1046, %v1063
  %v1067 = vmul.f32 %v1047, %v1063
  %v1068 = vmul.f32 %v1048, %v1063
  %v1069 = vmul.f32 %v1049, %v1063
  %v1070 = vmul.f32 %v1050, %v1063
  %v1071 = vmul.f32 %v1051, %v1063
  %v1072 = vmul.f32 %v1052, %v1063
  %v1073 = vmul.f32 %v1053, %v1063
  %v1074 = vmul.f32 %v1054, %v1063
  %v1075 = vmul.f32 %v1055, %v1063
  %v1076 = vmul.f32 %v1056, %v1063
  %v1077 = vmul.f32 %v1057, %v1063
  %v1078 = vmul.f32 %v1058, %v1063
  %v1079 = vmul.f32 %v1059, %v1063
  %v1080 = vmul.f32 %v1060, %v1063
  %1081 = vadd.xlane.f32.xlu0 %v1065
  %v1082 = vpop.xlane.xlu0 %1081
  %1083 = vadd.xlane.f32.xlu0 %v1066
  %v1084 = vpop.xlane.xlu0 %1083
  %1085 = vadd.xlane.f32.xlu0 %v1067
  %v1086 = vpop.xlane.xlu0 %1085
  %1087 = vadd.xlane.f32.xlu0 %v1068
  %v1088 = vpop.xlane.xlu0 %1087
  %1089 = vadd.xlane.f32.xlu0 %v1069
  %v1090 = vpop.xlane.xlu0 %1089
  %1091 = vadd.xlane.f32.xlu0 %v1070
  %v1092 = vpop.xlane.xlu0 %1091
  %1093 = vadd.xlane.f32.xlu0 %v1071
  %v1094 = vpop.xlane.xlu0 %1093
  %1095 = vadd.xlane.f32.xlu0 %v1072
  %v1096 = vpop.xlane.xlu0 %1095
  %1097 = vadd.xlane.f32.xlu0 %v1073
  %v1098 = vpop.xlane.xlu0 %1097
  %1099 = vadd.xlane.f32.xlu0 %v1074
  %v1100 = vpop.xlane.xlu0 %1099
  %1101 = vadd.xlane.f32.xlu0 %v1075
  %v1102 = vpop.xlane.xlu0 %1101
  %1103 = vadd.xlane.f32.xlu0 %v1076
  %v1104 = vpop.xlane.xlu0 %1103
  %1105 = vadd.xlane.f32.xlu0 %v1077
  %v1106 = vpop.xlane.xlu0 %1105
  %1107 = vadd.xlane.f32.xlu0 %v1078
  %v1108 = vpop.xlane.xlu0 %1107
  %1109 = vadd.xlane.f32.xlu0 %v1079
  %v1110 = vpop.xlane.xlu0 %1109
  %1111 = vadd.xlane.f32.xlu0 %v1080
  %v1112 = vpop.xlane.xlu0 %1111
  %1113 = vmatpush.xpose.msra.mxu0 %v1060
  %1114 = vmatpush.xpose.msra.mxu0 %v1059
  %1115 = vmatpush.xpose.msra.mxu0 %v1058
  %1116 = vmatpush.xpose.msra.mxu0 %v1057
  %1117 = vmatpush.xpose.msra.mxu0 %v1056
  %1118 = vmatpush.xpose.msra.mxu0 %v1055
  %1119 = vmatpush.xpose.msra.mxu0 %v1054
  %1120 = vmatpush.xpose.msra.mxu0 %v1053
  %1121 = vmatpush.xpose.msra.mxu0 %v1052
  %1122 = vmatpush.xpose.msra.mxu0 %v1051
  %1123 = vmatpush.xpose.msra.mxu0 %v1050
  %1124 = vmatpush.xpose.msra.mxu0 %v1049
  %1125 = vmatpush.xpose.msra.mxu0 %v1048
  %1126 = vmatpush.xpose.msra.mxu0 %v1047
  %1127 = vmatpush.xpose.msra.mxu0 %v1046
  %1128 = vmatpush.xpose.msra.mxu0 %v1045
  %1129 = vmatmul.f32.gmra.mxu0 %v1061
  %v1130 = vpop.f32.mrf.mxu0
  %v1131 = vadd.f32 0.0, %v1130
  %1132 = vdwg.mxu0
  %v1133 = vmul.f32 %v78, %v201
  %v1134 = vmul.f32 %v79, %v201
  %v1135 = vmul.f32 %v80, %v201
  %v1136 = vmul.f32 %v81, %v201
  %v1137 = vmul.f32 %v82, %v201
  %v1138 = vmul.f32 %v83, %v201
  %v1139 = vmul.f32 %v84, %v201
  %v1140 = vmul.f32 %v85, %v201
  %v1141 = vmul.f32 %v86, %v201
  %v1142 = vmul.f32 %v87, %v201
  %v1143 = vmul.f32 %v88, %v201
  %v1144 = vmul.f32 %v89, %v201
  %v1145 = vmul.f32 %v90, %v201
  %v1146 = vmul.f32 %v91, %v201
  %v1147 = vmul.f32 %v92, %v201
  %v1148 = vmul.f32 %v93, %v201
  %1149 = vadd.xlane.f32.xlu0 %v1133
  %v1150 = vpop.xlane.xlu0 %1149
  %1151 = vadd.xlane.f32.xlu0 %v1134
  %v1152 = vpop.xlane.xlu0 %1151
  %1153 = vadd.xlane.f32.xlu0 %v1135
  %v1154 = vpop.xlane.xlu0 %1153
  %1155 = vadd.xlane.f32.xlu0 %v1136
  %v1156 = vpop.xlane.xlu0 %1155
  %1157 = vadd.xlane.f32.xlu0 %v1137
  %v1158 = vpop.xlane.xlu0 %1157
  %1159 = vadd.xlane.f32.xlu0 %v1138
  %v1160 = vpop.xlane.xlu0 %1159
  %1161 = vadd.xlane.f32.xlu0 %v1139
  %v1162 = vpop.xlane.xlu0 %1161
  %1163 = vadd.xlane.f32.xlu0 %v1140
  %v1164 = vpop.xlane.xlu0 %1163
  %1165 = vadd.xlane.f32.xlu0 %v1141
  %v1166 = vpop.xlane.xlu0 %1165
  %1167 = vadd.xlane.f32.xlu0 %v1142
  %v1168 = vpop.xlane.xlu0 %1167
  %1169 = vadd.xlane.f32.xlu0 %v1143
  %v1170 = vpop.xlane.xlu0 %1169
  %1171 = vadd.xlane.f32.xlu0 %v1144
  %v1172 = vpop.xlane.xlu0 %1171
  %1173 = vadd.xlane.f32.xlu0 %v1145
  %v1174 = vpop.xlane.xlu0 %1173
  %1175 = vadd.xlane.f32.xlu0 %v1146
  %v1176 = vpop.xlane.xlu0 %1175
  %1177 = vadd.xlane.f32.xlu0 %v1147
  %v1178 = vpop.xlane.xlu0 %1177
  %1179 = vadd.xlane.f32.xlu0 %v1148
  %v1180 = vpop.xlane.xlu0 %1179
  %v1181 = vmul.f32 %v78, %v205
  %v1182 = vmul.f32 %v79, %v208
  %v1183 = vmul.f32 %v80, %v211
  %v1184 = vmul.f32 %v81, %v214
  %v1185 = vmul.f32 %v82, %v217
  %v1186 = vmul.f32 %v83, %v220
  %v1187 = vmul.f32 %v84, %v223
  %v1188 = vmul.f32 %v85, %v226
  %v1189 = vmul.f32 %v86, %v229
  %v1190 = vmul.f32 %v87, %v232
  %v1191 = vmul.f32 %v88, %v235
  %v1192 = vmul.f32 %v89, %v238
  %v1193 = vmul.f32 %v90, %v241
  %v1194 = vmul.f32 %v91, %v244
  %v1195 = vmul.f32 %v92, %v247
  %v1196 = vmul.f32 %v93, %v250
  %v1197 = vadd.f32 %v1181, %v1182
  %v1198 = vadd.f32 %v1197, %v1183
  %v1199 = vadd.f32 %v1198, %v1184
  %v1200 = vadd.f32 %v1199, %v1185
  %v1201 = vadd.f32 %v1200, %v1186
  %v1202 = vadd.f32 %v1201, %v1187
  %v1203 = vadd.f32 %v1202, %v1188
  %v1204 = vadd.f32 %v1203, %v1189
  %v1205 = vadd.f32 %v1204, %v1190
  %v1206 = vadd.f32 %v1205, %v1191
  %v1207 = vadd.f32 %v1206, %v1192
  %v1208 = vadd.f32 %v1207, %v1193
  %v1209 = vadd.f32 %v1208, %v1194
  %v1210 = vadd.f32 %v1209, %v1195
  %v1211 = vadd.f32 %v1210, %v1196
  %v1212 = vrot.slane %v1211, 4
  %v1213 = vadd.f32 %v1211, %v1212
  %v1214 = vrot.slane %v1213, 2
  %v1215 = vadd.f32 %v1213, %v1214
  %v1216 = vrot.slane %v1215, 1
  %v1217 = vadd.f32 %v1215, %v1216
  %v1218 = vmul.f32 %v1150, 0.9
  %v1219 = vmul.f32 %v1152, 0.9
  %v1220 = vmul.f32 %v1154, 0.9
  %v1221 = vmul.f32 %v1156, 0.9
  %v1222 = vmul.f32 %v1158, 0.9
  %v1223 = vmul.f32 %v1160, 0.9
  %v1224 = vmul.f32 %v1162, 0.9
  %v1225 = vmul.f32 %v1164, 0.9
  %v1226 = vmul.f32 %v1166, 0.9
  %v1227 = vmul.f32 %v1168, 0.9
  %v1228 = vmul.f32 %v1170, 0.9
  %v1229 = vmul.f32 %v1172, 0.9
  %v1230 = vmul.f32 %v1174, 0.9
  %v1231 = vmul.f32 %v1176, 0.9
  %v1232 = vmul.f32 %v1178, 0.9
  %v1233 = vmul.f32 %v1180, 0.9
  %v1234 = vceil.f32 %v1218
  %v1235 = vceil.f32 %v1219
  %v1236 = vceil.f32 %v1220
  %v1237 = vceil.f32 %v1221
  %v1238 = vceil.f32 %v1222
  %v1239 = vceil.f32 %v1223
  %v1240 = vceil.f32 %v1224
  %v1241 = vceil.f32 %v1225
  %v1242 = vceil.f32 %v1226
  %v1243 = vceil.f32 %v1227
  %v1244 = vceil.f32 %v1228
  %v1245 = vceil.f32 %v1229
  %v1246 = vceil.f32 %v1230
  %v1247 = vceil.f32 %v1231
  %v1248 = vceil.f32 %v1232
  %v1249 = vceil.f32 %v1233
  %v1250 = vmul.f32 %v1217, 0.9
  %v1251 = vceil.f32 %v1250
  %v1252 = vperm.slane %v1131, 0
  %vm1253 = vcmp.gt.f32.partialorder %v1252, %v1082
  %vm1254 = vcmp.gt.f32.partialorder %v1252, %v1084
  %vm1255 = vcmp.gt.f32.partialorder %v1252, %v1086
  %vm1256 = vcmp.gt.f32.partialorder %v1252, %v1088
  %vm1257 = vcmp.gt.f32.partialorder %v1252, %v1090
  %vm1258 = vcmp.gt.f32.partialorder %v1252, %v1092
  %vm1259 = vcmp.gt.f32.partialorder %v1252, %v1094
  %vm1260 = vcmp.gt.f32.partialorder %v1252, %v1096
  %vm1261 = vcmp.gt.f32.partialorder %v1252, %v1098
  %vm1262 = vcmp.gt.f32.partialorder %v1252, %v1100
  %vm1263 = vcmp.gt.f32.partialorder %v1252, %v1102
  %vm1264 = vcmp.gt.f32.partialorder %v1252, %v1104
  %vm1265 = vcmp.gt.f32.partialorder %v1252, %v1106
  %vm1266 = vcmp.gt.f32.partialorder %v1252, %v1108
  %vm1267 = vcmp.gt.f32.partialorder %v1252, %v1110
  %vm1268 = vcmp.gt.f32.partialorder %v1252, %v1112
  %v1269 = vmul.f32 %v178, %v201
  %v1270 = vmul.f32 %v179, %v201
  %v1271 = vmul.f32 %v180, %v201
  %v1272 = vmul.f32 %v181, %v201
  %v1273 = vmul.f32 %v182, %v201
  %v1274 = vmul.f32 %v183, %v201
  %v1275 = vmul.f32 %v184, %v201
  %v1276 = vmul.f32 %v185, %v201
  %v1277 = vmul.f32 %v186, %v201
  %v1278 = vmul.f32 %v187, %v201
  %v1279 = vmul.f32 %v188, %v201
  %v1280 = vmul.f32 %v189, %v201
  %v1281 = vmul.f32 %v190, %v201
  %v1282 = vmul.f32 %v191, %v201
  %v1283 = vmul.f32 %v192, %v201
  %v1284 = vmul.f32 %v193, %v201
  %v1285 = vsel %vm1253, %v1269, 0.0
  %v1286 = vsel %vm1254, %v1270, 0.0
  %v1287 = vsel %vm1255, %v1271, 0.0
  %v1288 = vsel %vm1256, %v1272, 0.0
  %v1289 = vsel %vm1257, %v1273, 0.0
  %v1290 = vsel %vm1258, %v1274, 0.0
  %v1291 = vsel %vm1259, %v1275, 0.0
  %v1292 = vsel %vm1260, %v1276, 0.0
  %v1293 = vsel %vm1261, %v1277, 0.0
  %v1294 = vsel %vm1262, %v1278, 0.0
  %v1295 = vsel %vm1263, %v1279, 0.0
  %v1296 = vsel %vm1264, %v1280, 0.0
  %v1297 = vsel %vm1265, %v1281, 0.0
  %v1298 = vsel %vm1266, %v1282, 0.0
  %v1299 = vsel %vm1267, %v1283, 0.0
  %v1300 = vsel %vm1268, %v1284, 0.0
  %1301 = vadd.xlane.f32.xlu0 %v1285
  %v1302 = vpop.xlane.xlu0 %1301
  %1303 = vadd.xlane.f32.xlu0 %v1286
  %v1304 = vpop.xlane.xlu0 %1303
  %1305 = vadd.xlane.f32.xlu0 %v1287
  %v1306 = vpop.xlane.xlu0 %1305
  %1307 = vadd.xlane.f32.xlu0 %v1288
  %v1308 = vpop.xlane.xlu0 %1307
  %1309 = vadd.xlane.f32.xlu0 %v1289
  %v1310 = vpop.xlane.xlu0 %1309
  %1311 = vadd.xlane.f32.xlu0 %v1290
  %v1312 = vpop.xlane.xlu0 %1311
  %1313 = vadd.xlane.f32.xlu0 %v1291
  %v1314 = vpop.xlane.xlu0 %1313
  %1315 = vadd.xlane.f32.xlu0 %v1292
  %v1316 = vpop.xlane.xlu0 %1315
  %1317 = vadd.xlane.f32.xlu0 %v1293
  %v1318 = vpop.xlane.xlu0 %1317
  %1319 = vadd.xlane.f32.xlu0 %v1294
  %v1320 = vpop.xlane.xlu0 %1319
  %1321 = vadd.xlane.f32.xlu0 %v1295
  %v1322 = vpop.xlane.xlu0 %1321
  %1323 = vadd.xlane.f32.xlu0 %v1296
  %v1324 = vpop.xlane.xlu0 %1323
  %1325 = vadd.xlane.f32.xlu0 %v1297
  %v1326 = vpop.xlane.xlu0 %1325
  %1327 = vadd.xlane.f32.xlu0 %v1298
  %v1328 = vpop.xlane.xlu0 %1327
  %1329 = vadd.xlane.f32.xlu0 %v1299
  %v1330 = vpop.xlane.xlu0 %1329
  %1331 = vadd.xlane.f32.xlu0 %v1300
  %v1332 = vpop.xlane.xlu0 %1331
  %vm1333 = vcmp.gt.f32.partialorder %v1082, %v1252
  %vm1334 = vcmp.gt.f32.partialorder %v1084, %v1252
  %vm1335 = vcmp.gt.f32.partialorder %v1086, %v1252
  %vm1336 = vcmp.gt.f32.partialorder %v1088, %v1252
  %vm1337 = vcmp.gt.f32.partialorder %v1090, %v1252
  %vm1338 = vcmp.gt.f32.partialorder %v1092, %v1252
  %vm1339 = vcmp.gt.f32.partialorder %v1094, %v1252
  %vm1340 = vcmp.gt.f32.partialorder %v1096, %v1252
  %vm1341 = vcmp.gt.f32.partialorder %v1098, %v1252
  %vm1342 = vcmp.gt.f32.partialorder %v1100, %v1252
  %vm1343 = vcmp.gt.f32.partialorder %v1102, %v1252
  %vm1344 = vcmp.gt.f32.partialorder %v1104, %v1252
  %vm1345 = vcmp.gt.f32.partialorder %v1106, %v1252
  %vm1346 = vcmp.gt.f32.partialorder %v1108, %v1252
  %vm1347 = vcmp.gt.f32.partialorder %v1110, %v1252
  %vm1348 = vcmp.gt.f32.partialorder %v1112, %v1252
  %v1349 = vmul.f32 %v178, %v205
  %v1350 = vmul.f32 %v179, %v208
  %v1351 = vmul.f32 %v180, %v211
  %v1352 = vmul.f32 %v181, %v214
  %v1353 = vmul.f32 %v182, %v217
  %v1354 = vmul.f32 %v183, %v220
  %v1355 = vmul.f32 %v184, %v223
  %v1356 = vmul.f32 %v185, %v226
  %v1357 = vmul.f32 %v186, %v229
  %v1358 = vmul.f32 %v187, %v232
  %v1359 = vmul.f32 %v188, %v235
  %v1360 = vmul.f32 %v189, %v238
  %v1361 = vmul.f32 %v190, %v241
  %v1362 = vmul.f32 %v191, %v244
  %v1363 = vmul.f32 %v192, %v247
  %v1364 = vmul.f32 %v193, %v250
  %v1365 = vsel %vm1333, %v1349, 0.0
  %v1366 = vsel %vm1334, %v1350, 0.0
  %v1367 = vsel %vm1335, %v1351, 0.0
  %v1368 = vsel %vm1336, %v1352, 0.0
  %v1369 = vsel %vm1337, %v1353, 0.0
  %v1370 = vsel %vm1338, %v1354, 0.0
  %v1371 = vsel %vm1339, %v1355, 0.0
  %v1372 = vsel %vm1340, %v1356, 0.0
  %v1373 = vsel %vm1341, %v1357, 0.0
  %v1374 = vsel %vm1342, %v1358, 0.0
  %v1375 = vsel %vm1343, %v1359, 0.0
  %v1376 = vsel %vm1344, %v1360, 0.0
  %v1377 = vsel %vm1345, %v1361, 0.0
  %v1378 = vsel %vm1346, %v1362, 0.0
  %v1379 = vsel %vm1347, %v1363, 0.0
  %v1380 = vsel %vm1348, %v1364, 0.0
  %v1381 = vadd.f32 %v1365, %v1366
  %v1382 = vadd.f32 %v1381, %v1367
  %v1383 = vadd.f32 %v1382, %v1368
  %v1384 = vadd.f32 %v1383, %v1369
  %v1385 = vadd.f32 %v1384, %v1370
  %v1386 = vadd.f32 %v1385, %v1371
  %v1387 = vadd.f32 %v1386, %v1372
  %v1388 = vadd.f32 %v1387, %v1373
  %v1389 = vadd.f32 %v1388, %v1374
  %v1390 = vadd.f32 %v1389, %v1375
  %v1391 = vadd.f32 %v1390, %v1376
  %v1392 = vadd.f32 %v1391, %v1377
  %v1393 = vadd.f32 %v1392, %v1378
  %v1394 = vadd.f32 %v1393, %v1379
  %v1395 = vadd.f32 %v1394, %v1380
  %v1396 = vrot.slane %v1395, 4
  %v1397 = vadd.f32 %v1395, %v1396
  %v1398 = vrot.slane %v1397, 2
  %v1399 = vadd.f32 %v1397, %v1398
  %v1400 = vrot.slane %v1399, 1
  %v1401 = vadd.f32 %v1399, %v1400
  %vm1402 = vcmp.lt.f32.partialorder %v1302, %v1234
  %vm1403 = vcmp.lt.f32.partialorder %v1304, %v1235
  %vm1404 = vcmp.lt.f32.partialorder %v1306, %v1236
  %vm1405 = vcmp.lt.f32.partialorder %v1308, %v1237
  %vm1406 = vcmp.lt.f32.partialorder %v1310, %v1238
  %vm1407 = vcmp.lt.f32.partialorder %v1312, %v1239
  %vm1408 = vcmp.lt.f32.partialorder %v1314, %v1240
  %vm1409 = vcmp.lt.f32.partialorder %v1316, %v1241
  %vm1410 = vcmp.lt.f32.partialorder %v1318, %v1242
  %vm1411 = vcmp.lt.f32.partialorder %v1320, %v1243
  %vm1412 = vcmp.lt.f32.partialorder %v1322, %v1244
  %vm1413 = vcmp.lt.f32.partialorder %v1324, %v1245
  %vm1414 = vcmp.lt.f32.partialorder %v1326, %v1246
  %vm1415 = vcmp.lt.f32.partialorder %v1328, %v1247
  %vm1416 = vcmp.lt.f32.partialorder %v1330, %v1248
  %vm1417 = vcmp.lt.f32.partialorder %v1332, %v1249
  %vm1418 = vcmp.gt.f32.partialorder %v205, 0.5
  %vm1419 = vcmp.gt.f32.partialorder %v208, 0.5
  %vm1420 = vcmp.gt.f32.partialorder %v211, 0.5
  %vm1421 = vcmp.gt.f32.partialorder %v214, 0.5
  %vm1422 = vcmp.gt.f32.partialorder %v217, 0.5
  %vm1423 = vcmp.gt.f32.partialorder %v220, 0.5
  %vm1424 = vcmp.gt.f32.partialorder %v223, 0.5
  %vm1425 = vcmp.gt.f32.partialorder %v226, 0.5
  %vm1426 = vcmp.gt.f32.partialorder %v229, 0.5
  %vm1427 = vcmp.gt.f32.partialorder %v232, 0.5
  %vm1428 = vcmp.gt.f32.partialorder %v235, 0.5
  %vm1429 = vcmp.gt.f32.partialorder %v238, 0.5
  %vm1430 = vcmp.gt.f32.partialorder %v241, 0.5
  %vm1431 = vcmp.gt.f32.partialorder %v244, 0.5
  %vm1432 = vcmp.gt.f32.partialorder %v247, 0.5
  %vm1433 = vcmp.gt.f32.partialorder %v250, 0.5
  %vm1434 = vmand %vm1402, %vm1418
  %vm1435 = vmand %vm1403, %vm1419
  %vm1436 = vmand %vm1404, %vm1420
  %vm1437 = vmand %vm1405, %vm1421
  %vm1438 = vmand %vm1406, %vm1422
  %vm1439 = vmand %vm1407, %vm1423
  %vm1440 = vmand %vm1408, %vm1424
  %vm1441 = vmand %vm1409, %vm1425
  %vm1442 = vmand %vm1410, %vm1426
  %vm1443 = vmand %vm1411, %vm1427
  %vm1444 = vmand %vm1412, %vm1428
  %vm1445 = vmand %vm1413, %vm1429
  %vm1446 = vmand %vm1414, %vm1430
  %vm1447 = vmand %vm1415, %vm1431
  %vm1448 = vmand %vm1416, %vm1432
  %vm1449 = vmand %vm1417, %vm1433
  %v1450 = vsel %vm1434, 1.0, 0.0
  %v1451 = vsel %vm1435, 1.0, 0.0
  %v1452 = vsel %vm1436, 1.0, 0.0
  %v1453 = vsel %vm1437, 1.0, 0.0
  %v1454 = vsel %vm1438, 1.0, 0.0
  %v1455 = vsel %vm1439, 1.0, 0.0
  %v1456 = vsel %vm1440, 1.0, 0.0
  %v1457 = vsel %vm1441, 1.0, 0.0
  %v1458 = vsel %vm1442, 1.0, 0.0
  %v1459 = vsel %vm1443, 1.0, 0.0
  %v1460 = vsel %vm1444, 1.0, 0.0
  %v1461 = vsel %vm1445, 1.0, 0.0
  %v1462 = vsel %vm1446, 1.0, 0.0
  %v1463 = vsel %vm1447, 1.0, 0.0
  %v1464 = vsel %vm1448, 1.0, 0.0
  %v1465 = vsel %vm1449, 1.0, 0.0
  %vm1466 = vcmp.lt.f32.partialorder %v1401, %v1251
  %vm1467 = vcmp.gt.f32.partialorder %v201, 0.5
  %vm1468 = vmand %vm1466, %vm1467
  %v1469 = vsel %vm1468, 1.0, 0.0
  %v1470 = vtanh.pop %v1082
  %v1471 = vtanh.pop %v1084
  %v1472 = vtanh.pop %v1086
  %v1473 = vtanh.pop %v1088
  %v1474 = vtanh.pop %v1090
  %v1475 = vtanh.pop %v1092
  %v1476 = vtanh.pop %v1094
  %v1477 = vtanh.pop %v1096
  %v1478 = vtanh.pop %v1098
  %v1479 = vtanh.pop %v1100
  %v1480 = vtanh.pop %v1102
  %v1481 = vtanh.pop %v1104
  %v1482 = vtanh.pop %v1106
  %v1483 = vtanh.pop %v1108
  %v1484 = vtanh.pop %v1110
  %v1485 = vtanh.pop %v1112
  %v1486 = vmul.f32 %v1470, %v1450
  %v1487 = vmul.f32 %v1471, %v1451
  %v1488 = vmul.f32 %v1472, %v1452
  %v1489 = vmul.f32 %v1473, %v1453
  %v1490 = vmul.f32 %v1474, %v1454
  %v1491 = vmul.f32 %v1475, %v1455
  %v1492 = vmul.f32 %v1476, %v1456
  %v1493 = vmul.f32 %v1477, %v1457
  %v1494 = vmul.f32 %v1478, %v1458
  %v1495 = vmul.f32 %v1479, %v1459
  %v1496 = vmul.f32 %v1480, %v1460
  %v1497 = vmul.f32 %v1481, %v1461
  %v1498 = vmul.f32 %v1482, %v1462
  %v1499 = vmul.f32 %v1483, %v1463
  %v1500 = vmul.f32 %v1484, %v1464
  %v1501 = vmul.f32 %v1485, %v1465
  %v1502 = vmul.f32 %v1045, %v1486
  %v1503 = vmul.f32 %v1046, %v1487
  %v1504 = vmul.f32 %v1047, %v1488
  %v1505 = vmul.f32 %v1048, %v1489
  %v1506 = vmul.f32 %v1049, %v1490
  %v1507 = vmul.f32 %v1050, %v1491
  %v1508 = vmul.f32 %v1051, %v1492
  %v1509 = vmul.f32 %v1052, %v1493
  %v1510 = vmul.f32 %v1053, %v1494
  %v1511 = vmul.f32 %v1054, %v1495
  %v1512 = vmul.f32 %v1055, %v1496
  %v1513 = vmul.f32 %v1056, %v1497
  %v1514 = vmul.f32 %v1057, %v1498
  %v1515 = vmul.f32 %v1058, %v1499
  %v1516 = vmul.f32 %v1059, %v1500
  %v1517 = vmul.f32 %v1060, %v1501
  %v1518 = vpack.c.bf16 %v1502, %v1502
  %v1519 = vpack.c.bf16 %v1503, %v1503
  %v1520 = vpack.c.bf16 %v1504, %v1504
  %v1521 = vpack.c.bf16 %v1505, %v1505
  %v1522 = vpack.c.bf16 %v1506, %v1506
  %v1523 = vpack.c.bf16 %v1507, %v1507
  %v1524 = vpack.c.bf16 %v1508, %v1508
  %v1525 = vpack.c.bf16 %v1509, %v1509
  %v1526 = vpack.c.bf16 %v1510, %v1510
  %v1527 = vpack.c.bf16 %v1511, %v1511
  %v1528 = vpack.c.bf16 %v1512, %v1512
  %v1529 = vpack.c.bf16 %v1513, %v1513
  %v1530 = vpack.c.bf16 %v1514, %v1514
  %v1531 = vpack.c.bf16 %v1515, %v1515
  %v1532 = vpack.c.bf16 %v1516, %v1516
  %v1533 = vpack.c.bf16 %v1517, %v1517
  %v1534 = vmul.f32 %v94, %v1469
  %v1535 = vsel %vm194, %v1534, 0.0
  %1536 = vadd.xlane.f32.xlu0 %v1535
  %v1537 = vpop.xlane.xlu0 %1536
  %v1538 = vmax.f32 %v1537, 1.0
  %v1539 = vpack.c.bf16 %v1534, %v1534
  %v1556 = vunpack.c.l.b16 %v1518
  %v1557 = vunpack.c.l.b16 %v1519
  %v1558 = vunpack.c.l.b16 %v1520
  %v1559 = vunpack.c.l.b16 %v1521
  %v1560 = vunpack.c.l.b16 %v1522
  %v1561 = vunpack.c.l.b16 %v1523
  %v1562 = vunpack.c.l.b16 %v1524
  %v1563 = vunpack.c.l.b16 %v1525
  %v1564 = vunpack.c.l.b16 %v1526
  %v1565 = vunpack.c.l.b16 %v1527
  %v1566 = vunpack.c.l.b16 %v1528
  %v1567 = vunpack.c.l.b16 %v1529
  %v1568 = vunpack.c.l.b16 %v1530
  %v1569 = vunpack.c.l.b16 %v1531
  %v1570 = vunpack.c.l.b16 %v1532
  %v1571 = vunpack.c.l.b16 %v1533
  %v1572 = vpack.c.b16 %v1557, %v1556
  %v1573 = vpack.c.b16 %v1559, %v1558
  %v1574 = vpack.c.b16 %v1561, %v1560
  %v1575 = vpack.c.b16 %v1563, %v1562
  %v1576 = vpack.c.b16 %v1565, %v1564
  %v1577 = vpack.c.b16 %v1567, %v1566
  %v1578 = vpack.c.b16 %v1569, %v1568
  %v1579 = vpack.c.b16 %v1571, %v1570
  %1588 = vmatpush.bf16.msra.mxu0 %v1579
  %1589 = vmatpush.bf16.msra.mxu0 %v1578
  %1590 = vmatpush.bf16.msra.mxu0 %v1577
  %1591 = vmatpush.bf16.msra.mxu0 %v1576
  %1592 = vmatpush.bf16.msra.mxu0 %v1575
  %1593 = vmatpush.bf16.msra.mxu0 %v1574
  %1594 = vmatpush.bf16.msra.mxu0 %v1573
  %1595 = vmatpush.bf16.msra.mxu0 %v1572
  %1596 = vmatmul.bf16.gmra.mxu0 %v1539
  %v1597 = vpop.f32.mrf.mxu0
  %v1598 = vadd.f32 0.0, %v1597
  %v1599 = vpop.f32.mrf.mxu0
  %1600 = vdwg.mxu0
  %v1601 = vrcp.pop %v1538
  %v1602 = vmul.f32 %v1538, %v1601
  %v1603 = vsub.f32 1.0, %v1602
  %v1604 = vmul.f32 %v1601, %v1603
  %v1605 = vadd.f32 %v1601, %v1604
  %vm1606 = vweird.f32 %v1538
  %vm1607 = vweird.f32 %v1601
  %vm1608 = vmor %vm1606, %vm1607
  %v1609 = vsel %vm1608, %v1601, %v1605
  %v1610 = vand.u32 2147483647, %v1538
  %vm1611 = vcmp.eq.f32.partialorder %v1610, 8.507059e+37
  %v1612 = vand.u32 %v1538, 2147483648
  %v1613 = vor.u32 1.1754944e-38, %v1612
  %v1614 = vsel %vm1611, %v1613, %v1609
  %v1615 = vmul.f32 %v1598, %v1614
  %v1616 = vmul.f32 %v95, %v1450
  %v1617 = vmul.f32 %v96, %v1451
  %v1618 = vmul.f32 %v97, %v1452
  %v1619 = vmul.f32 %v98, %v1453
  %v1620 = vmul.f32 %v99, %v1454
  %v1621 = vmul.f32 %v100, %v1455
  %v1622 = vmul.f32 %v101, %v1456
  %v1623 = vmul.f32 %v102, %v1457
  %v1624 = vmul.f32 %v103, %v1458
  %v1625 = vmul.f32 %v104, %v1459
  %v1626 = vmul.f32 %v105, %v1460
  %v1627 = vmul.f32 %v106, %v1461
  %v1628 = vmul.f32 %v107, %v1462
  %v1629 = vmul.f32 %v108, %v1463
  %v1630 = vmul.f32 %v109, %v1464
  %v1631 = vmul.f32 %v110, %v1465
  %vm1632 = vcmp.gt.f32.partialorder %v1616, 0.5
  %vm1633 = vcmp.gt.f32.partialorder %v1617, 0.5
  %vm1634 = vcmp.gt.f32.partialorder %v1618, 0.5
  %vm1635 = vcmp.gt.f32.partialorder %v1619, 0.5
  %vm1636 = vcmp.gt.f32.partialorder %v1620, 0.5
  %vm1637 = vcmp.gt.f32.partialorder %v1621, 0.5
  %vm1638 = vcmp.gt.f32.partialorder %v1622, 0.5
  %vm1639 = vcmp.gt.f32.partialorder %v1623, 0.5
  %vm1640 = vcmp.gt.f32.partialorder %v1624, 0.5
  %vm1641 = vcmp.gt.f32.partialorder %v1625, 0.5
  %vm1642 = vcmp.gt.f32.partialorder %v1626, 0.5
  %vm1643 = vcmp.gt.f32.partialorder %v1627, 0.5
  %vm1644 = vcmp.gt.f32.partialorder %v1628, 0.5
  %vm1645 = vcmp.gt.f32.partialorder %v1629, 0.5
  %vm1646 = vcmp.gt.f32.partialorder %v1630, 0.5
  %vm1647 = vcmp.gt.f32.partialorder %v1631, 0.5
  %v1648 = vsel %vm1632, 1, 0
  %v1649 = vsel %vm1633, 1, 0
  %v1650 = vsel %vm1634, 1, 0
  %v1651 = vsel %vm1635, 1, 0
  %v1652 = vsel %vm1636, 1, 0
  %v1653 = vsel %vm1637, 1, 0
  %v1654 = vsel %vm1638, 1, 0
  %v1655 = vsel %vm1639, 1, 0
  %v1656 = vsel %vm1640, 1, 0
  %v1657 = vsel %vm1641, 1, 0
  %v1658 = vsel %vm1642, 1, 0
  %v1659 = vsel %vm1643, 1, 0
  %v1660 = vsel %vm1644, 1, 0
  %v1661 = vsel %vm1645, 1, 0
  %v1662 = vsel %vm1646, 1, 0
  %v1663 = vsel %vm1647, 1, 0
  %1664 = vset.pattern.permute.xlu0 0
  %1665 = vperm.xlu0 %1664, %v1648
  %v1666 = vpop.permute.xlu0 %1665
  %1667 = vset.pattern.permute.xlu0 0
  %1668 = vperm.xlu0 %1667, %v1649
  %v1669 = vpop.permute.xlu0 %1668
  %1670 = vset.pattern.permute.xlu0 0
  %1671 = vperm.xlu0 %1670, %v1650
  %v1672 = vpop.permute.xlu0 %1671
  %1673 = vset.pattern.permute.xlu0 0
  %1674 = vperm.xlu0 %1673, %v1651
  %v1675 = vpop.permute.xlu0 %1674
  %1676 = vset.pattern.permute.xlu0 0
  %1677 = vperm.xlu0 %1676, %v1652
  %v1678 = vpop.permute.xlu0 %1677
  %1679 = vset.pattern.permute.xlu0 0
  %1680 = vperm.xlu0 %1679, %v1653
  %v1681 = vpop.permute.xlu0 %1680
  %1682 = vset.pattern.permute.xlu0 0
  %1683 = vperm.xlu0 %1682, %v1654
  %v1684 = vpop.permute.xlu0 %1683
  %1685 = vset.pattern.permute.xlu0 0
  %1686 = vperm.xlu0 %1685, %v1655
  %v1687 = vpop.permute.xlu0 %1686
  %1688 = vset.pattern.permute.xlu0 0
  %1689 = vperm.xlu0 %1688, %v1656
  %v1690 = vpop.permute.xlu0 %1689
  %1691 = vset.pattern.permute.xlu0 0
  %1692 = vperm.xlu0 %1691, %v1657
  %v1693 = vpop.permute.xlu0 %1692
  %1694 = vset.pattern.permute.xlu0 0
  %1695 = vperm.xlu0 %1694, %v1658
  %v1696 = vpop.permute.xlu0 %1695
  %1697 = vset.pattern.permute.xlu0 0
  %1698 = vperm.xlu0 %1697, %v1659
  %v1699 = vpop.permute.xlu0 %1698
  %1700 = vset.pattern.permute.xlu0 0
  %1701 = vperm.xlu0 %1700, %v1660
  %v1702 = vpop.permute.xlu0 %1701
  %1703 = vset.pattern.permute.xlu0 0
  %1704 = vperm.xlu0 %1703, %v1661
  %v1705 = vpop.permute.xlu0 %1704
  %1706 = vset.pattern.permute.xlu0 0
  %1707 = vperm.xlu0 %1706, %v1662
  %v1708 = vpop.permute.xlu0 %1707
  %1709 = vset.pattern.permute.xlu0 0
  %1710 = vperm.xlu0 %1709, %v1663
  %v1711 = vpop.permute.xlu0 %1710
  %vm1712 = vcmp.eq.s32.totalorder %v1666, 1
  %vm1713 = vcmp.eq.s32.totalorder %v1669, 1
  %vm1714 = vcmp.eq.s32.totalorder %v1672, 1
  %vm1715 = vcmp.eq.s32.totalorder %v1675, 1
  %vm1716 = vcmp.eq.s32.totalorder %v1678, 1
  %vm1717 = vcmp.eq.s32.totalorder %v1681, 1
  %vm1718 = vcmp.eq.s32.totalorder %v1684, 1
  %vm1719 = vcmp.eq.s32.totalorder %v1687, 1
  %vm1720 = vcmp.eq.s32.totalorder %v1690, 1
  %vm1721 = vcmp.eq.s32.totalorder %v1693, 1
  %vm1722 = vcmp.eq.s32.totalorder %v1696, 1
  %vm1723 = vcmp.eq.s32.totalorder %v1699, 1
  %vm1724 = vcmp.eq.s32.totalorder %v1702, 1
  %vm1725 = vcmp.eq.s32.totalorder %v1705, 1
  %vm1726 = vcmp.eq.s32.totalorder %v1708, 1
  %vm1727 = vcmp.eq.s32.totalorder %v1711, 1
  %v1728 = vsel %vm1712, %v1502, -1e+30
  %v1729 = vsel %vm1713, %v1503, -1e+30
  %v1730 = vsel %vm1714, %v1504, -1e+30
  %v1731 = vsel %vm1715, %v1505, -1e+30
  %v1732 = vsel %vm1716, %v1506, -1e+30
  %v1733 = vsel %vm1717, %v1507, -1e+30
  %v1734 = vsel %vm1718, %v1508, -1e+30
  %v1735 = vsel %vm1719, %v1509, -1e+30
  %v1736 = vsel %vm1720, %v1510, -1e+30
  %v1737 = vsel %vm1721, %v1511, -1e+30
  %v1738 = vsel %vm1722, %v1512, -1e+30
  %v1739 = vsel %vm1723, %v1513, -1e+30
  %v1740 = vsel %vm1724, %v1514, -1e+30
  %v1741 = vsel %vm1725, %v1515, -1e+30
  %v1742 = vsel %vm1726, %v1516, -1e+30
  %v1743 = vsel %vm1727, %v1517, -1e+30
  %v1744 = vmax.f32 %v1728, %v1732
  %v1745 = vmax.f32 %v1729, %v1733
  %v1746 = vmax.f32 %v1730, %v1734
  %v1747 = vmax.f32 %v1731, %v1735
  %v1748 = vmax.f32 %v1744, %v1736
  %v1749 = vmax.f32 %v1745, %v1737
  %v1750 = vmax.f32 %v1746, %v1738
  %v1751 = vmax.f32 %v1747, %v1739
  %v1752 = vmax.f32 %v1748, %v1740
  %v1753 = vmax.f32 %v1749, %v1741
  %v1754 = vmax.f32 %v1750, %v1742
  %v1755 = vmax.f32 %v1751, %v1743
  %v1756 = vmax.f32 %v1752, %v1753
  %v1757 = vmax.f32 %v1754, %v1755
  %v1758 = vmax.f32 %v1756, %v1757
  %v1759 = vrot.slane %v1758, 4
  %v1760 = vmax.f32 %v1758, %v1759
  %v1761 = vrot.slane %v1760, 2
  %v1762 = vmax.f32 %v1760, %v1761
  %v1763 = vrot.slane %v1762, 1
  %v1764 = vmax.f32 %v1762, %v1763
  %1765 = vset.pattern.permute.xlu0 1
  %1766 = vperm.xlu0 %1765, %v1648
  %v1767 = vpop.permute.xlu0 %1766
  %1768 = vset.pattern.permute.xlu0 1
  %1769 = vperm.xlu0 %1768, %v1649
  %v1770 = vpop.permute.xlu0 %1769
  %1771 = vset.pattern.permute.xlu0 1
  %1772 = vperm.xlu0 %1771, %v1650
  %v1773 = vpop.permute.xlu0 %1772
  %1774 = vset.pattern.permute.xlu0 1
  %1775 = vperm.xlu0 %1774, %v1651
  %v1776 = vpop.permute.xlu0 %1775
  %1777 = vset.pattern.permute.xlu0 1
  %1778 = vperm.xlu0 %1777, %v1652
  %v1779 = vpop.permute.xlu0 %1778
  %1780 = vset.pattern.permute.xlu0 1
  %1781 = vperm.xlu0 %1780, %v1653
  %v1782 = vpop.permute.xlu0 %1781
  %1783 = vset.pattern.permute.xlu0 1
  %1784 = vperm.xlu0 %1783, %v1654
  %v1785 = vpop.permute.xlu0 %1784
  %1786 = vset.pattern.permute.xlu0 1
  %1787 = vperm.xlu0 %1786, %v1655
  %v1788 = vpop.permute.xlu0 %1787
  %1789 = vset.pattern.permute.xlu0 1
  %1790 = vperm.xlu0 %1789, %v1656
  %v1791 = vpop.permute.xlu0 %1790
  %1792 = vset.pattern.permute.xlu0 1
  %1793 = vperm.xlu0 %1792, %v1657
  %v1794 = vpop.permute.xlu0 %1793
  %1795 = vset.pattern.permute.xlu0 1
  %1796 = vperm.xlu0 %1795, %v1658
  %v1797 = vpop.permute.xlu0 %1796
  %1798 = vset.pattern.permute.xlu0 1
  %1799 = vperm.xlu0 %1798, %v1659
  %v1800 = vpop.permute.xlu0 %1799
  %1801 = vset.pattern.permute.xlu0 1
  %1802 = vperm.xlu0 %1801, %v1660
  %v1803 = vpop.permute.xlu0 %1802
  %1804 = vset.pattern.permute.xlu0 1
  %1805 = vperm.xlu0 %1804, %v1661
  %v1806 = vpop.permute.xlu0 %1805
  %1807 = vset.pattern.permute.xlu0 1
  %1808 = vperm.xlu0 %1807, %v1662
  %v1809 = vpop.permute.xlu0 %1808
  %1810 = vset.pattern.permute.xlu0 1
  %1811 = vperm.xlu0 %1810, %v1663
  %v1812 = vpop.permute.xlu0 %1811
  %vm1813 = vcmp.eq.s32.totalorder %v1767, 1
  %vm1814 = vcmp.eq.s32.totalorder %v1770, 1
  %vm1815 = vcmp.eq.s32.totalorder %v1773, 1
  %vm1816 = vcmp.eq.s32.totalorder %v1776, 1
  %vm1817 = vcmp.eq.s32.totalorder %v1779, 1
  %vm1818 = vcmp.eq.s32.totalorder %v1782, 1
  %vm1819 = vcmp.eq.s32.totalorder %v1785, 1
  %vm1820 = vcmp.eq.s32.totalorder %v1788, 1
  %vm1821 = vcmp.eq.s32.totalorder %v1791, 1
  %vm1822 = vcmp.eq.s32.totalorder %v1794, 1
  %vm1823 = vcmp.eq.s32.totalorder %v1797, 1
  %vm1824 = vcmp.eq.s32.totalorder %v1800, 1
  %vm1825 = vcmp.eq.s32.totalorder %v1803, 1
  %vm1826 = vcmp.eq.s32.totalorder %v1806, 1
  %vm1827 = vcmp.eq.s32.totalorder %v1809, 1
  %vm1828 = vcmp.eq.s32.totalorder %v1812, 1
  %v1829 = vsel %vm1813, %v1502, -1e+30
  %v1830 = vsel %vm1814, %v1503, -1e+30
  %v1831 = vsel %vm1815, %v1504, -1e+30
  %v1832 = vsel %vm1816, %v1505, -1e+30
  %v1833 = vsel %vm1817, %v1506, -1e+30
  %v1834 = vsel %vm1818, %v1507, -1e+30
  %v1835 = vsel %vm1819, %v1508, -1e+30
  %v1836 = vsel %vm1820, %v1509, -1e+30
  %v1837 = vsel %vm1821, %v1510, -1e+30
  %v1838 = vsel %vm1822, %v1511, -1e+30
  %v1839 = vsel %vm1823, %v1512, -1e+30
  %v1840 = vsel %vm1824, %v1513, -1e+30
  %v1841 = vsel %vm1825, %v1514, -1e+30
  %v1842 = vsel %vm1826, %v1515, -1e+30
  %v1843 = vsel %vm1827, %v1516, -1e+30
  %v1844 = vsel %vm1828, %v1517, -1e+30
  %v1845 = vmax.f32 %v1829, %v1833
  %v1846 = vmax.f32 %v1830, %v1834
  %v1847 = vmax.f32 %v1831, %v1835
  %v1848 = vmax.f32 %v1832, %v1836
  %v1849 = vmax.f32 %v1845, %v1837
  %v1850 = vmax.f32 %v1846, %v1838
  %v1851 = vmax.f32 %v1847, %v1839
  %v1852 = vmax.f32 %v1848, %v1840
  %v1853 = vmax.f32 %v1849, %v1841
  %v1854 = vmax.f32 %v1850, %v1842
  %v1855 = vmax.f32 %v1851, %v1843
  %v1856 = vmax.f32 %v1852, %v1844
  %v1857 = vmax.f32 %v1853, %v1854
  %v1858 = vmax.f32 %v1855, %v1856
  %v1859 = vmax.f32 %v1857, %v1858
  %v1860 = vrot.slane %v1859, 4
  %v1861 = vmax.f32 %v1859, %v1860
  %v1862 = vrot.slane %v1861, 2
  %v1863 = vmax.f32 %v1861, %v1862
  %v1864 = vrot.slane %v1863, 1
  %v1865 = vmax.f32 %v1863, %v1864
  %vm1866 = vcmask 1040384
  %v1867 = vsel %vm1866, %v1764, %v1865
  %v1868 = vld [vmem:[%s8] sm:$0xf]
  %v1869 = vld [vmem:[%s8 + $0x4] sm:$0xf]
  %v1870 = vld [vmem:[%s8 + $0x8] sm:$0xf]
  %v1871 = vld [vmem:[%s8 + $0xc] sm:$0xf]
  %v1872 = vld [vmem:[%s8 + $0x10] sm:$0xf]
  %v1873 = vld [vmem:[%s8 + $0x14] sm:$0xf]
  %v1874 = vld [vmem:[%s8 + $0x18] sm:$0xf]
  %v1875 = vld [vmem:[%s8 + $0x1c] sm:$0xf]
  %v1876 = vld [vmem:[%s8 + $0x20] sm:$0xf]
  %v1877 = vld [vmem:[%s8 + $0x24] sm:$0xf]
  %v1878 = vld [vmem:[%s8 + $0x28] sm:$0xf]
  %v1879 = vld [vmem:[%s8 + $0x2c] sm:$0xf]
  %v1880 = vld [vmem:[%s8 + $0x30] sm:$0xf]
  %v1881 = vld [vmem:[%s8 + $0x34] sm:$0xf]
  %v1882 = vld [vmem:[%s8 + $0x38] sm:$0xf]
  %v1883 = vld [vmem:[%s8 + $0x3c] sm:$0xf]
  %v1884 = vld [vmem:[%s8 + $0x40] sm:$0xf]
  %v1885 = vld [vmem:[%s8 + $0x44] sm:$0xf]
  %v1886 = vld [vmem:[%s8 + $0x48] sm:$0xf]
  %v1887 = vld [vmem:[%s8 + $0x4c] sm:$0xf]
  %v1888 = vld [vmem:[%s8 + $0x50] sm:$0xf]
  %v1889 = vld [vmem:[%s8 + $0x54] sm:$0xf]
  %v1890 = vld [vmem:[%s8 + $0x58] sm:$0xf]
  %v1891 = vld [vmem:[%s8 + $0x5c] sm:$0xf]
  %v1892 = vld [vmem:[%s8 + $0x60] sm:$0xf]
  %v1893 = vld [vmem:[%s8 + $0x64] sm:$0xf]
  %v1894 = vld [vmem:[%s8 + $0x68] sm:$0xf]
  %v1895 = vld [vmem:[%s8 + $0x6c] sm:$0xf]
  %v1896 = vld [vmem:[%s8 + $0x70] sm:$0xf]
  %v1897 = vld [vmem:[%s8 + $0x74] sm:$0xf]
  %v1898 = vld [vmem:[%s8 + $0x78] sm:$0xf]
  %v1899 = vld [vmem:[%s8 + $0x7c] sm:$0xf]
  %v1900 = vld [vmem:[%s9] sm:$0x1]
  %1901 = vmatpush.bf16.msra.mxu0 %v1579
  %1902 = vmatpush.bf16.msra.mxu0 %v1578
  %1903 = vmatpush.bf16.msra.mxu0 %v1577
  %1904 = vmatpush.bf16.msra.mxu0 %v1576
  %1905 = vmatpush.bf16.msra.mxu0 %v1575
  %1906 = vmatpush.bf16.msra.mxu0 %v1574
  %1907 = vmatpush.bf16.msra.mxu0 %v1573
  %1908 = vmatpush.bf16.msra.mxu0 %v1572
  %1909 = vmatmul.bf16.gmra.mxu0 %v364
  %v1910 = vpop.f32.mrf.mxu0
  %v1911 = vadd.f32 0.0, %v1910
  %v1912 = vpop.f32.mrf.mxu0
  %v1913 = vadd.f32 0.0, %v1912
  %1914 = vmatmul.bf16.gmra.mxu0 %v365
  %v1915 = vpop.f32.mrf.mxu0
  %v1916 = vadd.f32 0.0, %v1915
  %v1917 = vpop.f32.mrf.mxu0
  %v1918 = vadd.f32 0.0, %v1917
  %1919 = vmatmul.bf16.gmra.mxu0 %v366
  %v1920 = vpop.f32.mrf.mxu0
  %v1921 = vadd.f32 0.0, %v1920
  %v1922 = vpop.f32.mrf.mxu0
  %v1923 = vadd.f32 0.0, %v1922
  %1924 = vmatmul.bf16.gmra.mxu0 %v367
  %v1925 = vpop.f32.mrf.mxu0
  %v1926 = vadd.f32 0.0, %v1925
  %v1927 = vpop.f32.mrf.mxu0
  %v1928 = vadd.f32 0.0, %v1927
  %1929 = vmatmul.bf16.gmra.mxu0 %v368
  %v1930 = vpop.f32.mrf.mxu0
  %v1931 = vadd.f32 0.0, %v1930
  %v1932 = vpop.f32.mrf.mxu0
  %v1933 = vadd.f32 0.0, %v1932
  %1934 = vmatmul.bf16.gmra.mxu0 %v369
  %v1935 = vpop.f32.mrf.mxu0
  %v1936 = vadd.f32 0.0, %v1935
  %v1937 = vpop.f32.mrf.mxu0
  %v1938 = vadd.f32 0.0, %v1937
  %1939 = vmatmul.bf16.gmra.mxu0 %v370
  %v1940 = vpop.f32.mrf.mxu0
  %v1941 = vadd.f32 0.0, %v1940
  %v1942 = vpop.f32.mrf.mxu0
  %v1943 = vadd.f32 0.0, %v1942
  %1944 = vmatmul.bf16.gmra.mxu0 %v371
  %v1945 = vpop.f32.mrf.mxu0
  %v1946 = vadd.f32 0.0, %v1945
  %v1947 = vpop.f32.mrf.mxu0
  %v1948 = vadd.f32 0.0, %v1947
  %1949 = vdwg.mxu0
  %v1950 = vpack.c.bf16 %v1911, %v1911
  %v1951 = vpack.c.bf16 %v1913, %v1913
  %v1952 = vpack.c.bf16 %v1916, %v1916
  %v1953 = vpack.c.bf16 %v1918, %v1918
  %v1954 = vpack.c.bf16 %v1921, %v1921
  %v1955 = vpack.c.bf16 %v1923, %v1923
  %v1956 = vpack.c.bf16 %v1926, %v1926
  %v1957 = vpack.c.bf16 %v1928, %v1928
  %v1958 = vpack.c.bf16 %v1931, %v1931
  %v1959 = vpack.c.bf16 %v1933, %v1933
  %v1960 = vpack.c.bf16 %v1936, %v1936
  %v1961 = vpack.c.bf16 %v1938, %v1938
  %v1962 = vpack.c.bf16 %v1941, %v1941
  %v1963 = vpack.c.bf16 %v1943, %v1943
  %v1964 = vpack.c.bf16 %v1946, %v1946
  %v1965 = vpack.c.bf16 %v1948, %v1948
  %v1982 = vunpack.c.l.b16 %v1950
  %v1983 = vunpack.c.l.b16 %v1951
  %v1984 = vunpack.c.l.b16 %v1952
  %v1985 = vunpack.c.l.b16 %v1953
  %v1986 = vunpack.c.l.b16 %v1954
  %v1987 = vunpack.c.l.b16 %v1955
  %v1988 = vunpack.c.l.b16 %v1956
  %v1989 = vunpack.c.l.b16 %v1957
  %v1990 = vunpack.c.l.b16 %v1958
  %v1991 = vunpack.c.l.b16 %v1959
  %v1992 = vunpack.c.l.b16 %v1960
  %v1993 = vunpack.c.l.b16 %v1961
  %v1994 = vunpack.c.l.b16 %v1962
  %v1995 = vunpack.c.l.b16 %v1963
  %v1996 = vunpack.c.l.b16 %v1964
  %v1997 = vunpack.c.l.b16 %v1965
  %v1998 = vpack.c.b16 %v1983, %v1982
  %v1999 = vpack.c.b16 %v1985, %v1984
  %v2000 = vpack.c.b16 %v1987, %v1986
  %v2001 = vpack.c.b16 %v1989, %v1988
  %v2002 = vpack.c.b16 %v1991, %v1990
  %v2003 = vpack.c.b16 %v1993, %v1992
  %v2004 = vpack.c.b16 %v1995, %v1994
  %v2005 = vpack.c.b16 %v1997, %v1996
  %v2015 = vperm.slane %v1900, 0
  %v2049 = vunpack.c.l.b16 %v1868
  %v2050 = vunpack.c.l.b16 %v1869
  %v2051 = vunpack.c.l.b16 %v1870
  %v2052 = vunpack.c.l.b16 %v1871
  %v2053 = vunpack.c.l.b16 %v1872
  %v2054 = vunpack.c.l.b16 %v1873
  %v2055 = vunpack.c.l.b16 %v1874
  %v2056 = vunpack.c.l.b16 %v1875
  %v2057 = vunpack.c.l.b16 %v1876
  %v2058 = vunpack.c.l.b16 %v1877
  %v2059 = vunpack.c.l.b16 %v1878
  %v2060 = vunpack.c.l.b16 %v1879
  %v2061 = vunpack.c.l.b16 %v1880
  %v2062 = vunpack.c.l.b16 %v1881
  %v2063 = vunpack.c.l.b16 %v1882
  %v2064 = vunpack.c.l.b16 %v1883
  %v2065 = vunpack.c.l.b16 %v1884
  %v2066 = vunpack.c.l.b16 %v1885
  %v2067 = vunpack.c.l.b16 %v1886
  %v2068 = vunpack.c.l.b16 %v1887
  %v2069 = vunpack.c.l.b16 %v1888
  %v2070 = vunpack.c.l.b16 %v1889
  %v2071 = vunpack.c.l.b16 %v1890
  %v2072 = vunpack.c.l.b16 %v1891
  %v2073 = vunpack.c.l.b16 %v1892
  %v2074 = vunpack.c.l.b16 %v1893
  %v2075 = vunpack.c.l.b16 %v1894
  %v2076 = vunpack.c.l.b16 %v1895
  %v2077 = vunpack.c.l.b16 %v1896
  %v2078 = vunpack.c.l.b16 %v1897
  %v2079 = vunpack.c.l.b16 %v1898
  %v2080 = vunpack.c.l.b16 %v1899
  %v2081 = vpack.c.b16 %v2050, %v2049
  %v2082 = vpack.c.b16 %v2052, %v2051
  %v2083 = vpack.c.b16 %v2054, %v2053
  %v2084 = vpack.c.b16 %v2056, %v2055
  %v2085 = vpack.c.b16 %v2058, %v2057
  %v2086 = vpack.c.b16 %v2060, %v2059
  %v2087 = vpack.c.b16 %v2062, %v2061
  %v2088 = vpack.c.b16 %v2064, %v2063
  %v2089 = vpack.c.b16 %v2066, %v2065
  %v2090 = vpack.c.b16 %v2068, %v2067
  %v2091 = vpack.c.b16 %v2070, %v2069
  %v2092 = vpack.c.b16 %v2072, %v2071
  %v2093 = vpack.c.b16 %v2074, %v2073
  %v2094 = vpack.c.b16 %v2076, %v2075
  %v2095 = vpack.c.b16 %v2078, %v2077
  %v2096 = vpack.c.b16 %v2080, %v2079
  %2113 = vmatpush.bf16.msra.mxu0 %v2088
  %2114 = vmatpush.bf16.msra.mxu0 %v2087
  %2115 = vmatpush.bf16.msra.mxu0 %v2086
  %2116 = vmatpush.bf16.msra.mxu0 %v2085
  %2117 = vmatpush.bf16.msra.mxu0 %v2084
  %2118 = vmatpush.bf16.msra.mxu0 %v2083
  %2119 = vmatpush.bf16.msra.mxu0 %v2082
  %2120 = vmatpush.bf16.msra.mxu0 %v2081
  %2121 = vmatmul.bf16.gmra.mxu0 %v1998
  %v2122 = vpop.f32.mrf.mxu0
  %v2123 = vadd.f32 %v2015, %v2122
  %v2124 = vpop.f32.mrf.mxu0
  %v2125 = vadd.f32 %v2015, %v2124
  %2126 = vmatmul.bf16.gmra.mxu0 %v1999
  %v2127 = vpop.f32.mrf.mxu0
  %v2128 = vadd.f32 %v2015, %v2127
  %v2129 = vpop.f32.mrf.mxu0
  %v2130 = vadd.f32 %v2015, %v2129
  %2131 = vmatmul.bf16.gmra.mxu0 %v2000
  %v2132 = vpop.f32.mrf.mxu0
  %v2133 = vadd.f32 %v2015, %v2132
  %v2134 = vpop.f32.mrf.mxu0
  %v2135 = vadd.f32 %v2015, %v2134
  %2136 = vmatmul.bf16.gmra.mxu0 %v2001
  %v2137 = vpop.f32.mrf.mxu0
  %v2138 = vadd.f32 %v2015, %v2137
  %v2139 = vpop.f32.mrf.mxu0
  %v2140 = vadd.f32 %v2015, %v2139
  %2141 = vmatmul.bf16.gmra.mxu0 %v2002
  %v2142 = vpop.f32.mrf.mxu0
  %v2143 = vadd.f32 %v2015, %v2142
  %v2144 = vpop.f32.mrf.mxu0
  %v2145 = vadd.f32 %v2015, %v2144
  %2146 = vmatmul.bf16.gmra.mxu0 %v2003
  %v2147 = vpop.f32.mrf.mxu0
  %v2148 = vadd.f32 %v2015, %v2147
  %v2149 = vpop.f32.mrf.mxu0
  %v2150 = vadd.f32 %v2015, %v2149
  %2151 = vmatmul.bf16.gmra.mxu0 %v2004
  %v2152 = vpop.f32.mrf.mxu0
  %v2153 = vadd.f32 %v2015, %v2152
  %v2154 = vpop.f32.mrf.mxu0
  %v2155 = vadd.f32 %v2015, %v2154
  %2156 = vmatmul.bf16.gmra.mxu0 %v2005
  %v2157 = vpop.f32.mrf.mxu0
  %v2158 = vadd.f32 %v2015, %v2157
  %v2159 = vpop.f32.mrf.mxu0
  %v2160 = vadd.f32 %v2015, %v2159
  %2161 = vdwg.mxu0
  %2162 = vmatpush.bf16.msra.mxu0 %v2096
  %2163 = vmatpush.bf16.msra.mxu0 %v2095
  %2164 = vmatpush.bf16.msra.mxu0 %v2094
  %2165 = vmatpush.bf16.msra.mxu0 %v2093
  %2166 = vmatpush.bf16.msra.mxu0 %v2092
  %2167 = vmatpush.bf16.msra.mxu0 %v2091
  %2168 = vmatpush.bf16.msra.mxu0 %v2090
  %2169 = vmatpush.bf16.msra.mxu0 %v2089
  %2170 = vmatmul.bf16.gmra.mxu0 %v1572
  %v2171 = vpop.f32.mrf.mxu0
  %v2172 = vadd.f32 %v2123, %v2171
  %v2173 = vpop.f32.mrf.mxu0
  %v2174 = vadd.f32 %v2125, %v2173
  %2175 = vmatmul.bf16.gmra.mxu0 %v1573
  %v2176 = vpop.f32.mrf.mxu0
  %v2177 = vadd.f32 %v2128, %v2176
  %v2178 = vpop.f32.mrf.mxu0
  %v2179 = vadd.f32 %v2130, %v2178
  %2180 = vmatmul.bf16.gmra.mxu0 %v1574
  %v2181 = vpop.f32.mrf.mxu0
  %v2182 = vadd.f32 %v2133, %v2181
  %v2183 = vpop.f32.mrf.mxu0
  %v2184 = vadd.f32 %v2135, %v2183
  %2185 = vmatmul.bf16.gmra.mxu0 %v1575
  %v2186 = vpop.f32.mrf.mxu0
  %v2187 = vadd.f32 %v2138, %v2186
  %v2188 = vpop.f32.mrf.mxu0
  %v2189 = vadd.f32 %v2140, %v2188
  %2190 = vmatmul.bf16.gmra.mxu0 %v1576
  %v2191 = vpop.f32.mrf.mxu0
  %v2192 = vadd.f32 %v2143, %v2191
  %v2193 = vpop.f32.mrf.mxu0
  %v2194 = vadd.f32 %v2145, %v2193
  %2195 = vmatmul.bf16.gmra.mxu0 %v1577
  %v2196 = vpop.f32.mrf.mxu0
  %v2197 = vadd.f32 %v2148, %v2196
  %v2198 = vpop.f32.mrf.mxu0
  %v2199 = vadd.f32 %v2150, %v2198
  %2200 = vmatmul.bf16.gmra.mxu0 %v1578
  %v2201 = vpop.f32.mrf.mxu0
  %v2202 = vadd.f32 %v2153, %v2201
  %v2203 = vpop.f32.mrf.mxu0
  %v2204 = vadd.f32 %v2155, %v2203
  %2205 = vmatmul.bf16.gmra.mxu0 %v1579
  %v2206 = vpop.f32.mrf.mxu0
  %v2207 = vadd.f32 %v2158, %v2206
  %v2208 = vpop.f32.mrf.mxu0
  %v2209 = vadd.f32 %v2160, %v2208
  %2210 = vdwg.mxu0
  %v2211 = vmax.f32 %v2172, 0.0
  %v2212 = vmax.f32 %v2174, 0.0
  %v2213 = vmax.f32 %v2177, 0.0
  %v2214 = vmax.f32 %v2179, 0.0
  %v2215 = vmax.f32 %v2182, 0.0
  %v2216 = vmax.f32 %v2184, 0.0
  %v2217 = vmax.f32 %v2187, 0.0
  %v2218 = vmax.f32 %v2189, 0.0
  %v2219 = vmax.f32 %v2192, 0.0
  %v2220 = vmax.f32 %v2194, 0.0
  %v2221 = vmax.f32 %v2197, 0.0
  %v2222 = vmax.f32 %v2199, 0.0
  %v2223 = vmax.f32 %v2202, 0.0
  %v2224 = vmax.f32 %v2204, 0.0
  %v2225 = vmax.f32 %v2207, 0.0
  %v2226 = vmax.f32 %v2209, 0.0
  %v2227 = vld [vmem:[%s10] sm:$0x1]
  %v2229 = vperm.slane %v2227, 0
  %v2231 = vmul.f32 %v2211, %v2229
  %v2232 = vmul.f32 %v2212, %v2229
  %v2233 = vmul.f32 %v2213, %v2229
  %v2234 = vmul.f32 %v2214, %v2229
  %v2235 = vmul.f32 %v2215, %v2229
  %v2236 = vmul.f32 %v2216, %v2229
  %v2237 = vmul.f32 %v2217, %v2229
  %v2238 = vmul.f32 %v2218, %v2229
  %v2239 = vmul.f32 %v2219, %v2229
  %v2240 = vmul.f32 %v2220, %v2229
  %v2241 = vmul.f32 %v2221, %v2229
  %v2242 = vmul.f32 %v2222, %v2229
  %v2243 = vmul.f32 %v2223, %v2229
  %v2244 = vmul.f32 %v2224, %v2229
  %v2245 = vmul.f32 %v2225, %v2229
  %v2246 = vmul.f32 %v2226, %v2229
  %2247 = vadd.xlane.f32.xlu0 %v2231
  %v2248 = vpop.xlane.xlu0 %2247
  %2249 = vadd.xlane.f32.xlu0 %v2232
  %v2250 = vpop.xlane.xlu0 %2249
  %2251 = vadd.xlane.f32.xlu0 %v2233
  %v2252 = vpop.xlane.xlu0 %2251
  %2253 = vadd.xlane.f32.xlu0 %v2234
  %v2254 = vpop.xlane.xlu0 %2253
  %2255 = vadd.xlane.f32.xlu0 %v2235
  %v2256 = vpop.xlane.xlu0 %2255
  %2257 = vadd.xlane.f32.xlu0 %v2236
  %v2258 = vpop.xlane.xlu0 %2257
  %2259 = vadd.xlane.f32.xlu0 %v2237
  %v2260 = vpop.xlane.xlu0 %2259
  %2261 = vadd.xlane.f32.xlu0 %v2238
  %v2262 = vpop.xlane.xlu0 %2261
  %2263 = vadd.xlane.f32.xlu0 %v2239
  %v2264 = vpop.xlane.xlu0 %2263
  %2265 = vadd.xlane.f32.xlu0 %v2240
  %v2266 = vpop.xlane.xlu0 %2265
  %2267 = vadd.xlane.f32.xlu0 %v2241
  %v2268 = vpop.xlane.xlu0 %2267
  %2269 = vadd.xlane.f32.xlu0 %v2242
  %v2270 = vpop.xlane.xlu0 %2269
  %2271 = vadd.xlane.f32.xlu0 %v2243
  %v2272 = vpop.xlane.xlu0 %2271
  %2273 = vadd.xlane.f32.xlu0 %v2244
  %v2274 = vpop.xlane.xlu0 %2273
  %2275 = vadd.xlane.f32.xlu0 %v2245
  %v2276 = vpop.xlane.xlu0 %2275
  %2277 = vadd.xlane.f32.xlu0 %v2246
  %v2278 = vpop.xlane.xlu0 %2277
  %2279 = vmatpush.xpose.msra.mxu0 %v2226
  %2280 = vmatpush.xpose.msra.mxu0 %v2225
  %2281 = vmatpush.xpose.msra.mxu0 %v2224
  %2282 = vmatpush.xpose.msra.mxu0 %v2223
  %2283 = vmatpush.xpose.msra.mxu0 %v2222
  %2284 = vmatpush.xpose.msra.mxu0 %v2221
  %2285 = vmatpush.xpose.msra.mxu0 %v2220
  %2286 = vmatpush.xpose.msra.mxu0 %v2219
  %2287 = vmatpush.xpose.msra.mxu0 %v2218
  %2288 = vmatpush.xpose.msra.mxu0 %v2217
  %2289 = vmatpush.xpose.msra.mxu0 %v2216
  %2290 = vmatpush.xpose.msra.mxu0 %v2215
  %2291 = vmatpush.xpose.msra.mxu0 %v2214
  %2292 = vmatpush.xpose.msra.mxu0 %v2213
  %2293 = vmatpush.xpose.msra.mxu0 %v2212
  %2294 = vmatpush.xpose.msra.mxu0 %v2211
  %2295 = vmatmul.f32.gmra.mxu0 %v2227
  %v2296 = vpop.f32.mrf.mxu0
  %v2297 = vadd.f32 0.0, %v2296
  %2298 = vdwg.mxu0
  %v2299 = vmul.f32 %v78, %v1469
  %v2300 = vmul.f32 %v79, %v1469
  %v2301 = vmul.f32 %v80, %v1469
  %v2302 = vmul.f32 %v81, %v1469
  %v2303 = vmul.f32 %v82, %v1469
  %v2304 = vmul.f32 %v83, %v1469
  %v2305 = vmul.f32 %v84, %v1469
  %v2306 = vmul.f32 %v85, %v1469
  %v2307 = vmul.f32 %v86, %v1469
  %v2308 = vmul.f32 %v87, %v1469
  %v2309 = vmul.f32 %v88, %v1469
  %v2310 = vmul.f32 %v89, %v1469
  %v2311 = vmul.f32 %v90, %v1469
  %v2312 = vmul.f32 %v91, %v1469
  %v2313 = vmul.f32 %v92, %v1469
  %v2314 = vmul.f32 %v93, %v1469
  %2315 = vadd.xlane.f32.xlu0 %v2299
  %v2316 = vpop.xlane.xlu0 %2315
  %2317 = vadd.xlane.f32.xlu0 %v2300
  %v2318 = vpop.xlane.xlu0 %2317
  %2319 = vadd.xlane.f32.xlu0 %v2301
  %v2320 = vpop.xlane.xlu0 %2319
  %2321 = vadd.xlane.f32.xlu0 %v2302
  %v2322 = vpop.xlane.xlu0 %2321
  %2323 = vadd.xlane.f32.xlu0 %v2303
  %v2324 = vpop.xlane.xlu0 %2323
  %2325 = vadd.xlane.f32.xlu0 %v2304
  %v2326 = vpop.xlane.xlu0 %2325
  %2327 = vadd.xlane.f32.xlu0 %v2305
  %v2328 = vpop.xlane.xlu0 %2327
  %2329 = vadd.xlane.f32.xlu0 %v2306
  %v2330 = vpop.xlane.xlu0 %2329
  %2331 = vadd.xlane.f32.xlu0 %v2307
  %v2332 = vpop.xlane.xlu0 %2331
  %2333 = vadd.xlane.f32.xlu0 %v2308
  %v2334 = vpop.xlane.xlu0 %2333
  %2335 = vadd.xlane.f32.xlu0 %v2309
  %v2336 = vpop.xlane.xlu0 %2335
  %2337 = vadd.xlane.f32.xlu0 %v2310
  %v2338 = vpop.xlane.xlu0 %2337
  %2339 = vadd.xlane.f32.xlu0 %v2311
  %v2340 = vpop.xlane.xlu0 %2339
  %2341 = vadd.xlane.f32.xlu0 %v2312
  %v2342 = vpop.xlane.xlu0 %2341
  %2343 = vadd.xlane.f32.xlu0 %v2313
  %v2344 = vpop.xlane.xlu0 %2343
  %2345 = vadd.xlane.f32.xlu0 %v2314
  %v2346 = vpop.xlane.xlu0 %2345
  %v2347 = vmul.f32 %v78, %v1450
  %v2348 = vmul.f32 %v79, %v1451
  %v2349 = vmul.f32 %v80, %v1452
  %v2350 = vmul.f32 %v81, %v1453
  %v2351 = vmul.f32 %v82, %v1454
  %v2352 = vmul.f32 %v83, %v1455
  %v2353 = vmul.f32 %v84, %v1456
  %v2354 = vmul.f32 %v85, %v1457
  %v2355 = vmul.f32 %v86, %v1458
  %v2356 = vmul.f32 %v87, %v1459
  %v2357 = vmul.f32 %v88, %v1460
  %v2358 = vmul.f32 %v89, %v1461
  %v2359 = vmul.f32 %v90, %v1462
  %v2360 = vmul.f32 %v91, %v1463
  %v2361 = vmul.f32 %v92, %v1464
  %v2362 = vmul.f32 %v93, %v1465
  %v2363 = vadd.f32 %v2347, %v2348
  %v2364 = vadd.f32 %v2363, %v2349
  %v2365 = vadd.f32 %v2364, %v2350
  %v2366 = vadd.f32 %v2365, %v2351
  %v2367 = vadd.f32 %v2366, %v2352
  %v2368 = vadd.f32 %v2367, %v2353
  %v2369 = vadd.f32 %v2368, %v2354
  %v2370 = vadd.f32 %v2369, %v2355
  %v2371 = vadd.f32 %v2370, %v2356
  %v2372 = vadd.f32 %v2371, %v2357
  %v2373 = vadd.f32 %v2372, %v2358
  %v2374 = vadd.f32 %v2373, %v2359
  %v2375 = vadd.f32 %v2374, %v2360
  %v2376 = vadd.f32 %v2375, %v2361
  %v2377 = vadd.f32 %v2376, %v2362
  %v2378 = vrot.slane %v2377, 4
  %v2379 = vadd.f32 %v2377, %v2378
  %v2380 = vrot.slane %v2379, 2
  %v2381 = vadd.f32 %v2379, %v2380
  %v2382 = vrot.slane %v2381, 1
  %v2383 = vadd.f32 %v2381, %v2382
  %v2384 = vmul.f32 %v2316, 0.9
  %v2385 = vmul.f32 %v2318, 0.9
  %v2386 = vmul.f32 %v2320, 0.9
  %v2387 = vmul.f32 %v2322, 0.9
  %v2388 = vmul.f32 %v2324, 0.9
  %v2389 = vmul.f32 %v2326, 0.9
  %v2390 = vmul.f32 %v2328, 0.9
  %v2391 = vmul.f32 %v2330, 0.9
  %v2392 = vmul.f32 %v2332, 0.9
  %v2393 = vmul.f32 %v2334, 0.9
  %v2394 = vmul.f32 %v2336, 0.9
  %v2395 = vmul.f32 %v2338, 0.9
  %v2396 = vmul.f32 %v2340, 0.9
  %v2397 = vmul.f32 %v2342, 0.9
  %v2398 = vmul.f32 %v2344, 0.9
  %v2399 = vmul.f32 %v2346, 0.9
  %v2400 = vceil.f32 %v2384
  %v2401 = vceil.f32 %v2385
  %v2402 = vceil.f32 %v2386
  %v2403 = vceil.f32 %v2387
  %v2404 = vceil.f32 %v2388
  %v2405 = vceil.f32 %v2389
  %v2406 = vceil.f32 %v2390
  %v2407 = vceil.f32 %v2391
  %v2408 = vceil.f32 %v2392
  %v2409 = vceil.f32 %v2393
  %v2410 = vceil.f32 %v2394
  %v2411 = vceil.f32 %v2395
  %v2412 = vceil.f32 %v2396
  %v2413 = vceil.f32 %v2397
  %v2414 = vceil.f32 %v2398
  %v2415 = vceil.f32 %v2399
  %v2416 = vmul.f32 %v2383, 0.9
  %v2417 = vceil.f32 %v2416
  %v2418 = vperm.slane %v2297, 0
  %vm2419 = vcmp.gt.f32.partialorder %v2418, %v2248
  %vm2420 = vcmp.gt.f32.partialorder %v2418, %v2250
  %vm2421 = vcmp.gt.f32.partialorder %v2418, %v2252
  %vm2422 = vcmp.gt.f32.partialorder %v2418, %v2254
  %vm2423 = vcmp.gt.f32.partialorder %v2418, %v2256
  %vm2424 = vcmp.gt.f32.partialorder %v2418, %v2258
  %vm2425 = vcmp.gt.f32.partialorder %v2418, %v2260
  %vm2426 = vcmp.gt.f32.partialorder %v2418, %v2262
  %vm2427 = vcmp.gt.f32.partialorder %v2418, %v2264
  %vm2428 = vcmp.gt.f32.partialorder %v2418, %v2266
  %vm2429 = vcmp.gt.f32.partialorder %v2418, %v2268
  %vm2430 = vcmp.gt.f32.partialorder %v2418, %v2270
  %vm2431 = vcmp.gt.f32.partialorder %v2418, %v2272
  %vm2432 = vcmp.gt.f32.partialorder %v2418, %v2274
  %vm2433 = vcmp.gt.f32.partialorder %v2418, %v2276
  %vm2434 = vcmp.gt.f32.partialorder %v2418, %v2278
  %v2435 = vmul.f32 %v178, %v1469
  %v2436 = vmul.f32 %v179, %v1469
  %v2437 = vmul.f32 %v180, %v1469
  %v2438 = vmul.f32 %v181, %v1469
  %v2439 = vmul.f32 %v182, %v1469
  %v2440 = vmul.f32 %v183, %v1469
  %v2441 = vmul.f32 %v184, %v1469
  %v2442 = vmul.f32 %v185, %v1469
  %v2443 = vmul.f32 %v186, %v1469
  %v2444 = vmul.f32 %v187, %v1469
  %v2445 = vmul.f32 %v188, %v1469
  %v2446 = vmul.f32 %v189, %v1469
  %v2447 = vmul.f32 %v190, %v1469
  %v2448 = vmul.f32 %v191, %v1469
  %v2449 = vmul.f32 %v192, %v1469
  %v2450 = vmul.f32 %v193, %v1469
  %v2451 = vsel %vm2419, %v2435, 0.0
  %v2452 = vsel %vm2420, %v2436, 0.0
  %v2453 = vsel %vm2421, %v2437, 0.0
  %v2454 = vsel %vm2422, %v2438, 0.0
  %v2455 = vsel %vm2423, %v2439, 0.0
  %v2456 = vsel %vm2424, %v2440, 0.0
  %v2457 = vsel %vm2425, %v2441, 0.0
  %v2458 = vsel %vm2426, %v2442, 0.0
  %v2459 = vsel %vm2427, %v2443, 0.0
  %v2460 = vsel %vm2428, %v2444, 0.0
  %v2461 = vsel %vm2429, %v2445, 0.0
  %v2462 = vsel %vm2430, %v2446, 0.0
  %v2463 = vsel %vm2431, %v2447, 0.0
  %v2464 = vsel %vm2432, %v2448, 0.0
  %v2465 = vsel %vm2433, %v2449, 0.0
  %v2466 = vsel %vm2434, %v2450, 0.0
  %2467 = vadd.xlane.f32.xlu0 %v2451
  %v2468 = vpop.xlane.xlu0 %2467
  %2469 = vadd.xlane.f32.xlu0 %v2452
  %v2470 = vpop.xlane.xlu0 %2469
  %2471 = vadd.xlane.f32.xlu0 %v2453
  %v2472 = vpop.xlane.xlu0 %2471
  %2473 = vadd.xlane.f32.xlu0 %v2454
  %v2474 = vpop.xlane.xlu0 %2473
  %2475 = vadd.xlane.f32.xlu0 %v2455
  %v2476 = vpop.xlane.xlu0 %2475
  %2477 = vadd.xlane.f32.xlu0 %v2456
  %v2478 = vpop.xlane.xlu0 %2477
  %2479 = vadd.xlane.f32.xlu0 %v2457
  %v2480 = vpop.xlane.xlu0 %2479
  %2481 = vadd.xlane.f32.xlu0 %v2458
  %v2482 = vpop.xlane.xlu0 %2481
  %2483 = vadd.xlane.f32.xlu0 %v2459
  %v2484 = vpop.xlane.xlu0 %2483
  %2485 = vadd.xlane.f32.xlu0 %v2460
  %v2486 = vpop.xlane.xlu0 %2485
  %2487 = vadd.xlane.f32.xlu0 %v2461
  %v2488 = vpop.xlane.xlu0 %2487
  %2489 = vadd.xlane.f32.xlu0 %v2462
  %v2490 = vpop.xlane.xlu0 %2489
  %2491 = vadd.xlane.f32.xlu0 %v2463
  %v2492 = vpop.xlane.xlu0 %2491
  %2493 = vadd.xlane.f32.xlu0 %v2464
  %v2494 = vpop.xlane.xlu0 %2493
  %2495 = vadd.xlane.f32.xlu0 %v2465
  %v2496 = vpop.xlane.xlu0 %2495
  %2497 = vadd.xlane.f32.xlu0 %v2466
  %v2498 = vpop.xlane.xlu0 %2497
  %vm2499 = vcmp.gt.f32.partialorder %v2248, %v2418
  %vm2500 = vcmp.gt.f32.partialorder %v2250, %v2418
  %vm2501 = vcmp.gt.f32.partialorder %v2252, %v2418
  %vm2502 = vcmp.gt.f32.partialorder %v2254, %v2418
  %vm2503 = vcmp.gt.f32.partialorder %v2256, %v2418
  %vm2504 = vcmp.gt.f32.partialorder %v2258, %v2418
  %vm2505 = vcmp.gt.f32.partialorder %v2260, %v2418
  %vm2506 = vcmp.gt.f32.partialorder %v2262, %v2418
  %vm2507 = vcmp.gt.f32.partialorder %v2264, %v2418
  %vm2508 = vcmp.gt.f32.partialorder %v2266, %v2418
  %vm2509 = vcmp.gt.f32.partialorder %v2268, %v2418
  %vm2510 = vcmp.gt.f32.partialorder %v2270, %v2418
  %vm2511 = vcmp.gt.f32.partialorder %v2272, %v2418
  %vm2512 = vcmp.gt.f32.partialorder %v2274, %v2418
  %vm2513 = vcmp.gt.f32.partialorder %v2276, %v2418
  %vm2514 = vcmp.gt.f32.partialorder %v2278, %v2418
  %v2515 = vmul.f32 %v178, %v1450
  %v2516 = vmul.f32 %v179, %v1451
  %v2517 = vmul.f32 %v180, %v1452
  %v2518 = vmul.f32 %v181, %v1453
  %v2519 = vmul.f32 %v182, %v1454
  %v2520 = vmul.f32 %v183, %v1455
  %v2521 = vmul.f32 %v184, %v1456
  %v2522 = vmul.f32 %v185, %v1457
  %v2523 = vmul.f32 %v186, %v1458
  %v2524 = vmul.f32 %v187, %v1459
  %v2525 = vmul.f32 %v188, %v1460
  %v2526 = vmul.f32 %v189, %v1461
  %v2527 = vmul.f32 %v190, %v1462
  %v2528 = vmul.f32 %v191, %v1463
  %v2529 = vmul.f32 %v192, %v1464
  %v2530 = vmul.f32 %v193, %v1465
  %v2531 = vsel %vm2499, %v2515, 0.0
  %v2532 = vsel %vm2500, %v2516, 0.0
  %v2533 = vsel %vm2501, %v2517, 0.0
  %v2534 = vsel %vm2502, %v2518, 0.0
  %v2535 = vsel %vm2503, %v2519, 0.0
  %v2536 = vsel %vm2504, %v2520, 0.0
  %v2537 = vsel %vm2505, %v2521, 0.0
  %v2538 = vsel %vm2506, %v2522, 0.0
  %v2539 = vsel %vm2507, %v2523, 0.0
  %v2540 = vsel %vm2508, %v2524, 0.0
  %v2541 = vsel %vm2509, %v2525, 0.0
  %v2542 = vsel %vm2510, %v2526, 0.0
  %v2543 = vsel %vm2511, %v2527, 0.0
  %v2544 = vsel %vm2512, %v2528, 0.0
  %v2545 = vsel %vm2513, %v2529, 0.0
  %v2546 = vsel %vm2514, %v2530, 0.0
  %v2547 = vadd.f32 %v2531, %v2532
  %v2548 = vadd.f32 %v2547, %v2533
  %v2549 = vadd.f32 %v2548, %v2534
  %v2550 = vadd.f32 %v2549, %v2535
  %v2551 = vadd.f32 %v2550, %v2536
  %v2552 = vadd.f32 %v2551, %v2537
  %v2553 = vadd.f32 %v2552, %v2538
  %v2554 = vadd.f32 %v2553, %v2539
  %v2555 = vadd.f32 %v2554, %v2540
  %v2556 = vadd.f32 %v2555, %v2541
  %v2557 = vadd.f32 %v2556, %v2542
  %v2558 = vadd.f32 %v2557, %v2543
  %v2559 = vadd.f32 %v2558, %v2544
  %v2560 = vadd.f32 %v2559, %v2545
  %v2561 = vadd.f32 %v2560, %v2546
  %v2562 = vrot.slane %v2561, 4
  %v2563 = vadd.f32 %v2561, %v2562
  %v2564 = vrot.slane %v2563, 2
  %v2565 = vadd.f32 %v2563, %v2564
  %v2566 = vrot.slane %v2565, 1
  %v2567 = vadd.f32 %v2565, %v2566
  %vm2568 = vcmp.lt.f32.partialorder %v2468, %v2400
  %vm2569 = vcmp.lt.f32.partialorder %v2470, %v2401
  %vm2570 = vcmp.lt.f32.partialorder %v2472, %v2402
  %vm2571 = vcmp.lt.f32.partialorder %v2474, %v2403
  %vm2572 = vcmp.lt.f32.partialorder %v2476, %v2404
  %vm2573 = vcmp.lt.f32.partialorder %v2478, %v2405
  %vm2574 = vcmp.lt.f32.partialorder %v2480, %v2406
  %vm2575 = vcmp.lt.f32.partialorder %v2482, %v2407
  %vm2576 = vcmp.lt.f32.partialorder %v2484, %v2408
  %vm2577 = vcmp.lt.f32.partialorder %v2486, %v2409
  %vm2578 = vcmp.lt.f32.partialorder %v2488, %v2410
  %vm2579 = vcmp.lt.f32.partialorder %v2490, %v2411
  %vm2580 = vcmp.lt.f32.partialorder %v2492, %v2412
  %vm2581 = vcmp.lt.f32.partialorder %v2494, %v2413
  %vm2582 = vcmp.lt.f32.partialorder %v2496, %v2414
  %vm2583 = vcmp.lt.f32.partialorder %v2498, %v2415
  %vm2584 = vcmp.gt.f32.partialorder %v1450, 0.5
  %vm2585 = vcmp.gt.f32.partialorder %v1451, 0.5
  %vm2586 = vcmp.gt.f32.partialorder %v1452, 0.5
  %vm2587 = vcmp.gt.f32.partialorder %v1453, 0.5
  %vm2588 = vcmp.gt.f32.partialorder %v1454, 0.5
  %vm2589 = vcmp.gt.f32.partialorder %v1455, 0.5
  %vm2590 = vcmp.gt.f32.partialorder %v1456, 0.5
  %vm2591 = vcmp.gt.f32.partialorder %v1457, 0.5
  %vm2592 = vcmp.gt.f32.partialorder %v1458, 0.5
  %vm2593 = vcmp.gt.f32.partialorder %v1459, 0.5
  %vm2594 = vcmp.gt.f32.partialorder %v1460, 0.5
  %vm2595 = vcmp.gt.f32.partialorder %v1461, 0.5
  %vm2596 = vcmp.gt.f32.partialorder %v1462, 0.5
  %vm2597 = vcmp.gt.f32.partialorder %v1463, 0.5
  %vm2598 = vcmp.gt.f32.partialorder %v1464, 0.5
  %vm2599 = vcmp.gt.f32.partialorder %v1465, 0.5
  %vm2600 = vmand %vm2568, %vm2584
  %vm2601 = vmand %vm2569, %vm2585
  %vm2602 = vmand %vm2570, %vm2586
  %vm2603 = vmand %vm2571, %vm2587
  %vm2604 = vmand %vm2572, %vm2588
  %vm2605 = vmand %vm2573, %vm2589
  %vm2606 = vmand %vm2574, %vm2590
  %vm2607 = vmand %vm2575, %vm2591
  %vm2608 = vmand %vm2576, %vm2592
  %vm2609 = vmand %vm2577, %vm2593
  %vm2610 = vmand %vm2578, %vm2594
  %vm2611 = vmand %vm2579, %vm2595
  %vm2612 = vmand %vm2580, %vm2596
  %vm2613 = vmand %vm2581, %vm2597
  %vm2614 = vmand %vm2582, %vm2598
  %vm2615 = vmand %vm2583, %vm2599
  %v2616 = vsel %vm2600, 1.0, 0.0
  %v2617 = vsel %vm2601, 1.0, 0.0
  %v2618 = vsel %vm2602, 1.0, 0.0
  %v2619 = vsel %vm2603, 1.0, 0.0
  %v2620 = vsel %vm2604, 1.0, 0.0
  %v2621 = vsel %vm2605, 1.0, 0.0
  %v2622 = vsel %vm2606, 1.0, 0.0
  %v2623 = vsel %vm2607, 1.0, 0.0
  %v2624 = vsel %vm2608, 1.0, 0.0
  %v2625 = vsel %vm2609, 1.0, 0.0
  %v2626 = vsel %vm2610, 1.0, 0.0
  %v2627 = vsel %vm2611, 1.0, 0.0
  %v2628 = vsel %vm2612, 1.0, 0.0
  %v2629 = vsel %vm2613, 1.0, 0.0
  %v2630 = vsel %vm2614, 1.0, 0.0
  %v2631 = vsel %vm2615, 1.0, 0.0
  %vm2632 = vcmp.lt.f32.partialorder %v2567, %v2417
  %vm2633 = vcmp.gt.f32.partialorder %v1469, 0.5
  %vm2634 = vmand %vm2632, %vm2633
  %v2635 = vsel %vm2634, 1.0, 0.0
  %v2636 = vtanh.pop %v2248
  %v2637 = vtanh.pop %v2250
  %v2638 = vtanh.pop %v2252
  %v2639 = vtanh.pop %v2254
  %v2640 = vtanh.pop %v2256
  %v2641 = vtanh.pop %v2258
  %v2642 = vtanh.pop %v2260
  %v2643 = vtanh.pop %v2262
  %v2644 = vtanh.pop %v2264
  %v2645 = vtanh.pop %v2266
  %v2646 = vtanh.pop %v2268
  %v2647 = vtanh.pop %v2270
  %v2648 = vtanh.pop %v2272
  %v2649 = vtanh.pop %v2274
  %v2650 = vtanh.pop %v2276
  %v2651 = vtanh.pop %v2278
  %v2652 = vmul.f32 %v2636, %v2616
  %v2653 = vmul.f32 %v2637, %v2617
  %v2654 = vmul.f32 %v2638, %v2618
  %v2655 = vmul.f32 %v2639, %v2619
  %v2656 = vmul.f32 %v2640, %v2620
  %v2657 = vmul.f32 %v2641, %v2621
  %v2658 = vmul.f32 %v2642, %v2622
  %v2659 = vmul.f32 %v2643, %v2623
  %v2660 = vmul.f32 %v2644, %v2624
  %v2661 = vmul.f32 %v2645, %v2625
  %v2662 = vmul.f32 %v2646, %v2626
  %v2663 = vmul.f32 %v2647, %v2627
  %v2664 = vmul.f32 %v2648, %v2628
  %v2665 = vmul.f32 %v2649, %v2629
  %v2666 = vmul.f32 %v2650, %v2630
  %v2667 = vmul.f32 %v2651, %v2631
  %v2668 = vmul.f32 %v2211, %v2652
  %v2669 = vmul.f32 %v2212, %v2653
  %v2670 = vmul.f32 %v2213, %v2654
  %v2671 = vmul.f32 %v2214, %v2655
  %v2672 = vmul.f32 %v2215, %v2656
  %v2673 = vmul.f32 %v2216, %v2657
  %v2674 = vmul.f32 %v2217, %v2658
  %v2675 = vmul.f32 %v2218, %v2659
  %v2676 = vmul.f32 %v2219, %v2660
  %v2677 = vmul.f32 %v2220, %v2661
  %v2678 = vmul.f32 %v2221, %v2662
  %v2679 = vmul.f32 %v2222, %v2663
  %v2680 = vmul.f32 %v2223, %v2664
  %v2681 = vmul.f32 %v2224, %v2665
  %v2682 = vmul.f32 %v2225, %v2666
  %v2683 = vmul.f32 %v2226, %v2667
  %v2684 = vpack.c.bf16 %v2668, %v2668
  %v2685 = vpack.c.bf16 %v2669, %v2669
  %v2686 = vpack.c.bf16 %v2670, %v2670
  %v2687 = vpack.c.bf16 %v2671, %v2671
  %v2688 = vpack.c.bf16 %v2672, %v2672
  %v2689 = vpack.c.bf16 %v2673, %v2673
  %v2690 = vpack.c.bf16 %v2674, %v2674
  %v2691 = vpack.c.bf16 %v2675, %v2675
  %v2692 = vpack.c.bf16 %v2676, %v2676
  %v2693 = vpack.c.bf16 %v2677, %v2677
  %v2694 = vpack.c.bf16 %v2678, %v2678
  %v2695 = vpack.c.bf16 %v2679, %v2679
  %v2696 = vpack.c.bf16 %v2680, %v2680
  %v2697 = vpack.c.bf16 %v2681, %v2681
  %v2698 = vpack.c.bf16 %v2682, %v2682
  %v2699 = vpack.c.bf16 %v2683, %v2683
  %v2700 = vmul.f32 %v94, %v2635
  %v2701 = vsel %vm194, %v2700, 0.0
  %2702 = vadd.xlane.f32.xlu0 %v2701
  %v2703 = vpop.xlane.xlu0 %2702
  %v2704 = vmax.f32 %v2703, 1.0
  %v2705 = vpack.c.bf16 %v2700, %v2700
  %v2722 = vunpack.c.l.b16 %v2684
  %v2723 = vunpack.c.l.b16 %v2685
  %v2724 = vunpack.c.l.b16 %v2686
  %v2725 = vunpack.c.l.b16 %v2687
  %v2726 = vunpack.c.l.b16 %v2688
  %v2727 = vunpack.c.l.b16 %v2689
  %v2728 = vunpack.c.l.b16 %v2690
  %v2729 = vunpack.c.l.b16 %v2691
  %v2730 = vunpack.c.l.b16 %v2692
  %v2731 = vunpack.c.l.b16 %v2693
  %v2732 = vunpack.c.l.b16 %v2694
  %v2733 = vunpack.c.l.b16 %v2695
  %v2734 = vunpack.c.l.b16 %v2696
  %v2735 = vunpack.c.l.b16 %v2697
  %v2736 = vunpack.c.l.b16 %v2698
  %v2737 = vunpack.c.l.b16 %v2699
  %v2738 = vpack.c.b16 %v2723, %v2722
  %v2739 = vpack.c.b16 %v2725, %v2724
  %v2740 = vpack.c.b16 %v2727, %v2726
  %v2741 = vpack.c.b16 %v2729, %v2728
  %v2742 = vpack.c.b16 %v2731, %v2730
  %v2743 = vpack.c.b16 %v2733, %v2732
  %v2744 = vpack.c.b16 %v2735, %v2734
  %v2745 = vpack.c.b16 %v2737, %v2736
  %2754 = vmatpush.bf16.msra.mxu0 %v2745
  %2755 = vmatpush.bf16.msra.mxu0 %v2744
  %2756 = vmatpush.bf16.msra.mxu0 %v2743
  %2757 = vmatpush.bf16.msra.mxu0 %v2742
  %2758 = vmatpush.bf16.msra.mxu0 %v2741
  %2759 = vmatpush.bf16.msra.mxu0 %v2740
  %2760 = vmatpush.bf16.msra.mxu0 %v2739
  %2761 = vmatpush.bf16.msra.mxu0 %v2738
  %2762 = vmatmul.bf16.gmra.mxu0 %v2705
  %v2763 = vpop.f32.mrf.mxu0
  %v2764 = vadd.f32 0.0, %v2763
  %v2765 = vpop.f32.mrf.mxu0
  %2766 = vdwg.mxu0
  %v2767 = vrcp.pop %v2704
  %v2768 = vmul.f32 %v2704, %v2767
  %v2769 = vsub.f32 1.0, %v2768
  %v2770 = vmul.f32 %v2767, %v2769
  %v2771 = vadd.f32 %v2767, %v2770
  %vm2772 = vweird.f32 %v2704
  %vm2773 = vweird.f32 %v2767
  %vm2774 = vmor %vm2772, %vm2773
  %v2775 = vsel %vm2774, %v2767, %v2771
  %v2776 = vand.u32 2147483647, %v2704
  %vm2777 = vcmp.eq.f32.partialorder %v2776, 8.507059e+37
  %v2778 = vand.u32 %v2704, 2147483648
  %v2779 = vor.u32 1.1754944e-38, %v2778
  %v2780 = vsel %vm2777, %v2779, %v2775
  %v2781 = vmul.f32 %v2764, %v2780
  %v2782 = vmul.f32 %v95, %v2616
  %v2783 = vmul.f32 %v96, %v2617
  %v2784 = vmul.f32 %v97, %v2618
  %v2785 = vmul.f32 %v98, %v2619
  %v2786 = vmul.f32 %v99, %v2620
  %v2787 = vmul.f32 %v100, %v2621
  %v2788 = vmul.f32 %v101, %v2622
  %v2789 = vmul.f32 %v102, %v2623
  %v2790 = vmul.f32 %v103, %v2624
  %v2791 = vmul.f32 %v104, %v2625
  %v2792 = vmul.f32 %v105, %v2626
  %v2793 = vmul.f32 %v106, %v2627
  %v2794 = vmul.f32 %v107, %v2628
  %v2795 = vmul.f32 %v108, %v2629
  %v2796 = vmul.f32 %v109, %v2630
  %v2797 = vmul.f32 %v110, %v2631
  %vm2798 = vcmp.gt.f32.partialorder %v2782, 0.5
  %vm2799 = vcmp.gt.f32.partialorder %v2783, 0.5
  %vm2800 = vcmp.gt.f32.partialorder %v2784, 0.5
  %vm2801 = vcmp.gt.f32.partialorder %v2785, 0.5
  %vm2802 = vcmp.gt.f32.partialorder %v2786, 0.5
  %vm2803 = vcmp.gt.f32.partialorder %v2787, 0.5
  %vm2804 = vcmp.gt.f32.partialorder %v2788, 0.5
  %vm2805 = vcmp.gt.f32.partialorder %v2789, 0.5
  %vm2806 = vcmp.gt.f32.partialorder %v2790, 0.5
  %vm2807 = vcmp.gt.f32.partialorder %v2791, 0.5
  %vm2808 = vcmp.gt.f32.partialorder %v2792, 0.5
  %vm2809 = vcmp.gt.f32.partialorder %v2793, 0.5
  %vm2810 = vcmp.gt.f32.partialorder %v2794, 0.5
  %vm2811 = vcmp.gt.f32.partialorder %v2795, 0.5
  %vm2812 = vcmp.gt.f32.partialorder %v2796, 0.5
  %vm2813 = vcmp.gt.f32.partialorder %v2797, 0.5
  %v2814 = vsel %vm2798, 1, 0
  %v2815 = vsel %vm2799, 1, 0
  %v2816 = vsel %vm2800, 1, 0
  %v2817 = vsel %vm2801, 1, 0
  %v2818 = vsel %vm2802, 1, 0
  %v2819 = vsel %vm2803, 1, 0
  %v2820 = vsel %vm2804, 1, 0
  %v2821 = vsel %vm2805, 1, 0
  %v2822 = vsel %vm2806, 1, 0
  %v2823 = vsel %vm2807, 1, 0
  %v2824 = vsel %vm2808, 1, 0
  %v2825 = vsel %vm2809, 1, 0
  %v2826 = vsel %vm2810, 1, 0
  %v2827 = vsel %vm2811, 1, 0
  %v2828 = vsel %vm2812, 1, 0
  %v2829 = vsel %vm2813, 1, 0
  %2830 = vset.pattern.permute.xlu0 0
  %2831 = vperm.xlu0 %2830, %v2814
  %v2832 = vpop.permute.xlu0 %2831
  %2833 = vset.pattern.permute.xlu0 0
  %2834 = vperm.xlu0 %2833, %v2815
  %v2835 = vpop.permute.xlu0 %2834
  %2836 = vset.pattern.permute.xlu0 0
  %2837 = vperm.xlu0 %2836, %v2816
  %v2838 = vpop.permute.xlu0 %2837
  %2839 = vset.pattern.permute.xlu0 0
  %2840 = vperm.xlu0 %2839, %v2817
  %v2841 = vpop.permute.xlu0 %2840
  %2842 = vset.pattern.permute.xlu0 0
  %2843 = vperm.xlu0 %2842, %v2818
  %v2844 = vpop.permute.xlu0 %2843
  %2845 = vset.pattern.permute.xlu0 0
  %2846 = vperm.xlu0 %2845, %v2819
  %v2847 = vpop.permute.xlu0 %2846
  %2848 = vset.pattern.permute.xlu0 0
  %2849 = vperm.xlu0 %2848, %v2820
  %v2850 = vpop.permute.xlu0 %2849
  %2851 = vset.pattern.permute.xlu0 0
  %2852 = vperm.xlu0 %2851, %v2821
  %v2853 = vpop.permute.xlu0 %2852
  %2854 = vset.pattern.permute.xlu0 0
  %2855 = vperm.xlu0 %2854, %v2822
  %v2856 = vpop.permute.xlu0 %2855
  %2857 = vset.pattern.permute.xlu0 0
  %2858 = vperm.xlu0 %2857, %v2823
  %v2859 = vpop.permute.xlu0 %2858
  %2860 = vset.pattern.permute.xlu0 0
  %2861 = vperm.xlu0 %2860, %v2824
  %v2862 = vpop.permute.xlu0 %2861
  %2863 = vset.pattern.permute.xlu0 0
  %2864 = vperm.xlu0 %2863, %v2825
  %v2865 = vpop.permute.xlu0 %2864
  %2866 = vset.pattern.permute.xlu0 0
  %2867 = vperm.xlu0 %2866, %v2826
  %v2868 = vpop.permute.xlu0 %2867
  %2869 = vset.pattern.permute.xlu0 0
  %2870 = vperm.xlu0 %2869, %v2827
  %v2871 = vpop.permute.xlu0 %2870
  %2872 = vset.pattern.permute.xlu0 0
  %2873 = vperm.xlu0 %2872, %v2828
  %v2874 = vpop.permute.xlu0 %2873
  %2875 = vset.pattern.permute.xlu0 0
  %2876 = vperm.xlu0 %2875, %v2829
  %v2877 = vpop.permute.xlu0 %2876
  %vm2878 = vcmp.eq.s32.totalorder %v2832, 1
  %vm2879 = vcmp.eq.s32.totalorder %v2835, 1
  %vm2880 = vcmp.eq.s32.totalorder %v2838, 1
  %vm2881 = vcmp.eq.s32.totalorder %v2841, 1
  %vm2882 = vcmp.eq.s32.totalorder %v2844, 1
  %vm2883 = vcmp.eq.s32.totalorder %v2847, 1
  %vm2884 = vcmp.eq.s32.totalorder %v2850, 1
  %vm2885 = vcmp.eq.s32.totalorder %v2853, 1
  %vm2886 = vcmp.eq.s32.totalorder %v2856, 1
  %vm2887 = vcmp.eq.s32.totalorder %v2859, 1
  %vm2888 = vcmp.eq.s32.totalorder %v2862, 1
  %vm2889 = vcmp.eq.s32.totalorder %v2865, 1
  %vm2890 = vcmp.eq.s32.totalorder %v2868, 1
  %vm2891 = vcmp.eq.s32.totalorder %v2871, 1
  %vm2892 = vcmp.eq.s32.totalorder %v2874, 1
  %vm2893 = vcmp.eq.s32.totalorder %v2877, 1
  %v2894 = vsel %vm2878, %v2668, -1e+30
  %v2895 = vsel %vm2879, %v2669, -1e+30
  %v2896 = vsel %vm2880, %v2670, -1e+30
  %v2897 = vsel %vm2881, %v2671, -1e+30
  %v2898 = vsel %vm2882, %v2672, -1e+30
  %v2899 = vsel %vm2883, %v2673, -1e+30
  %v2900 = vsel %vm2884, %v2674, -1e+30
  %v2901 = vsel %vm2885, %v2675, -1e+30
  %v2902 = vsel %vm2886, %v2676, -1e+30
  %v2903 = vsel %vm2887, %v2677, -1e+30
  %v2904 = vsel %vm2888, %v2678, -1e+30
  %v2905 = vsel %vm2889, %v2679, -1e+30
  %v2906 = vsel %vm2890, %v2680, -1e+30
  %v2907 = vsel %vm2891, %v2681, -1e+30
  %v2908 = vsel %vm2892, %v2682, -1e+30
  %v2909 = vsel %vm2893, %v2683, -1e+30
  %v2910 = vmax.f32 %v2894, %v2898
  %v2911 = vmax.f32 %v2895, %v2899
  %v2912 = vmax.f32 %v2896, %v2900
  %v2913 = vmax.f32 %v2897, %v2901
  %v2914 = vmax.f32 %v2910, %v2902
  %v2915 = vmax.f32 %v2911, %v2903
  %v2916 = vmax.f32 %v2912, %v2904
  %v2917 = vmax.f32 %v2913, %v2905
  %v2918 = vmax.f32 %v2914, %v2906
  %v2919 = vmax.f32 %v2915, %v2907
  %v2920 = vmax.f32 %v2916, %v2908
  %v2921 = vmax.f32 %v2917, %v2909
  %v2922 = vmax.f32 %v2918, %v2919
  %v2923 = vmax.f32 %v2920, %v2921
  %v2924 = vmax.f32 %v2922, %v2923
  %v2925 = vrot.slane %v2924, 4
  %v2926 = vmax.f32 %v2924, %v2925
  %v2927 = vrot.slane %v2926, 2
  %v2928 = vmax.f32 %v2926, %v2927
  %v2929 = vrot.slane %v2928, 1
  %v2930 = vmax.f32 %v2928, %v2929
  %2931 = vset.pattern.permute.xlu0 1
  %2932 = vperm.xlu0 %2931, %v2814
  %v2933 = vpop.permute.xlu0 %2932
  %2934 = vset.pattern.permute.xlu0 1
  %2935 = vperm.xlu0 %2934, %v2815
  %v2936 = vpop.permute.xlu0 %2935
  %2937 = vset.pattern.permute.xlu0 1
  %2938 = vperm.xlu0 %2937, %v2816
  %v2939 = vpop.permute.xlu0 %2938
  %2940 = vset.pattern.permute.xlu0 1
  %2941 = vperm.xlu0 %2940, %v2817
  %v2942 = vpop.permute.xlu0 %2941
  %2943 = vset.pattern.permute.xlu0 1
  %2944 = vperm.xlu0 %2943, %v2818
  %v2945 = vpop.permute.xlu0 %2944
  %2946 = vset.pattern.permute.xlu0 1
  %2947 = vperm.xlu0 %2946, %v2819
  %v2948 = vpop.permute.xlu0 %2947
  %2949 = vset.pattern.permute.xlu0 1
  %2950 = vperm.xlu0 %2949, %v2820
  %v2951 = vpop.permute.xlu0 %2950
  %2952 = vset.pattern.permute.xlu0 1
  %2953 = vperm.xlu0 %2952, %v2821
  %v2954 = vpop.permute.xlu0 %2953
  %2955 = vset.pattern.permute.xlu0 1
  %2956 = vperm.xlu0 %2955, %v2822
  %v2957 = vpop.permute.xlu0 %2956
  %2958 = vset.pattern.permute.xlu0 1
  %2959 = vperm.xlu0 %2958, %v2823
  %v2960 = vpop.permute.xlu0 %2959
  %2961 = vset.pattern.permute.xlu0 1
  %2962 = vperm.xlu0 %2961, %v2824
  %v2963 = vpop.permute.xlu0 %2962
  %2964 = vset.pattern.permute.xlu0 1
  %2965 = vperm.xlu0 %2964, %v2825
  %v2966 = vpop.permute.xlu0 %2965
  %2967 = vset.pattern.permute.xlu0 1
  %2968 = vperm.xlu0 %2967, %v2826
  %v2969 = vpop.permute.xlu0 %2968
  %2970 = vset.pattern.permute.xlu0 1
  %2971 = vperm.xlu0 %2970, %v2827
  %v2972 = vpop.permute.xlu0 %2971
  %2973 = vset.pattern.permute.xlu0 1
  %2974 = vperm.xlu0 %2973, %v2828
  %v2975 = vpop.permute.xlu0 %2974
  %2976 = vset.pattern.permute.xlu0 1
  %2977 = vperm.xlu0 %2976, %v2829
  %v2978 = vpop.permute.xlu0 %2977
  %vm2979 = vcmp.eq.s32.totalorder %v2933, 1
  %vm2980 = vcmp.eq.s32.totalorder %v2936, 1
  %vm2981 = vcmp.eq.s32.totalorder %v2939, 1
  %vm2982 = vcmp.eq.s32.totalorder %v2942, 1
  %vm2983 = vcmp.eq.s32.totalorder %v2945, 1
  %vm2984 = vcmp.eq.s32.totalorder %v2948, 1
  %vm2985 = vcmp.eq.s32.totalorder %v2951, 1
  %vm2986 = vcmp.eq.s32.totalorder %v2954, 1
  %vm2987 = vcmp.eq.s32.totalorder %v2957, 1
  %vm2988 = vcmp.eq.s32.totalorder %v2960, 1
  %vm2989 = vcmp.eq.s32.totalorder %v2963, 1
  %vm2990 = vcmp.eq.s32.totalorder %v2966, 1
  %vm2991 = vcmp.eq.s32.totalorder %v2969, 1
  %vm2992 = vcmp.eq.s32.totalorder %v2972, 1
  %vm2993 = vcmp.eq.s32.totalorder %v2975, 1
  %vm2994 = vcmp.eq.s32.totalorder %v2978, 1
  %v2995 = vsel %vm2979, %v2668, -1e+30
  %v2996 = vsel %vm2980, %v2669, -1e+30
  %v2997 = vsel %vm2981, %v2670, -1e+30
  %v2998 = vsel %vm2982, %v2671, -1e+30
  %v2999 = vsel %vm2983, %v2672, -1e+30
  %v3000 = vsel %vm2984, %v2673, -1e+30
  %v3001 = vsel %vm2985, %v2674, -1e+30
  %v3002 = vsel %vm2986, %v2675, -1e+30
  %v3003 = vsel %vm2987, %v2676, -1e+30
  %v3004 = vsel %vm2988, %v2677, -1e+30
  %v3005 = vsel %vm2989, %v2678, -1e+30
  %v3006 = vsel %vm2990, %v2679, -1e+30
  %v3007 = vsel %vm2991, %v2680, -1e+30
  %v3008 = vsel %vm2992, %v2681, -1e+30
  %v3009 = vsel %vm2993, %v2682, -1e+30
  %v3010 = vsel %vm2994, %v2683, -1e+30
  %v3011 = vmax.f32 %v2995, %v2999
  %v3012 = vmax.f32 %v2996, %v3000
  %v3013 = vmax.f32 %v2997, %v3001
  %v3014 = vmax.f32 %v2998, %v3002
  %v3015 = vmax.f32 %v3011, %v3003
  %v3016 = vmax.f32 %v3012, %v3004
  %v3017 = vmax.f32 %v3013, %v3005
  %v3018 = vmax.f32 %v3014, %v3006
  %v3019 = vmax.f32 %v3015, %v3007
  %v3020 = vmax.f32 %v3016, %v3008
  %v3021 = vmax.f32 %v3017, %v3009
  %v3022 = vmax.f32 %v3018, %v3010
  %v3023 = vmax.f32 %v3019, %v3020
  %v3024 = vmax.f32 %v3021, %v3022
  %v3025 = vmax.f32 %v3023, %v3024
  %v3026 = vrot.slane %v3025, 4
  %v3027 = vmax.f32 %v3025, %v3026
  %v3028 = vrot.slane %v3027, 2
  %v3029 = vmax.f32 %v3027, %v3028
  %v3030 = vrot.slane %v3029, 1
  %v3031 = vmax.f32 %v3029, %v3030
  %v3032 = vsel %vm1866, %v2930, %v3031
  %v3033 = vld [vmem:[%s11] sm:$0xf]
  %v3034 = vld [vmem:[%s11 + $0x4] sm:$0xf]
  %v3035 = vld [vmem:[%s11 + $0x8] sm:$0xf]
  %v3036 = vld [vmem:[%s11 + $0xc] sm:$0xf]
  %v3037 = vld [vmem:[%s11 + $0x10] sm:$0xf]
  %v3038 = vld [vmem:[%s11 + $0x14] sm:$0xf]
  %v3039 = vld [vmem:[%s11 + $0x18] sm:$0xf]
  %v3040 = vld [vmem:[%s11 + $0x1c] sm:$0xf]
  %v3041 = vld [vmem:[%s11 + $0x20] sm:$0xf]
  %v3042 = vld [vmem:[%s11 + $0x24] sm:$0xf]
  %v3043 = vld [vmem:[%s11 + $0x28] sm:$0xf]
  %v3044 = vld [vmem:[%s11 + $0x2c] sm:$0xf]
  %v3045 = vld [vmem:[%s11 + $0x30] sm:$0xf]
  %v3046 = vld [vmem:[%s11 + $0x34] sm:$0xf]
  %v3047 = vld [vmem:[%s11 + $0x38] sm:$0xf]
  %v3048 = vld [vmem:[%s11 + $0x3c] sm:$0xf]
  %v3049 = vld [vmem:[%s11 + $0x40] sm:$0xf]
  %v3050 = vld [vmem:[%s11 + $0x44] sm:$0xf]
  %v3051 = vld [vmem:[%s11 + $0x48] sm:$0xf]
  %v3052 = vld [vmem:[%s11 + $0x4c] sm:$0xf]
  %v3053 = vld [vmem:[%s11 + $0x50] sm:$0xf]
  %v3054 = vld [vmem:[%s11 + $0x54] sm:$0xf]
  %v3055 = vld [vmem:[%s11 + $0x58] sm:$0xf]
  %v3056 = vld [vmem:[%s11 + $0x5c] sm:$0xf]
  %v3057 = vld [vmem:[%s11 + $0x60] sm:$0xf]
  %v3058 = vld [vmem:[%s11 + $0x64] sm:$0xf]
  %v3059 = vld [vmem:[%s11 + $0x68] sm:$0xf]
  %v3060 = vld [vmem:[%s11 + $0x6c] sm:$0xf]
  %v3061 = vld [vmem:[%s11 + $0x70] sm:$0xf]
  %v3062 = vld [vmem:[%s11 + $0x74] sm:$0xf]
  %v3063 = vld [vmem:[%s11 + $0x78] sm:$0xf]
  %v3064 = vld [vmem:[%s11 + $0x7c] sm:$0xf]
  %v3065 = vld [vmem:[%s12] sm:$0x1]
  %3066 = vmatpush.bf16.msra.mxu0 %v2745
  %3067 = vmatpush.bf16.msra.mxu0 %v2744
  %3068 = vmatpush.bf16.msra.mxu0 %v2743
  %3069 = vmatpush.bf16.msra.mxu0 %v2742
  %3070 = vmatpush.bf16.msra.mxu0 %v2741
  %3071 = vmatpush.bf16.msra.mxu0 %v2740
  %3072 = vmatpush.bf16.msra.mxu0 %v2739
  %3073 = vmatpush.bf16.msra.mxu0 %v2738
  %3074 = vmatmul.bf16.gmra.mxu0 %v364
  %v3075 = vpop.f32.mrf.mxu0
  %v3076 = vadd.f32 0.0, %v3075
  %v3077 = vpop.f32.mrf.mxu0
  %v3078 = vadd.f32 0.0, %v3077
  %3079 = vmatmul.bf16.gmra.mxu0 %v365
  %v3080 = vpop.f32.mrf.mxu0
  %v3081 = vadd.f32 0.0, %v3080
  %v3082 = vpop.f32.mrf.mxu0
  %v3083 = vadd.f32 0.0, %v3082
  %3084 = vmatmul.bf16.gmra.mxu0 %v366
  %v3085 = vpop.f32.mrf.mxu0
  %v3086 = vadd.f32 0.0, %v3085
  %v3087 = vpop.f32.mrf.mxu0
  %v3088 = vadd.f32 0.0, %v3087
  %3089 = vmatmul.bf16.gmra.mxu0 %v367
  %v3090 = vpop.f32.mrf.mxu0
  %v3091 = vadd.f32 0.0, %v3090
  %v3092 = vpop.f32.mrf.mxu0
  %v3093 = vadd.f32 0.0, %v3092
  %3094 = vmatmul.bf16.gmra.mxu0 %v368
  %v3095 = vpop.f32.mrf.mxu0
  %v3096 = vadd.f32 0.0, %v3095
  %v3097 = vpop.f32.mrf.mxu0
  %v3098 = vadd.f32 0.0, %v3097
  %3099 = vmatmul.bf16.gmra.mxu0 %v369
  %v3100 = vpop.f32.mrf.mxu0
  %v3101 = vadd.f32 0.0, %v3100
  %v3102 = vpop.f32.mrf.mxu0
  %v3103 = vadd.f32 0.0, %v3102
  %3104 = vmatmul.bf16.gmra.mxu0 %v370
  %v3105 = vpop.f32.mrf.mxu0
  %v3106 = vadd.f32 0.0, %v3105
  %v3107 = vpop.f32.mrf.mxu0
  %v3108 = vadd.f32 0.0, %v3107
  %3109 = vmatmul.bf16.gmra.mxu0 %v371
  %v3110 = vpop.f32.mrf.mxu0
  %v3111 = vadd.f32 0.0, %v3110
  %v3112 = vpop.f32.mrf.mxu0
  %v3113 = vadd.f32 0.0, %v3112
  %3114 = vdwg.mxu0
  %v3115 = vpack.c.bf16 %v3076, %v3076
  %v3116 = vpack.c.bf16 %v3078, %v3078
  %v3117 = vpack.c.bf16 %v3081, %v3081
  %v3118 = vpack.c.bf16 %v3083, %v3083
  %v3119 = vpack.c.bf16 %v3086, %v3086
  %v3120 = vpack.c.bf16 %v3088, %v3088
  %v3121 = vpack.c.bf16 %v3091, %v3091
  %v3122 = vpack.c.bf16 %v3093, %v3093
  %v3123 = vpack.c.bf16 %v3096, %v3096
  %v3124 = vpack.c.bf16 %v3098, %v3098
  %v3125 = vpack.c.bf16 %v3101, %v3101
  %v3126 = vpack.c.bf16 %v3103, %v3103
  %v3127 = vpack.c.bf16 %v3106, %v3106
  %v3128 = vpack.c.bf16 %v3108, %v3108
  %v3129 = vpack.c.bf16 %v3111, %v3111
  %v3130 = vpack.c.bf16 %v3113, %v3113
  %v3147 = vunpack.c.l.b16 %v3115
  %v3148 = vunpack.c.l.b16 %v3116
  %v3149 = vunpack.c.l.b16 %v3117
  %v3150 = vunpack.c.l.b16 %v3118
  %v3151 = vunpack.c.l.b16 %v3119
  %v3152 = vunpack.c.l.b16 %v3120
  %v3153 = vunpack.c.l.b16 %v3121
  %v3154 = vunpack.c.l.b16 %v3122
  %v3155 = vunpack.c.l.b16 %v3123
  %v3156 = vunpack.c.l.b16 %v3124
  %v3157 = vunpack.c.l.b16 %v3125
  %v3158 = vunpack.c.l.b16 %v3126
  %v3159 = vunpack.c.l.b16 %v3127
  %v3160 = vunpack.c.l.b16 %v3128
  %v3161 = vunpack.c.l.b16 %v3129
  %v3162 = vunpack.c.l.b16 %v3130
  %v3163 = vpack.c.b16 %v3148, %v3147
  %v3164 = vpack.c.b16 %v3150, %v3149
  %v3165 = vpack.c.b16 %v3152, %v3151
  %v3166 = vpack.c.b16 %v3154, %v3153
  %v3167 = vpack.c.b16 %v3156, %v3155
  %v3168 = vpack.c.b16 %v3158, %v3157
  %v3169 = vpack.c.b16 %v3160, %v3159
  %v3170 = vpack.c.b16 %v3162, %v3161
  %v3180 = vperm.slane %v3065, 0
  %v3214 = vunpack.c.l.b16 %v3033
  %v3215 = vunpack.c.l.b16 %v3034
  %v3216 = vunpack.c.l.b16 %v3035
  %v3217 = vunpack.c.l.b16 %v3036
  %v3218 = vunpack.c.l.b16 %v3037
  %v3219 = vunpack.c.l.b16 %v3038
  %v3220 = vunpack.c.l.b16 %v3039
  %v3221 = vunpack.c.l.b16 %v3040
  %v3222 = vunpack.c.l.b16 %v3041
  %v3223 = vunpack.c.l.b16 %v3042
  %v3224 = vunpack.c.l.b16 %v3043
  %v3225 = vunpack.c.l.b16 %v3044
  %v3226 = vunpack.c.l.b16 %v3045
  %v3227 = vunpack.c.l.b16 %v3046
  %v3228 = vunpack.c.l.b16 %v3047
  %v3229 = vunpack.c.l.b16 %v3048
  %v3230 = vunpack.c.l.b16 %v3049
  %v3231 = vunpack.c.l.b16 %v3050
  %v3232 = vunpack.c.l.b16 %v3051
  %v3233 = vunpack.c.l.b16 %v3052
  %v3234 = vunpack.c.l.b16 %v3053
  %v3235 = vunpack.c.l.b16 %v3054
  %v3236 = vunpack.c.l.b16 %v3055
  %v3237 = vunpack.c.l.b16 %v3056
  %v3238 = vunpack.c.l.b16 %v3057
  %v3239 = vunpack.c.l.b16 %v3058
  %v3240 = vunpack.c.l.b16 %v3059
  %v3241 = vunpack.c.l.b16 %v3060
  %v3242 = vunpack.c.l.b16 %v3061
  %v3243 = vunpack.c.l.b16 %v3062
  %v3244 = vunpack.c.l.b16 %v3063
  %v3245 = vunpack.c.l.b16 %v3064
  %v3246 = vpack.c.b16 %v3215, %v3214
  %v3247 = vpack.c.b16 %v3217, %v3216
  %v3248 = vpack.c.b16 %v3219, %v3218
  %v3249 = vpack.c.b16 %v3221, %v3220
  %v3250 = vpack.c.b16 %v3223, %v3222
  %v3251 = vpack.c.b16 %v3225, %v3224
  %v3252 = vpack.c.b16 %v3227, %v3226
  %v3253 = vpack.c.b16 %v3229, %v3228
  %v3254 = vpack.c.b16 %v3231, %v3230
  %v3255 = vpack.c.b16 %v3233, %v3232
  %v3256 = vpack.c.b16 %v3235, %v3234
  %v3257 = vpack.c.b16 %v3237, %v3236
  %v3258 = vpack.c.b16 %v3239, %v3238
  %v3259 = vpack.c.b16 %v3241, %v3240
  %v3260 = vpack.c.b16 %v3243, %v3242
  %v3261 = vpack.c.b16 %v3245, %v3244
  %3278 = vmatpush.bf16.msra.mxu0 %v3253
  %3279 = vmatpush.bf16.msra.mxu0 %v3252
  %3280 = vmatpush.bf16.msra.mxu0 %v3251
  %3281 = vmatpush.bf16.msra.mxu0 %v3250
  %3282 = vmatpush.bf16.msra.mxu0 %v3249
  %3283 = vmatpush.bf16.msra.mxu0 %v3248
  %3284 = vmatpush.bf16.msra.mxu0 %v3247
  %3285 = vmatpush.bf16.msra.mxu0 %v3246
  %3286 = vmatmul.bf16.gmra.mxu0 %v3163
  %v3287 = vpop.f32.mrf.mxu0
  %v3288 = vadd.f32 %v3180, %v3287
  %v3289 = vpop.f32.mrf.mxu0
  %v3290 = vadd.f32 %v3180, %v3289
  %3291 = vmatmul.bf16.gmra.mxu0 %v3164
  %v3292 = vpop.f32.mrf.mxu0
  %v3293 = vadd.f32 %v3180, %v3292
  %v3294 = vpop.f32.mrf.mxu0
  %v3295 = vadd.f32 %v3180, %v3294
  %3296 = vmatmul.bf16.gmra.mxu0 %v3165
  %v3297 = vpop.f32.mrf.mxu0
  %v3298 = vadd.f32 %v3180, %v3297
  %v3299 = vpop.f32.mrf.mxu0
  %v3300 = vadd.f32 %v3180, %v3299
  %3301 = vmatmul.bf16.gmra.mxu0 %v3166
  %v3302 = vpop.f32.mrf.mxu0
  %v3303 = vadd.f32 %v3180, %v3302
  %v3304 = vpop.f32.mrf.mxu0
  %v3305 = vadd.f32 %v3180, %v3304
  %3306 = vmatmul.bf16.gmra.mxu0 %v3167
  %v3307 = vpop.f32.mrf.mxu0
  %v3308 = vadd.f32 %v3180, %v3307
  %v3309 = vpop.f32.mrf.mxu0
  %v3310 = vadd.f32 %v3180, %v3309
  %3311 = vmatmul.bf16.gmra.mxu0 %v3168
  %v3312 = vpop.f32.mrf.mxu0
  %v3313 = vadd.f32 %v3180, %v3312
  %v3314 = vpop.f32.mrf.mxu0
  %v3315 = vadd.f32 %v3180, %v3314
  %3316 = vmatmul.bf16.gmra.mxu0 %v3169
  %v3317 = vpop.f32.mrf.mxu0
  %v3318 = vadd.f32 %v3180, %v3317
  %v3319 = vpop.f32.mrf.mxu0
  %v3320 = vadd.f32 %v3180, %v3319
  %3321 = vmatmul.bf16.gmra.mxu0 %v3170
  %v3322 = vpop.f32.mrf.mxu0
  %v3323 = vadd.f32 %v3180, %v3322
  %v3324 = vpop.f32.mrf.mxu0
  %v3325 = vadd.f32 %v3180, %v3324
  %3326 = vdwg.mxu0
  %3327 = vmatpush.bf16.msra.mxu0 %v3261
  %3328 = vmatpush.bf16.msra.mxu0 %v3260
  %3329 = vmatpush.bf16.msra.mxu0 %v3259
  %3330 = vmatpush.bf16.msra.mxu0 %v3258
  %3331 = vmatpush.bf16.msra.mxu0 %v3257
  %3332 = vmatpush.bf16.msra.mxu0 %v3256
  %3333 = vmatpush.bf16.msra.mxu0 %v3255
  %3334 = vmatpush.bf16.msra.mxu0 %v3254
  %3335 = vmatmul.bf16.gmra.mxu0 %v2738
  %v3336 = vpop.f32.mrf.mxu0
  %v3337 = vadd.f32 %v3288, %v3336
  %v3338 = vpop.f32.mrf.mxu0
  %v3339 = vadd.f32 %v3290, %v3338
  %3340 = vmatmul.bf16.gmra.mxu0 %v2739
  %v3341 = vpop.f32.mrf.mxu0
  %v3342 = vadd.f32 %v3293, %v3341
  %v3343 = vpop.f32.mrf.mxu0
  %v3344 = vadd.f32 %v3295, %v3343
  %3345 = vmatmul.bf16.gmra.mxu0 %v2740
  %v3346 = vpop.f32.mrf.mxu0
  %v3347 = vadd.f32 %v3298, %v3346
  %v3348 = vpop.f32.mrf.mxu0
  %v3349 = vadd.f32 %v3300, %v3348
  %3350 = vmatmul.bf16.gmra.mxu0 %v2741
  %v3351 = vpop.f32.mrf.mxu0
  %v3352 = vadd.f32 %v3303, %v3351
  %v3353 = vpop.f32.mrf.mxu0
  %v3354 = vadd.f32 %v3305, %v3353
  %3355 = vmatmul.bf16.gmra.mxu0 %v2742
  %v3356 = vpop.f32.mrf.mxu0
  %v3357 = vadd.f32 %v3308, %v3356
  %v3358 = vpop.f32.mrf.mxu0
  %v3359 = vadd.f32 %v3310, %v3358
  %3360 = vmatmul.bf16.gmra.mxu0 %v2743
  %v3361 = vpop.f32.mrf.mxu0
  %v3362 = vadd.f32 %v3313, %v3361
  %v3363 = vpop.f32.mrf.mxu0
  %v3364 = vadd.f32 %v3315, %v3363
  %3365 = vmatmul.bf16.gmra.mxu0 %v2744
  %v3366 = vpop.f32.mrf.mxu0
  %v3367 = vadd.f32 %v3318, %v3366
  %v3368 = vpop.f32.mrf.mxu0
  %v3369 = vadd.f32 %v3320, %v3368
  %3370 = vmatmul.bf16.gmra.mxu0 %v2745
  %v3371 = vpop.f32.mrf.mxu0
  %v3372 = vadd.f32 %v3323, %v3371
  %v3373 = vpop.f32.mrf.mxu0
  %v3374 = vadd.f32 %v3325, %v3373
  %3375 = vdwg.mxu0
  %v3376 = vmax.f32 %v3337, 0.0
  %v3377 = vmax.f32 %v3339, 0.0
  %v3378 = vmax.f32 %v3342, 0.0
  %v3379 = vmax.f32 %v3344, 0.0
  %v3380 = vmax.f32 %v3347, 0.0
  %v3381 = vmax.f32 %v3349, 0.0
  %v3382 = vmax.f32 %v3352, 0.0
  %v3383 = vmax.f32 %v3354, 0.0
  %v3384 = vmax.f32 %v3357, 0.0
  %v3385 = vmax.f32 %v3359, 0.0
  %v3386 = vmax.f32 %v3362, 0.0
  %v3387 = vmax.f32 %v3364, 0.0
  %v3388 = vmax.f32 %v3367, 0.0
  %v3389 = vmax.f32 %v3369, 0.0
  %v3390 = vmax.f32 %v3372, 0.0
  %v3391 = vmax.f32 %v3374, 0.0
  %v3392 = vld [vmem:[%s13] sm:$0x1]
  %v3394 = vperm.slane %v3392, 0
  %v3396 = vmul.f32 %v3376, %v3394
  %v3397 = vmul.f32 %v3377, %v3394
  %v3398 = vmul.f32 %v3378, %v3394
  %v3399 = vmul.f32 %v3379, %v3394
  %v3400 = vmul.f32 %v3380, %v3394
  %v3401 = vmul.f32 %v3381, %v3394
  %v3402 = vmul.f32 %v3382, %v3394
  %v3403 = vmul.f32 %v3383, %v3394
  %v3404 = vmul.f32 %v3384, %v3394
  %v3405 = vmul.f32 %v3385, %v3394
  %v3406 = vmul.f32 %v3386, %v3394
  %v3407 = vmul.f32 %v3387, %v3394
  %v3408 = vmul.f32 %v3388, %v3394
  %v3409 = vmul.f32 %v3389, %v3394
  %v3410 = vmul.f32 %v3390, %v3394
  %v3411 = vmul.f32 %v3391, %v3394
  %3412 = vadd.xlane.f32.xlu0 %v3396
  %v3413 = vpop.xlane.xlu0 %3412
  %3414 = vadd.xlane.f32.xlu0 %v3397
  %v3415 = vpop.xlane.xlu0 %3414
  %3416 = vadd.xlane.f32.xlu0 %v3398
  %v3417 = vpop.xlane.xlu0 %3416
  %3418 = vadd.xlane.f32.xlu0 %v3399
  %v3419 = vpop.xlane.xlu0 %3418
  %3420 = vadd.xlane.f32.xlu0 %v3400
  %v3421 = vpop.xlane.xlu0 %3420
  %3422 = vadd.xlane.f32.xlu0 %v3401
  %v3423 = vpop.xlane.xlu0 %3422
  %3424 = vadd.xlane.f32.xlu0 %v3402
  %v3425 = vpop.xlane.xlu0 %3424
  %3426 = vadd.xlane.f32.xlu0 %v3403
  %v3427 = vpop.xlane.xlu0 %3426
  %3428 = vadd.xlane.f32.xlu0 %v3404
  %v3429 = vpop.xlane.xlu0 %3428
  %3430 = vadd.xlane.f32.xlu0 %v3405
  %v3431 = vpop.xlane.xlu0 %3430
  %3432 = vadd.xlane.f32.xlu0 %v3406
  %v3433 = vpop.xlane.xlu0 %3432
  %3434 = vadd.xlane.f32.xlu0 %v3407
  %v3435 = vpop.xlane.xlu0 %3434
  %3436 = vadd.xlane.f32.xlu0 %v3408
  %v3437 = vpop.xlane.xlu0 %3436
  %3438 = vadd.xlane.f32.xlu0 %v3409
  %v3439 = vpop.xlane.xlu0 %3438
  %3440 = vadd.xlane.f32.xlu0 %v3410
  %v3441 = vpop.xlane.xlu0 %3440
  %3442 = vadd.xlane.f32.xlu0 %v3411
  %v3443 = vpop.xlane.xlu0 %3442
  %3444 = vmatpush.xpose.msra.mxu0 %v3391
  %3445 = vmatpush.xpose.msra.mxu0 %v3390
  %3446 = vmatpush.xpose.msra.mxu0 %v3389
  %3447 = vmatpush.xpose.msra.mxu0 %v3388
  %3448 = vmatpush.xpose.msra.mxu0 %v3387
  %3449 = vmatpush.xpose.msra.mxu0 %v3386
  %3450 = vmatpush.xpose.msra.mxu0 %v3385
  %3451 = vmatpush.xpose.msra.mxu0 %v3384
  %3452 = vmatpush.xpose.msra.mxu0 %v3383
  %3453 = vmatpush.xpose.msra.mxu0 %v3382
  %3454 = vmatpush.xpose.msra.mxu0 %v3381
  %3455 = vmatpush.xpose.msra.mxu0 %v3380
  %3456 = vmatpush.xpose.msra.mxu0 %v3379
  %3457 = vmatpush.xpose.msra.mxu0 %v3378
  %3458 = vmatpush.xpose.msra.mxu0 %v3377
  %3459 = vmatpush.xpose.msra.mxu0 %v3376
  %3460 = vmatmul.f32.gmra.mxu0 %v3392
  %v3461 = vpop.f32.mrf.mxu0
  %v3462 = vadd.f32 0.0, %v3461
  %3463 = vdwg.mxu0
  %v3464 = vmul.f32 %v78, %v2635
  %v3465 = vmul.f32 %v79, %v2635
  %v3466 = vmul.f32 %v80, %v2635
  %v3467 = vmul.f32 %v81, %v2635
  %v3468 = vmul.f32 %v82, %v2635
  %v3469 = vmul.f32 %v83, %v2635
  %v3470 = vmul.f32 %v84, %v2635
  %v3471 = vmul.f32 %v85, %v2635
  %v3472 = vmul.f32 %v86, %v2635
  %v3473 = vmul.f32 %v87, %v2635
  %v3474 = vmul.f32 %v88, %v2635
  %v3475 = vmul.f32 %v89, %v2635
  %v3476 = vmul.f32 %v90, %v2635
  %v3477 = vmul.f32 %v91, %v2635
  %v3478 = vmul.f32 %v92, %v2635
  %v3479 = vmul.f32 %v93, %v2635
  %3480 = vadd.xlane.f32.xlu0 %v3464
  %v3481 = vpop.xlane.xlu0 %3480
  %3482 = vadd.xlane.f32.xlu0 %v3465
  %v3483 = vpop.xlane.xlu0 %3482
  %3484 = vadd.xlane.f32.xlu0 %v3466
  %v3485 = vpop.xlane.xlu0 %3484
  %3486 = vadd.xlane.f32.xlu0 %v3467
  %v3487 = vpop.xlane.xlu0 %3486
  %3488 = vadd.xlane.f32.xlu0 %v3468
  %v3489 = vpop.xlane.xlu0 %3488
  %3490 = vadd.xlane.f32.xlu0 %v3469
  %v3491 = vpop.xlane.xlu0 %3490
  %3492 = vadd.xlane.f32.xlu0 %v3470
  %v3493 = vpop.xlane.xlu0 %3492
  %3494 = vadd.xlane.f32.xlu0 %v3471
  %v3495 = vpop.xlane.xlu0 %3494
  %3496 = vadd.xlane.f32.xlu0 %v3472
  %v3497 = vpop.xlane.xlu0 %3496
  %3498 = vadd.xlane.f32.xlu0 %v3473
  %v3499 = vpop.xlane.xlu0 %3498
  %3500 = vadd.xlane.f32.xlu0 %v3474
  %v3501 = vpop.xlane.xlu0 %3500
  %3502 = vadd.xlane.f32.xlu0 %v3475
  %v3503 = vpop.xlane.xlu0 %3502
  %3504 = vadd.xlane.f32.xlu0 %v3476
  %v3505 = vpop.xlane.xlu0 %3504
  %3506 = vadd.xlane.f32.xlu0 %v3477
  %v3507 = vpop.xlane.xlu0 %3506
  %3508 = vadd.xlane.f32.xlu0 %v3478
  %v3509 = vpop.xlane.xlu0 %3508
  %3510 = vadd.xlane.f32.xlu0 %v3479
  %v3511 = vpop.xlane.xlu0 %3510
  %v3512 = vmul.f32 %v78, %v2616
  %v3513 = vmul.f32 %v79, %v2617
  %v3514 = vmul.f32 %v80, %v2618
  %v3515 = vmul.f32 %v81, %v2619
  %v3516 = vmul.f32 %v82, %v2620
  %v3517 = vmul.f32 %v83, %v2621
  %v3518 = vmul.f32 %v84, %v2622
  %v3519 = vmul.f32 %v85, %v2623
  %v3520 = vmul.f32 %v86, %v2624
  %v3521 = vmul.f32 %v87, %v2625
  %v3522 = vmul.f32 %v88, %v2626
  %v3523 = vmul.f32 %v89, %v2627
  %v3524 = vmul.f32 %v90, %v2628
  %v3525 = vmul.f32 %v91, %v2629
  %v3526 = vmul.f32 %v92, %v2630
  %v3527 = vmul.f32 %v93, %v2631
  %v3528 = vadd.f32 %v3512, %v3513
  %v3529 = vadd.f32 %v3528, %v3514
  %v3530 = vadd.f32 %v3529, %v3515
  %v3531 = vadd.f32 %v3530, %v3516
  %v3532 = vadd.f32 %v3531, %v3517
  %v3533 = vadd.f32 %v3532, %v3518
  %v3534 = vadd.f32 %v3533, %v3519
  %v3535 = vadd.f32 %v3534, %v3520
  %v3536 = vadd.f32 %v3535, %v3521
  %v3537 = vadd.f32 %v3536, %v3522
  %v3538 = vadd.f32 %v3537, %v3523
  %v3539 = vadd.f32 %v3538, %v3524
  %v3540 = vadd.f32 %v3539, %v3525
  %v3541 = vadd.f32 %v3540, %v3526
  %v3542 = vadd.f32 %v3541, %v3527
  %v3543 = vrot.slane %v3542, 4
  %v3544 = vadd.f32 %v3542, %v3543
  %v3545 = vrot.slane %v3544, 2
  %v3546 = vadd.f32 %v3544, %v3545
  %v3547 = vrot.slane %v3546, 1
  %v3548 = vadd.f32 %v3546, %v3547
  %v3549 = vmul.f32 %v3481, 0.9
  %v3550 = vmul.f32 %v3483, 0.9
  %v3551 = vmul.f32 %v3485, 0.9
  %v3552 = vmul.f32 %v3487, 0.9
  %v3553 = vmul.f32 %v3489, 0.9
  %v3554 = vmul.f32 %v3491, 0.9
  %v3555 = vmul.f32 %v3493, 0.9
  %v3556 = vmul.f32 %v3495, 0.9
  %v3557 = vmul.f32 %v3497, 0.9
  %v3558 = vmul.f32 %v3499, 0.9
  %v3559 = vmul.f32 %v3501, 0.9
  %v3560 = vmul.f32 %v3503, 0.9
  %v3561 = vmul.f32 %v3505, 0.9
  %v3562 = vmul.f32 %v3507, 0.9
  %v3563 = vmul.f32 %v3509, 0.9
  %v3564 = vmul.f32 %v3511, 0.9
  %v3565 = vceil.f32 %v3549
  %v3566 = vceil.f32 %v3550
  %v3567 = vceil.f32 %v3551
  %v3568 = vceil.f32 %v3552
  %v3569 = vceil.f32 %v3553
  %v3570 = vceil.f32 %v3554
  %v3571 = vceil.f32 %v3555
  %v3572 = vceil.f32 %v3556
  %v3573 = vceil.f32 %v3557
  %v3574 = vceil.f32 %v3558
  %v3575 = vceil.f32 %v3559
  %v3576 = vceil.f32 %v3560
  %v3577 = vceil.f32 %v3561
  %v3578 = vceil.f32 %v3562
  %v3579 = vceil.f32 %v3563
  %v3580 = vceil.f32 %v3564
  %v3581 = vmul.f32 %v3548, 0.9
  %v3582 = vceil.f32 %v3581
  %v3583 = vperm.slane %v3462, 0
  %vm3584 = vcmp.gt.f32.partialorder %v3583, %v3413
  %vm3585 = vcmp.gt.f32.partialorder %v3583, %v3415
  %vm3586 = vcmp.gt.f32.partialorder %v3583, %v3417
  %vm3587 = vcmp.gt.f32.partialorder %v3583, %v3419
  %vm3588 = vcmp.gt.f32.partialorder %v3583, %v3421
  %vm3589 = vcmp.gt.f32.partialorder %v3583, %v3423
  %vm3590 = vcmp.gt.f32.partialorder %v3583, %v3425
  %vm3591 = vcmp.gt.f32.partialorder %v3583, %v3427
  %vm3592 = vcmp.gt.f32.partialorder %v3583, %v3429
  %vm3593 = vcmp.gt.f32.partialorder %v3583, %v3431
  %vm3594 = vcmp.gt.f32.partialorder %v3583, %v3433
  %vm3595 = vcmp.gt.f32.partialorder %v3583, %v3435
  %vm3596 = vcmp.gt.f32.partialorder %v3583, %v3437
  %vm3597 = vcmp.gt.f32.partialorder %v3583, %v3439
  %vm3598 = vcmp.gt.f32.partialorder %v3583, %v3441
  %vm3599 = vcmp.gt.f32.partialorder %v3583, %v3443
  %v3600 = vmul.f32 %v178, %v2635
  %v3601 = vmul.f32 %v179, %v2635
  %v3602 = vmul.f32 %v180, %v2635
  %v3603 = vmul.f32 %v181, %v2635
  %v3604 = vmul.f32 %v182, %v2635
  %v3605 = vmul.f32 %v183, %v2635
  %v3606 = vmul.f32 %v184, %v2635
  %v3607 = vmul.f32 %v185, %v2635
  %v3608 = vmul.f32 %v186, %v2635
  %v3609 = vmul.f32 %v187, %v2635
  %v3610 = vmul.f32 %v188, %v2635
  %v3611 = vmul.f32 %v189, %v2635
  %v3612 = vmul.f32 %v190, %v2635
  %v3613 = vmul.f32 %v191, %v2635
  %v3614 = vmul.f32 %v192, %v2635
  %v3615 = vmul.f32 %v193, %v2635
  %v3616 = vsel %vm3584, %v3600, 0.0
  %v3617 = vsel %vm3585, %v3601, 0.0
  %v3618 = vsel %vm3586, %v3602, 0.0
  %v3619 = vsel %vm3587, %v3603, 0.0
  %v3620 = vsel %vm3588, %v3604, 0.0
  %v3621 = vsel %vm3589, %v3605, 0.0
  %v3622 = vsel %vm3590, %v3606, 0.0
  %v3623 = vsel %vm3591, %v3607, 0.0
  %v3624 = vsel %vm3592, %v3608, 0.0
  %v3625 = vsel %vm3593, %v3609, 0.0
  %v3626 = vsel %vm3594, %v3610, 0.0
  %v3627 = vsel %vm3595, %v3611, 0.0
  %v3628 = vsel %vm3596, %v3612, 0.0
  %v3629 = vsel %vm3597, %v3613, 0.0
  %v3630 = vsel %vm3598, %v3614, 0.0
  %v3631 = vsel %vm3599, %v3615, 0.0
  %3632 = vadd.xlane.f32.xlu0 %v3616
  %v3633 = vpop.xlane.xlu0 %3632
  %3634 = vadd.xlane.f32.xlu0 %v3617
  %v3635 = vpop.xlane.xlu0 %3634
  %3636 = vadd.xlane.f32.xlu0 %v3618
  %v3637 = vpop.xlane.xlu0 %3636
  %3638 = vadd.xlane.f32.xlu0 %v3619
  %v3639 = vpop.xlane.xlu0 %3638
  %3640 = vadd.xlane.f32.xlu0 %v3620
  %v3641 = vpop.xlane.xlu0 %3640
  %3642 = vadd.xlane.f32.xlu0 %v3621
  %v3643 = vpop.xlane.xlu0 %3642
  %3644 = vadd.xlane.f32.xlu0 %v3622
  %v3645 = vpop.xlane.xlu0 %3644
  %3646 = vadd.xlane.f32.xlu0 %v3623
  %v3647 = vpop.xlane.xlu0 %3646
  %3648 = vadd.xlane.f32.xlu0 %v3624
  %v3649 = vpop.xlane.xlu0 %3648
  %3650 = vadd.xlane.f32.xlu0 %v3625
  %v3651 = vpop.xlane.xlu0 %3650
  %3652 = vadd.xlane.f32.xlu0 %v3626
  %v3653 = vpop.xlane.xlu0 %3652
  %3654 = vadd.xlane.f32.xlu0 %v3627
  %v3655 = vpop.xlane.xlu0 %3654
  %3656 = vadd.xlane.f32.xlu0 %v3628
  %v3657 = vpop.xlane.xlu0 %3656
  %3658 = vadd.xlane.f32.xlu0 %v3629
  %v3659 = vpop.xlane.xlu0 %3658
  %3660 = vadd.xlane.f32.xlu0 %v3630
  %v3661 = vpop.xlane.xlu0 %3660
  %3662 = vadd.xlane.f32.xlu0 %v3631
  %v3663 = vpop.xlane.xlu0 %3662
  %vm3664 = vcmp.gt.f32.partialorder %v3413, %v3583
  %vm3665 = vcmp.gt.f32.partialorder %v3415, %v3583
  %vm3666 = vcmp.gt.f32.partialorder %v3417, %v3583
  %vm3667 = vcmp.gt.f32.partialorder %v3419, %v3583
  %vm3668 = vcmp.gt.f32.partialorder %v3421, %v3583
  %vm3669 = vcmp.gt.f32.partialorder %v3423, %v3583
  %vm3670 = vcmp.gt.f32.partialorder %v3425, %v3583
  %vm3671 = vcmp.gt.f32.partialorder %v3427, %v3583
  %vm3672 = vcmp.gt.f32.partialorder %v3429, %v3583
  %vm3673 = vcmp.gt.f32.partialorder %v3431, %v3583
  %vm3674 = vcmp.gt.f32.partialorder %v3433, %v3583
  %vm3675 = vcmp.gt.f32.partialorder %v3435, %v3583
  %vm3676 = vcmp.gt.f32.partialorder %v3437, %v3583
  %vm3677 = vcmp.gt.f32.partialorder %v3439, %v3583
  %vm3678 = vcmp.gt.f32.partialorder %v3441, %v3583
  %vm3679 = vcmp.gt.f32.partialorder %v3443, %v3583
  %v3680 = vmul.f32 %v178, %v2616
  %v3681 = vmul.f32 %v179, %v2617
  %v3682 = vmul.f32 %v180, %v2618
  %v3683 = vmul.f32 %v181, %v2619
  %v3684 = vmul.f32 %v182, %v2620
  %v3685 = vmul.f32 %v183, %v2621
  %v3686 = vmul.f32 %v184, %v2622
  %v3687 = vmul.f32 %v185, %v2623
  %v3688 = vmul.f32 %v186, %v2624
  %v3689 = vmul.f32 %v187, %v2625
  %v3690 = vmul.f32 %v188, %v2626
  %v3691 = vmul.f32 %v189, %v2627
  %v3692 = vmul.f32 %v190, %v2628
  %v3693 = vmul.f32 %v191, %v2629
  %v3694 = vmul.f32 %v192, %v2630
  %v3695 = vmul.f32 %v193, %v2631
  %v3696 = vsel %vm3664, %v3680, 0.0
  %v3697 = vsel %vm3665, %v3681, 0.0
  %v3698 = vsel %vm3666, %v3682, 0.0
  %v3699 = vsel %vm3667, %v3683, 0.0
  %v3700 = vsel %vm3668, %v3684, 0.0
  %v3701 = vsel %vm3669, %v3685, 0.0
  %v3702 = vsel %vm3670, %v3686, 0.0
  %v3703 = vsel %vm3671, %v3687, 0.0
  %v3704 = vsel %vm3672, %v3688, 0.0
  %v3705 = vsel %vm3673, %v3689, 0.0
  %v3706 = vsel %vm3674, %v3690, 0.0
  %v3707 = vsel %vm3675, %v3691, 0.0
  %v3708 = vsel %vm3676, %v3692, 0.0
  %v3709 = vsel %vm3677, %v3693, 0.0
  %v3710 = vsel %vm3678, %v3694, 0.0
  %v3711 = vsel %vm3679, %v3695, 0.0
  %v3712 = vadd.f32 %v3696, %v3697
  %v3713 = vadd.f32 %v3712, %v3698
  %v3714 = vadd.f32 %v3713, %v3699
  %v3715 = vadd.f32 %v3714, %v3700
  %v3716 = vadd.f32 %v3715, %v3701
  %v3717 = vadd.f32 %v3716, %v3702
  %v3718 = vadd.f32 %v3717, %v3703
  %v3719 = vadd.f32 %v3718, %v3704
  %v3720 = vadd.f32 %v3719, %v3705
  %v3721 = vadd.f32 %v3720, %v3706
  %v3722 = vadd.f32 %v3721, %v3707
  %v3723 = vadd.f32 %v3722, %v3708
  %v3724 = vadd.f32 %v3723, %v3709
  %v3725 = vadd.f32 %v3724, %v3710
  %v3726 = vadd.f32 %v3725, %v3711
  %v3727 = vrot.slane %v3726, 4
  %v3728 = vadd.f32 %v3726, %v3727
  %v3729 = vrot.slane %v3728, 2
  %v3730 = vadd.f32 %v3728, %v3729
  %v3731 = vrot.slane %v3730, 1
  %v3732 = vadd.f32 %v3730, %v3731
  %vm3733 = vcmp.lt.f32.partialorder %v3633, %v3565
  %vm3734 = vcmp.lt.f32.partialorder %v3635, %v3566
  %vm3735 = vcmp.lt.f32.partialorder %v3637, %v3567
  %vm3736 = vcmp.lt.f32.partialorder %v3639, %v3568
  %vm3737 = vcmp.lt.f32.partialorder %v3641, %v3569
  %vm3738 = vcmp.lt.f32.partialorder %v3643, %v3570
  %vm3739 = vcmp.lt.f32.partialorder %v3645, %v3571
  %vm3740 = vcmp.lt.f32.partialorder %v3647, %v3572
  %vm3741 = vcmp.lt.f32.partialorder %v3649, %v3573
  %vm3742 = vcmp.lt.f32.partialorder %v3651, %v3574
  %vm3743 = vcmp.lt.f32.partialorder %v3653, %v3575
  %vm3744 = vcmp.lt.f32.partialorder %v3655, %v3576
  %vm3745 = vcmp.lt.f32.partialorder %v3657, %v3577
  %vm3746 = vcmp.lt.f32.partialorder %v3659, %v3578
  %vm3747 = vcmp.lt.f32.partialorder %v3661, %v3579
  %vm3748 = vcmp.lt.f32.partialorder %v3663, %v3580
  %vm3749 = vcmp.gt.f32.partialorder %v2616, 0.5
  %vm3750 = vcmp.gt.f32.partialorder %v2617, 0.5
  %vm3751 = vcmp.gt.f32.partialorder %v2618, 0.5
  %vm3752 = vcmp.gt.f32.partialorder %v2619, 0.5
  %vm3753 = vcmp.gt.f32.partialorder %v2620, 0.5
  %vm3754 = vcmp.gt.f32.partialorder %v2621, 0.5
  %vm3755 = vcmp.gt.f32.partialorder %v2622, 0.5
  %vm3756 = vcmp.gt.f32.partialorder %v2623, 0.5
  %vm3757 = vcmp.gt.f32.partialorder %v2624, 0.5
  %vm3758 = vcmp.gt.f32.partialorder %v2625, 0.5
  %vm3759 = vcmp.gt.f32.partialorder %v2626, 0.5
  %vm3760 = vcmp.gt.f32.partialorder %v2627, 0.5
  %vm3761 = vcmp.gt.f32.partialorder %v2628, 0.5
  %vm3762 = vcmp.gt.f32.partialorder %v2629, 0.5
  %vm3763 = vcmp.gt.f32.partialorder %v2630, 0.5
  %vm3764 = vcmp.gt.f32.partialorder %v2631, 0.5
  %vm3765 = vmand %vm3733, %vm3749
  %vm3766 = vmand %vm3734, %vm3750
  %vm3767 = vmand %vm3735, %vm3751
  %vm3768 = vmand %vm3736, %vm3752
  %vm3769 = vmand %vm3737, %vm3753
  %vm3770 = vmand %vm3738, %vm3754
  %vm3771 = vmand %vm3739, %vm3755
  %vm3772 = vmand %vm3740, %vm3756
  %vm3773 = vmand %vm3741, %vm3757
  %vm3774 = vmand %vm3742, %vm3758
  %vm3775 = vmand %vm3743, %vm3759
  %vm3776 = vmand %vm3744, %vm3760
  %vm3777 = vmand %vm3745, %vm3761
  %vm3778 = vmand %vm3746, %vm3762
  %vm3779 = vmand %vm3747, %vm3763
  %vm3780 = vmand %vm3748, %vm3764
  %v3781 = vsel %vm3765, 1.0, 0.0
  %v3782 = vsel %vm3766, 1.0, 0.0
  %v3783 = vsel %vm3767, 1.0, 0.0
  %v3784 = vsel %vm3768, 1.0, 0.0
  %v3785 = vsel %vm3769, 1.0, 0.0
  %v3786 = vsel %vm3770, 1.0, 0.0
  %v3787 = vsel %vm3771, 1.0, 0.0
  %v3788 = vsel %vm3772, 1.0, 0.0
  %v3789 = vsel %vm3773, 1.0, 0.0
  %v3790 = vsel %vm3774, 1.0, 0.0
  %v3791 = vsel %vm3775, 1.0, 0.0
  %v3792 = vsel %vm3776, 1.0, 0.0
  %v3793 = vsel %vm3777, 1.0, 0.0
  %v3794 = vsel %vm3778, 1.0, 0.0
  %v3795 = vsel %vm3779, 1.0, 0.0
  %v3796 = vsel %vm3780, 1.0, 0.0
  %vm3797 = vcmp.lt.f32.partialorder %v3732, %v3582
  %vm3798 = vcmp.gt.f32.partialorder %v2635, 0.5
  %vm3799 = vmand %vm3797, %vm3798
  %v3800 = vsel %vm3799, 1.0, 0.0
  %v3801 = vtanh.pop %v3413
  %v3802 = vtanh.pop %v3415
  %v3803 = vtanh.pop %v3417
  %v3804 = vtanh.pop %v3419
  %v3805 = vtanh.pop %v3421
  %v3806 = vtanh.pop %v3423
  %v3807 = vtanh.pop %v3425
  %v3808 = vtanh.pop %v3427
  %v3809 = vtanh.pop %v3429
  %v3810 = vtanh.pop %v3431
  %v3811 = vtanh.pop %v3433
  %v3812 = vtanh.pop %v3435
  %v3813 = vtanh.pop %v3437
  %v3814 = vtanh.pop %v3439
  %v3815 = vtanh.pop %v3441
  %v3816 = vtanh.pop %v3443
  %v3817 = vmul.f32 %v3801, %v3781
  %v3818 = vmul.f32 %v3802, %v3782
  %v3819 = vmul.f32 %v3803, %v3783
  %v3820 = vmul.f32 %v3804, %v3784
  %v3821 = vmul.f32 %v3805, %v3785
  %v3822 = vmul.f32 %v3806, %v3786
  %v3823 = vmul.f32 %v3807, %v3787
  %v3824 = vmul.f32 %v3808, %v3788
  %v3825 = vmul.f32 %v3809, %v3789
  %v3826 = vmul.f32 %v3810, %v3790
  %v3827 = vmul.f32 %v3811, %v3791
  %v3828 = vmul.f32 %v3812, %v3792
  %v3829 = vmul.f32 %v3813, %v3793
  %v3830 = vmul.f32 %v3814, %v3794
  %v3831 = vmul.f32 %v3815, %v3795
  %v3832 = vmul.f32 %v3816, %v3796
  %v3833 = vmul.f32 %v3376, %v3817
  %v3834 = vmul.f32 %v3377, %v3818
  %v3835 = vmul.f32 %v3378, %v3819
  %v3836 = vmul.f32 %v3379, %v3820
  %v3837 = vmul.f32 %v3380, %v3821
  %v3838 = vmul.f32 %v3381, %v3822
  %v3839 = vmul.f32 %v3382, %v3823
  %v3840 = vmul.f32 %v3383, %v3824
  %v3841 = vmul.f32 %v3384, %v3825
  %v3842 = vmul.f32 %v3385, %v3826
  %v3843 = vmul.f32 %v3386, %v3827
  %v3844 = vmul.f32 %v3387, %v3828
  %v3845 = vmul.f32 %v3388, %v3829
  %v3846 = vmul.f32 %v3389, %v3830
  %v3847 = vmul.f32 %v3390, %v3831
  %v3848 = vmul.f32 %v3391, %v3832
  %v3849 = vpack.c.bf16 %v3834, %v3833
  %v3850 = vpack.c.bf16 %v3836, %v3835
  %v3851 = vpack.c.bf16 %v3838, %v3837
  %v3852 = vpack.c.bf16 %v3840, %v3839
  %v3853 = vpack.c.bf16 %v3842, %v3841
  %v3854 = vpack.c.bf16 %v3844, %v3843
  %v3855 = vpack.c.bf16 %v3846, %v3845
  %v3856 = vpack.c.bf16 %v3848, %v3847
  %v3857 = vmul.f32 %v94, %v3800
  %v3858 = vsel %vm194, %v3857, 0.0
  %3859 = vadd.xlane.f32.xlu0 %v3858
  %v3860 = vpop.xlane.xlu0 %3859
  %v3861 = vmax.f32 %v3860, 1.0
  %v3862 = vpack.c.bf16 %v3857, %v3857
  %3863 = vmatpush.bf16.msra.mxu0 %v3856
  %3864 = vmatpush.bf16.msra.mxu0 %v3855
  %3865 = vmatpush.bf16.msra.mxu0 %v3854
  %3866 = vmatpush.bf16.msra.mxu0 %v3853
  %3867 = vmatpush.bf16.msra.mxu0 %v3852
  %3868 = vmatpush.bf16.msra.mxu0 %v3851
  %3869 = vmatpush.bf16.msra.mxu0 %v3850
  %3870 = vmatpush.bf16.msra.mxu0 %v3849
  %3871 = vmatmul.bf16.gmra.mxu0 %v3862
  %v3872 = vpop.f32.mrf.mxu0
  %v3873 = vadd.f32 0.0, %v3872
  %v3874 = vpop.f32.mrf.mxu0
  %3875 = vdwg.mxu0
  %v3876 = vrcp.pop %v3861
  %v3877 = vmul.f32 %v3861, %v3876
  %v3878 = vsub.f32 1.0, %v3877
  %v3879 = vmul.f32 %v3876, %v3878
  %v3880 = vadd.f32 %v3876, %v3879
  %vm3881 = vweird.f32 %v3861
  %vm3882 = vweird.f32 %v3876
  %vm3883 = vmor %vm3881, %vm3882
  %v3884 = vsel %vm3883, %v3876, %v3880
  %v3885 = vand.u32 2147483647, %v3861
  %vm3886 = vcmp.eq.f32.partialorder %v3885, 8.507059e+37
  %v3887 = vand.u32 %v3861, 2147483648
  %v3888 = vor.u32 1.1754944e-38, %v3887
  %v3889 = vsel %vm3886, %v3888, %v3884
  %v3890 = vmul.f32 %v3873, %v3889
  %v3891 = vmul.f32 %v95, %v3781
  %v3892 = vmul.f32 %v96, %v3782
  %v3893 = vmul.f32 %v97, %v3783
  %v3894 = vmul.f32 %v98, %v3784
  %v3895 = vmul.f32 %v99, %v3785
  %v3896 = vmul.f32 %v100, %v3786
  %v3897 = vmul.f32 %v101, %v3787
  %v3898 = vmul.f32 %v102, %v3788
  %v3899 = vmul.f32 %v103, %v3789
  %v3900 = vmul.f32 %v104, %v3790
  %v3901 = vmul.f32 %v105, %v3791
  %v3902 = vmul.f32 %v106, %v3792
  %v3903 = vmul.f32 %v107, %v3793
  %v3904 = vmul.f32 %v108, %v3794
  %v3905 = vmul.f32 %v109, %v3795
  %v3906 = vmul.f32 %v110, %v3796
  %vm3907 = vcmp.gt.f32.partialorder %v3891, 0.5
  %vm3908 = vcmp.gt.f32.partialorder %v3892, 0.5
  %vm3909 = vcmp.gt.f32.partialorder %v3893, 0.5
  %vm3910 = vcmp.gt.f32.partialorder %v3894, 0.5
  %vm3911 = vcmp.gt.f32.partialorder %v3895, 0.5
  %vm3912 = vcmp.gt.f32.partialorder %v3896, 0.5
  %vm3913 = vcmp.gt.f32.partialorder %v3897, 0.5
  %vm3914 = vcmp.gt.f32.partialorder %v3898, 0.5
  %vm3915 = vcmp.gt.f32.partialorder %v3899, 0.5
  %vm3916 = vcmp.gt.f32.partialorder %v3900, 0.5
  %vm3917 = vcmp.gt.f32.partialorder %v3901, 0.5
  %vm3918 = vcmp.gt.f32.partialorder %v3902, 0.5
  %vm3919 = vcmp.gt.f32.partialorder %v3903, 0.5
  %vm3920 = vcmp.gt.f32.partialorder %v3904, 0.5
  %vm3921 = vcmp.gt.f32.partialorder %v3905, 0.5
  %vm3922 = vcmp.gt.f32.partialorder %v3906, 0.5
  %v3923 = vsel %vm3907, 1, 0
  %v3924 = vsel %vm3908, 1, 0
  %v3925 = vsel %vm3909, 1, 0
  %v3926 = vsel %vm3910, 1, 0
  %v3927 = vsel %vm3911, 1, 0
  %v3928 = vsel %vm3912, 1, 0
  %v3929 = vsel %vm3913, 1, 0
  %v3930 = vsel %vm3914, 1, 0
  %v3931 = vsel %vm3915, 1, 0
  %v3932 = vsel %vm3916, 1, 0
  %v3933 = vsel %vm3917, 1, 0
  %v3934 = vsel %vm3918, 1, 0
  %v3935 = vsel %vm3919, 1, 0
  %v3936 = vsel %vm3920, 1, 0
  %v3937 = vsel %vm3921, 1, 0
  %v3938 = vsel %vm3922, 1, 0
  %3939 = vset.pattern.permute.xlu0 0
  %3940 = vperm.xlu0 %3939, %v3923
  %v3941 = vpop.permute.xlu0 %3940
  %3942 = vset.pattern.permute.xlu0 0
  %3943 = vperm.xlu0 %3942, %v3924
  %v3944 = vpop.permute.xlu0 %3943
  %3945 = vset.pattern.permute.xlu0 0
  %3946 = vperm.xlu0 %3945, %v3925
  %v3947 = vpop.permute.xlu0 %3946
  %3948 = vset.pattern.permute.xlu0 0
  %3949 = vperm.xlu0 %3948, %v3926
  %v3950 = vpop.permute.xlu0 %3949
  %3951 = vset.pattern.permute.xlu0 0
  %3952 = vperm.xlu0 %3951, %v3927
  %v3953 = vpop.permute.xlu0 %3952
  %3954 = vset.pattern.permute.xlu0 0
  %3955 = vperm.xlu0 %3954, %v3928
  %v3956 = vpop.permute.xlu0 %3955
  %3957 = vset.pattern.permute.xlu0 0
  %3958 = vperm.xlu0 %3957, %v3929
  %v3959 = vpop.permute.xlu0 %3958
  %3960 = vset.pattern.permute.xlu0 0
  %3961 = vperm.xlu0 %3960, %v3930
  %v3962 = vpop.permute.xlu0 %3961
  %3963 = vset.pattern.permute.xlu0 0
  %3964 = vperm.xlu0 %3963, %v3931
  %v3965 = vpop.permute.xlu0 %3964
  %3966 = vset.pattern.permute.xlu0 0
  %3967 = vperm.xlu0 %3966, %v3932
  %v3968 = vpop.permute.xlu0 %3967
  %3969 = vset.pattern.permute.xlu0 0
  %3970 = vperm.xlu0 %3969, %v3933
  %v3971 = vpop.permute.xlu0 %3970
  %3972 = vset.pattern.permute.xlu0 0
  %3973 = vperm.xlu0 %3972, %v3934
  %v3974 = vpop.permute.xlu0 %3973
  %3975 = vset.pattern.permute.xlu0 0
  %3976 = vperm.xlu0 %3975, %v3935
  %v3977 = vpop.permute.xlu0 %3976
  %3978 = vset.pattern.permute.xlu0 0
  %3979 = vperm.xlu0 %3978, %v3936
  %v3980 = vpop.permute.xlu0 %3979
  %3981 = vset.pattern.permute.xlu0 0
  %3982 = vperm.xlu0 %3981, %v3937
  %v3983 = vpop.permute.xlu0 %3982
  %3984 = vset.pattern.permute.xlu0 0
  %3985 = vperm.xlu0 %3984, %v3938
  %v3986 = vpop.permute.xlu0 %3985
  %vm3987 = vcmp.eq.s32.totalorder %v3941, 1
  %vm3988 = vcmp.eq.s32.totalorder %v3944, 1
  %vm3989 = vcmp.eq.s32.totalorder %v3947, 1
  %vm3990 = vcmp.eq.s32.totalorder %v3950, 1
  %vm3991 = vcmp.eq.s32.totalorder %v3953, 1
  %vm3992 = vcmp.eq.s32.totalorder %v3956, 1
  %vm3993 = vcmp.eq.s32.totalorder %v3959, 1
  %vm3994 = vcmp.eq.s32.totalorder %v3962, 1
  %vm3995 = vcmp.eq.s32.totalorder %v3965, 1
  %vm3996 = vcmp.eq.s32.totalorder %v3968, 1
  %vm3997 = vcmp.eq.s32.totalorder %v3971, 1
  %vm3998 = vcmp.eq.s32.totalorder %v3974, 1
  %vm3999 = vcmp.eq.s32.totalorder %v3977, 1
  %vm4000 = vcmp.eq.s32.totalorder %v3980, 1
  %vm4001 = vcmp.eq.s32.totalorder %v3983, 1
  %vm4002 = vcmp.eq.s32.totalorder %v3986, 1
  %v4003 = vsel %vm3987, %v3833, -1e+30
  %v4004 = vsel %vm3988, %v3834, -1e+30
  %v4005 = vsel %vm3989, %v3835, -1e+30
  %v4006 = vsel %vm3990, %v3836, -1e+30
  %v4007 = vsel %vm3991, %v3837, -1e+30
  %v4008 = vsel %vm3992, %v3838, -1e+30
  %v4009 = vsel %vm3993, %v3839, -1e+30
  %v4010 = vsel %vm3994, %v3840, -1e+30
  %v4011 = vsel %vm3995, %v3841, -1e+30
  %v4012 = vsel %vm3996, %v3842, -1e+30
  %v4013 = vsel %vm3997, %v3843, -1e+30
  %v4014 = vsel %vm3998, %v3844, -1e+30
  %v4015 = vsel %vm3999, %v3845, -1e+30
  %v4016 = vsel %vm4000, %v3846, -1e+30
  %v4017 = vsel %vm4001, %v3847, -1e+30
  %v4018 = vsel %vm4002, %v3848, -1e+30
  %v4019 = vmax.f32 %v4003, %v4007
  %v4020 = vmax.f32 %v4004, %v4008
  %v4021 = vmax.f32 %v4005, %v4009
  %v4022 = vmax.f32 %v4006, %v4010
  %v4023 = vmax.f32 %v4019, %v4011
  %v4024 = vmax.f32 %v4020, %v4012
  %v4025 = vmax.f32 %v4021, %v4013
  %v4026 = vmax.f32 %v4022, %v4014
  %v4027 = vmax.f32 %v4023, %v4015
  %v4028 = vmax.f32 %v4024, %v4016
  %v4029 = vmax.f32 %v4025, %v4017
  %v4030 = vmax.f32 %v4026, %v4018
  %v4031 = vmax.f32 %v4027, %v4028
  %v4032 = vmax.f32 %v4029, %v4030
  %v4033 = vmax.f32 %v4031, %v4032
  %v4034 = vrot.slane %v4033, 4
  %v4035 = vmax.f32 %v4033, %v4034
  %v4036 = vrot.slane %v4035, 2
  %v4037 = vmax.f32 %v4035, %v4036
  %v4038 = vrot.slane %v4037, 1
  %v4039 = vmax.f32 %v4037, %v4038
  %4040 = vset.pattern.permute.xlu0 1
  %4041 = vperm.xlu0 %4040, %v3923
  %v4042 = vpop.permute.xlu0 %4041
  %4043 = vset.pattern.permute.xlu0 1
  %4044 = vperm.xlu0 %4043, %v3924
  %v4045 = vpop.permute.xlu0 %4044
  %4046 = vset.pattern.permute.xlu0 1
  %4047 = vperm.xlu0 %4046, %v3925
  %v4048 = vpop.permute.xlu0 %4047
  %4049 = vset.pattern.permute.xlu0 1
  %4050 = vperm.xlu0 %4049, %v3926
  %v4051 = vpop.permute.xlu0 %4050
  %4052 = vset.pattern.permute.xlu0 1
  %4053 = vperm.xlu0 %4052, %v3927
  %v4054 = vpop.permute.xlu0 %4053
  %4055 = vset.pattern.permute.xlu0 1
  %4056 = vperm.xlu0 %4055, %v3928
  %v4057 = vpop.permute.xlu0 %4056
  %4058 = vset.pattern.permute.xlu0 1
  %4059 = vperm.xlu0 %4058, %v3929
  %v4060 = vpop.permute.xlu0 %4059
  %4061 = vset.pattern.permute.xlu0 1
  %4062 = vperm.xlu0 %4061, %v3930
  %v4063 = vpop.permute.xlu0 %4062
  %4064 = vset.pattern.permute.xlu0 1
  %4065 = vperm.xlu0 %4064, %v3931
  %v4066 = vpop.permute.xlu0 %4065
  %4067 = vset.pattern.permute.xlu0 1
  %4068 = vperm.xlu0 %4067, %v3932
  %v4069 = vpop.permute.xlu0 %4068
  %4070 = vset.pattern.permute.xlu0 1
  %4071 = vperm.xlu0 %4070, %v3933
  %v4072 = vpop.permute.xlu0 %4071
  %4073 = vset.pattern.permute.xlu0 1
  %4074 = vperm.xlu0 %4073, %v3934
  %v4075 = vpop.permute.xlu0 %4074
  %4076 = vset.pattern.permute.xlu0 1
  %4077 = vperm.xlu0 %4076, %v3935
  %v4078 = vpop.permute.xlu0 %4077
  %4079 = vset.pattern.permute.xlu0 1
  %4080 = vperm.xlu0 %4079, %v3936
  %v4081 = vpop.permute.xlu0 %4080
  %4082 = vset.pattern.permute.xlu0 1
  %4083 = vperm.xlu0 %4082, %v3937
  %v4084 = vpop.permute.xlu0 %4083
  %4085 = vset.pattern.permute.xlu0 1
  %4086 = vperm.xlu0 %4085, %v3938
  %v4087 = vpop.permute.xlu0 %4086
  %vm4088 = vcmp.eq.s32.totalorder %v4042, 1
  %vm4089 = vcmp.eq.s32.totalorder %v4045, 1
  %vm4090 = vcmp.eq.s32.totalorder %v4048, 1
  %vm4091 = vcmp.eq.s32.totalorder %v4051, 1
  %vm4092 = vcmp.eq.s32.totalorder %v4054, 1
  %vm4093 = vcmp.eq.s32.totalorder %v4057, 1
  %vm4094 = vcmp.eq.s32.totalorder %v4060, 1
  %vm4095 = vcmp.eq.s32.totalorder %v4063, 1
  %vm4096 = vcmp.eq.s32.totalorder %v4066, 1
  %vm4097 = vcmp.eq.s32.totalorder %v4069, 1
  %vm4098 = vcmp.eq.s32.totalorder %v4072, 1
  %vm4099 = vcmp.eq.s32.totalorder %v4075, 1
  %vm4100 = vcmp.eq.s32.totalorder %v4078, 1
  %vm4101 = vcmp.eq.s32.totalorder %v4081, 1
  %vm4102 = vcmp.eq.s32.totalorder %v4084, 1
  %vm4103 = vcmp.eq.s32.totalorder %v4087, 1
  %v4104 = vsel %vm4088, %v3833, -1e+30
  %v4105 = vsel %vm4089, %v3834, -1e+30
  %v4106 = vsel %vm4090, %v3835, -1e+30
  %v4107 = vsel %vm4091, %v3836, -1e+30
  %v4108 = vsel %vm4092, %v3837, -1e+30
  %v4109 = vsel %vm4093, %v3838, -1e+30
  %v4110 = vsel %vm4094, %v3839, -1e+30
  %v4111 = vsel %vm4095, %v3840, -1e+30
  %v4112 = vsel %vm4096, %v3841, -1e+30
  %v4113 = vsel %vm4097, %v3842, -1e+30
  %v4114 = vsel %vm4098, %v3843, -1e+30
  %v4115 = vsel %vm4099, %v3844, -1e+30
  %v4116 = vsel %vm4100, %v3845, -1e+30
  %v4117 = vsel %vm4101, %v3846, -1e+30
  %v4118 = vsel %vm4102, %v3847, -1e+30
  %v4119 = vsel %vm4103, %v3848, -1e+30
  %v4120 = vmax.f32 %v4104, %v4108
  %v4121 = vmax.f32 %v4105, %v4109
  %v4122 = vmax.f32 %v4106, %v4110
  %v4123 = vmax.f32 %v4107, %v4111
  %v4124 = vmax.f32 %v4120, %v4112
  %v4125 = vmax.f32 %v4121, %v4113
  %v4126 = vmax.f32 %v4122, %v4114
  %v4127 = vmax.f32 %v4123, %v4115
  %v4128 = vmax.f32 %v4124, %v4116
  %v4129 = vmax.f32 %v4125, %v4117
  %v4130 = vmax.f32 %v4126, %v4118
  %v4131 = vmax.f32 %v4127, %v4119
  %v4132 = vmax.f32 %v4128, %v4129
  %v4133 = vmax.f32 %v4130, %v4131
  %v4134 = vmax.f32 %v4132, %v4133
  %v4135 = vrot.slane %v4134, 4
  %v4136 = vmax.f32 %v4134, %v4135
  %v4137 = vrot.slane %v4136, 2
  %v4138 = vmax.f32 %v4136, %v4137
  %v4139 = vrot.slane %v4138, 1
  %v4140 = vmax.f32 %v4138, %v4139
  %v4141 = vsel %vm1866, %v4039, %v4140
  %v4142 = vadd.f32 %v1867, %v3032
  %v4143 = vadd.f32 %v1615, %v2781
  %v4144 = vadd.f32 %v4142, %v4141
  %v4145 = vadd.f32 %v4143, %v3890
  %v4146 = vpack.c.bf16 %v4144, %v4144
  %v4147 = vpack.c.bf16 %v4145, %v4145
  %v4148 = vld [vmem:[%s14] sm:$0xff]
  %v4149 = vld [vmem:[%s14 + $0x8] sm:$0xff]
  %v4150 = vld [vmem:[%s14 + $0x10] sm:$0xff]
  %v4151 = vld [vmem:[%s14 + $0x18] sm:$0xff]
  %v4152 = vld [vmem:[%s14 + $0x20] sm:$0xff]
  %v4153 = vld [vmem:[%s14 + $0x28] sm:$0xff]
  %v4154 = vld [vmem:[%s14 + $0x30] sm:$0xff]
  %v4155 = vld [vmem:[%s14 + $0x38] sm:$0xff]
  %v4156 = vld [vmem:[%s14 + $0x40] sm:$0xff]
  %v4157 = vld [vmem:[%s14 + $0x48] sm:$0xff]
  %v4158 = vld [vmem:[%s14 + $0x50] sm:$0xff]
  %v4159 = vld [vmem:[%s14 + $0x58] sm:$0xff]
  %v4160 = vld [vmem:[%s14 + $0x60] sm:$0xff]
  %v4161 = vld [vmem:[%s14 + $0x68] sm:$0xff]
  %v4162 = vld [vmem:[%s14 + $0x70] sm:$0xff]
  %v4163 = vld [vmem:[%s14 + $0x78] sm:$0xff]
  %v4164 = vld [vmem:[%s14 + $0x80] sm:$0xff]
  %v4165 = vld [vmem:[%s14 + $0x88] sm:$0xff]
  %v4166 = vld [vmem:[%s14 + $0x90] sm:$0xff]
  %v4167 = vld [vmem:[%s14 + $0x98] sm:$0xff]
  %v4168 = vld [vmem:[%s14 + $0xa0] sm:$0xff]
  %v4169 = vld [vmem:[%s14 + $0xa8] sm:$0xff]
  %v4170 = vld [vmem:[%s14 + $0xb0] sm:$0xff]
  %v4171 = vld [vmem:[%s14 + $0xb8] sm:$0xff]
  %v4172 = vld [vmem:[%s14 + $0xc0] sm:$0xff]
  %v4173 = vld [vmem:[%s14 + $0xc8] sm:$0xff]
  %v4174 = vld [vmem:[%s14 + $0xd0] sm:$0xff]
  %v4175 = vld [vmem:[%s14 + $0xd8] sm:$0xff]
  %v4176 = vld [vmem:[%s14 + $0xe0] sm:$0xff]
  %v4177 = vld [vmem:[%s14 + $0xe8] sm:$0xff]
  %v4178 = vld [vmem:[%s14 + $0xf0] sm:$0xff]
  %v4179 = vld [vmem:[%s14 + $0xf8] sm:$0xff]
  %v4180 = vld [vmem:[%s15] sm:$0x3]
  %v4182 = vperm.slane %v4180, 0
  %v4183 = vperm.slane %v4180, 1
  %v4218 = vunpack.c.l.b16 %v4148
  %v4219 = vunpack.c.h.b16 %v4148
  %v4220 = vunpack.c.l.b16 %v4149
  %v4221 = vunpack.c.h.b16 %v4149
  %v4222 = vunpack.c.l.b16 %v4150
  %v4223 = vunpack.c.h.b16 %v4150
  %v4224 = vunpack.c.l.b16 %v4151
  %v4225 = vunpack.c.h.b16 %v4151
  %v4226 = vunpack.c.l.b16 %v4152
  %v4227 = vunpack.c.h.b16 %v4152
  %v4228 = vunpack.c.l.b16 %v4153
  %v4229 = vunpack.c.h.b16 %v4153
  %v4230 = vunpack.c.l.b16 %v4154
  %v4231 = vunpack.c.h.b16 %v4154
  %v4232 = vunpack.c.l.b16 %v4155
  %v4233 = vunpack.c.h.b16 %v4155
  %v4234 = vunpack.c.l.b16 %v4156
  %v4235 = vunpack.c.h.b16 %v4156
  %v4236 = vunpack.c.l.b16 %v4157
  %v4237 = vunpack.c.h.b16 %v4157
  %v4238 = vunpack.c.l.b16 %v4158
  %v4239 = vunpack.c.h.b16 %v4158
  %v4240 = vunpack.c.l.b16 %v4159
  %v4241 = vunpack.c.h.b16 %v4159
  %v4242 = vunpack.c.l.b16 %v4160
  %v4243 = vunpack.c.h.b16 %v4160
  %v4244 = vunpack.c.l.b16 %v4161
  %v4245 = vunpack.c.h.b16 %v4161
  %v4246 = vunpack.c.l.b16 %v4162
  %v4247 = vunpack.c.h.b16 %v4162
  %v4248 = vunpack.c.l.b16 %v4163
  %v4249 = vunpack.c.h.b16 %v4163
  %v4250 = vunpack.c.l.b16 %v4164
  %v4251 = vunpack.c.h.b16 %v4164
  %v4252 = vunpack.c.l.b16 %v4165
  %v4253 = vunpack.c.h.b16 %v4165
  %v4254 = vunpack.c.l.b16 %v4166
  %v4255 = vunpack.c.h.b16 %v4166
  %v4256 = vunpack.c.l.b16 %v4167
  %v4257 = vunpack.c.h.b16 %v4167
  %v4258 = vunpack.c.l.b16 %v4168
  %v4259 = vunpack.c.h.b16 %v4168
  %v4260 = vunpack.c.l.b16 %v4169
  %v4261 = vunpack.c.h.b16 %v4169
  %v4262 = vunpack.c.l.b16 %v4170
  %v4263 = vunpack.c.h.b16 %v4170
  %v4264 = vunpack.c.l.b16 %v4171
  %v4265 = vunpack.c.h.b16 %v4171
  %v4266 = vunpack.c.l.b16 %v4172
  %v4267 = vunpack.c.h.b16 %v4172
  %v4268 = vunpack.c.l.b16 %v4173
  %v4269 = vunpack.c.h.b16 %v4173
  %v4270 = vunpack.c.l.b16 %v4174
  %v4271 = vunpack.c.h.b16 %v4174
  %v4272 = vunpack.c.l.b16 %v4175
  %v4273 = vunpack.c.h.b16 %v4175
  %v4274 = vunpack.c.l.b16 %v4176
  %v4275 = vunpack.c.h.b16 %v4176
  %v4276 = vunpack.c.l.b16 %v4177
  %v4277 = vunpack.c.h.b16 %v4177
  %v4278 = vunpack.c.l.b16 %v4178
  %v4279 = vunpack.c.h.b16 %v4178
  %v4280 = vunpack.c.l.b16 %v4179
  %v4281 = vunpack.c.h.b16 %v4179
  %v4282 = vpack.c.b16 %v4220, %v4218
  %v4283 = vpack.c.b16 %v4221, %v4219
  %v4284 = vpack.c.b16 %v4224, %v4222
  %v4285 = vpack.c.b16 %v4225, %v4223
  %v4286 = vpack.c.b16 %v4228, %v4226
  %v4287 = vpack.c.b16 %v4229, %v4227
  %v4288 = vpack.c.b16 %v4232, %v4230
  %v4289 = vpack.c.b16 %v4233, %v4231
  %v4290 = vpack.c.b16 %v4236, %v4234
  %v4291 = vpack.c.b16 %v4237, %v4235
  %v4292 = vpack.c.b16 %v4240, %v4238
  %v4293 = vpack.c.b16 %v4241, %v4239
  %v4294 = vpack.c.b16 %v4244, %v4242
  %v4295 = vpack.c.b16 %v4245, %v4243
  %v4296 = vpack.c.b16 %v4248, %v4246
  %v4297 = vpack.c.b16 %v4249, %v4247
  %v4298 = vpack.c.b16 %v4252, %v4250
  %v4299 = vpack.c.b16 %v4253, %v4251
  %v4300 = vpack.c.b16 %v4256, %v4254
  %v4301 = vpack.c.b16 %v4257, %v4255
  %v4302 = vpack.c.b16 %v4260, %v4258
  %v4303 = vpack.c.b16 %v4261, %v4259
  %v4304 = vpack.c.b16 %v4264, %v4262
  %v4305 = vpack.c.b16 %v4265, %v4263
  %v4306 = vpack.c.b16 %v4268, %v4266
  %v4307 = vpack.c.b16 %v4269, %v4267
  %v4308 = vpack.c.b16 %v4272, %v4270
  %v4309 = vpack.c.b16 %v4273, %v4271
  %v4310 = vpack.c.b16 %v4276, %v4274
  %v4311 = vpack.c.b16 %v4277, %v4275
  %v4312 = vpack.c.b16 %v4280, %v4278
  %v4313 = vpack.c.b16 %v4281, %v4279
  %4346 = vmatpush.bf16.msra.mxu0 %v4296
  %4347 = vmatpush.bf16.msra.mxu0 %v4294
  %4348 = vmatpush.bf16.msra.mxu0 %v4292
  %4349 = vmatpush.bf16.msra.mxu0 %v4290
  %4350 = vmatpush.bf16.msra.mxu0 %v4288
  %4351 = vmatpush.bf16.msra.mxu0 %v4286
  %4352 = vmatpush.bf16.msra.mxu0 %v4284
  %4353 = vmatpush.bf16.msra.mxu0 %v4282
  %4354 = vmatmul.bf16.gmra.mxu0 %v4146
  %v4355 = vpop.f32.mrf.mxu0
  %v4356 = vadd.f32 %v4182, %v4355
  %v4357 = vpop.f32.mrf.mxu0
  %4358 = vdwg.mxu0
  %4359 = vmatpush.bf16.msra.mxu0 %v4312
  %4360 = vmatpush.bf16.msra.mxu0 %v4310
  %4361 = vmatpush.bf16.msra.mxu0 %v4308
  %4362 = vmatpush.bf16.msra.mxu0 %v4306
  %4363 = vmatpush.bf16.msra.mxu0 %v4304
  %4364 = vmatpush.bf16.msra.mxu0 %v4302
  %4365 = vmatpush.bf16.msra.mxu0 %v4300
  %4366 = vmatpush.bf16.msra.mxu0 %v4298
  %4367 = vmatmul.bf16.gmra.mxu0 %v4147
  %v4368 = vpop.f32.mrf.mxu0
  %v4369 = vadd.f32 %v4356, %v4368
  %v4370 = vpop.f32.mrf.mxu0
  %4371 = vdwg.mxu0
  %4372 = vmatpush.bf16.msra.mxu0 %v4297
  %4373 = vmatpush.bf16.msra.mxu0 %v4295
  %4374 = vmatpush.bf16.msra.mxu0 %v4293
  %4375 = vmatpush.bf16.msra.mxu0 %v4291
  %4376 = vmatpush.bf16.msra.mxu0 %v4289
  %4377 = vmatpush.bf16.msra.mxu0 %v4287
  %4378 = vmatpush.bf16.msra.mxu0 %v4285
  %4379 = vmatpush.bf16.msra.mxu0 %v4283
  %4380 = vmatmul.bf16.gmra.mxu0 %v4146
  %v4381 = vpop.f32.mrf.mxu0
  %v4382 = vadd.f32 %v4183, %v4381
  %v4383 = vpop.f32.mrf.mxu0
  %4384 = vdwg.mxu0
  %4385 = vmatpush.bf16.msra.mxu0 %v4313
  %4386 = vmatpush.bf16.msra.mxu0 %v4311
  %4387 = vmatpush.bf16.msra.mxu0 %v4309
  %4388 = vmatpush.bf16.msra.mxu0 %v4307
  %4389 = vmatpush.bf16.msra.mxu0 %v4305
  %4390 = vmatpush.bf16.msra.mxu0 %v4303
  %4391 = vmatpush.bf16.msra.mxu0 %v4301
  %4392 = vmatpush.bf16.msra.mxu0 %v4299
  %4393 = vmatmul.bf16.gmra.mxu0 %v4147
  %v4394 = vpop.f32.mrf.mxu0
  %v4395 = vadd.f32 %v4382, %v4394
  %v4396 = vpop.f32.mrf.mxu0
  %4397 = vdwg.mxu0
  %v4398 = vmax.f32 %v4369, 0.0
  %v4399 = vmax.f32 %v4395, 0.0
  %v4400 = vpack.c.bf16 %v4398, %v4398
  %v4401 = vpack.c.bf16 %v4399, %v4399
  %v4402 = vld [vmem:[%s16] sm:$0xf]
  %v4403 = vld [vmem:[%s16 + $0x4] sm:$0xf]
  %v4404 = vld [vmem:[%s16 + $0x8] sm:$0xf]
  %v4405 = vld [vmem:[%s16 + $0xc] sm:$0xf]
  %v4406 = vld [vmem:[%s16 + $0x10] sm:$0xf]
  %v4407 = vld [vmem:[%s16 + $0x14] sm:$0xf]
  %v4408 = vld [vmem:[%s16 + $0x18] sm:$0xf]
  %v4409 = vld [vmem:[%s16 + $0x1c] sm:$0xf]
  %v4410 = vld [vmem:[%s16 + $0x20] sm:$0xf]
  %v4411 = vld [vmem:[%s16 + $0x24] sm:$0xf]
  %v4412 = vld [vmem:[%s16 + $0x28] sm:$0xf]
  %v4413 = vld [vmem:[%s16 + $0x2c] sm:$0xf]
  %v4414 = vld [vmem:[%s16 + $0x30] sm:$0xf]
  %v4415 = vld [vmem:[%s16 + $0x34] sm:$0xf]
  %v4416 = vld [vmem:[%s16 + $0x38] sm:$0xf]
  %v4417 = vld [vmem:[%s16 + $0x3c] sm:$0xf]
  %v4418 = vld [vmem:[%s16 + $0x40] sm:$0xf]
  %v4419 = vld [vmem:[%s16 + $0x44] sm:$0xf]
  %v4420 = vld [vmem:[%s16 + $0x48] sm:$0xf]
  %v4421 = vld [vmem:[%s16 + $0x4c] sm:$0xf]
  %v4422 = vld [vmem:[%s16 + $0x50] sm:$0xf]
  %v4423 = vld [vmem:[%s16 + $0x54] sm:$0xf]
  %v4424 = vld [vmem:[%s16 + $0x58] sm:$0xf]
  %v4425 = vld [vmem:[%s16 + $0x5c] sm:$0xf]
  %v4426 = vld [vmem:[%s16 + $0x60] sm:$0xf]
  %v4427 = vld [vmem:[%s16 + $0x64] sm:$0xf]
  %v4428 = vld [vmem:[%s16 + $0x68] sm:$0xf]
  %v4429 = vld [vmem:[%s16 + $0x6c] sm:$0xf]
  %v4430 = vld [vmem:[%s16 + $0x70] sm:$0xf]
  %v4431 = vld [vmem:[%s16 + $0x74] sm:$0xf]
  %v4432 = vld [vmem:[%s16 + $0x78] sm:$0xf]
  %v4433 = vld [vmem:[%s16 + $0x7c] sm:$0xf]
  %v4434 = vld [vmem:[%s17] sm:$0x1]
  %v4436 = vperm.slane %v4434, 0
  %v4470 = vunpack.c.l.b16 %v4402
  %v4471 = vunpack.c.l.b16 %v4403
  %v4472 = vunpack.c.l.b16 %v4404
  %v4473 = vunpack.c.l.b16 %v4405
  %v4474 = vunpack.c.l.b16 %v4406
  %v4475 = vunpack.c.l.b16 %v4407
  %v4476 = vunpack.c.l.b16 %v4408
  %v4477 = vunpack.c.l.b16 %v4409
  %v4478 = vunpack.c.l.b16 %v4410
  %v4479 = vunpack.c.l.b16 %v4411
  %v4480 = vunpack.c.l.b16 %v4412
  %v4481 = vunpack.c.l.b16 %v4413
  %v4482 = vunpack.c.l.b16 %v4414
  %v4483 = vunpack.c.l.b16 %v4415
  %v4484 = vunpack.c.l.b16 %v4416
  %v4485 = vunpack.c.l.b16 %v4417
  %v4486 = vunpack.c.l.b16 %v4418
  %v4487 = vunpack.c.l.b16 %v4419
  %v4488 = vunpack.c.l.b16 %v4420
  %v4489 = vunpack.c.l.b16 %v4421
  %v4490 = vunpack.c.l.b16 %v4422
  %v4491 = vunpack.c.l.b16 %v4423
  %v4492 = vunpack.c.l.b16 %v4424
  %v4493 = vunpack.c.l.b16 %v4425
  %v4494 = vunpack.c.l.b16 %v4426
  %v4495 = vunpack.c.l.b16 %v4427
  %v4496 = vunpack.c.l.b16 %v4428
  %v4497 = vunpack.c.l.b16 %v4429
  %v4498 = vunpack.c.l.b16 %v4430
  %v4499 = vunpack.c.l.b16 %v4431
  %v4500 = vunpack.c.l.b16 %v4432
  %v4501 = vunpack.c.l.b16 %v4433
  %v4502 = vpack.c.b16 %v4471, %v4470
  %v4503 = vpack.c.b16 %v4473, %v4472
  %v4504 = vpack.c.b16 %v4475, %v4474
  %v4505 = vpack.c.b16 %v4477, %v4476
  %v4506 = vpack.c.b16 %v4479, %v4478
  %v4507 = vpack.c.b16 %v4481, %v4480
  %v4508 = vpack.c.b16 %v4483, %v4482
  %v4509 = vpack.c.b16 %v4485, %v4484
  %v4510 = vpack.c.b16 %v4487, %v4486
  %v4511 = vpack.c.b16 %v4489, %v4488
  %v4512 = vpack.c.b16 %v4491, %v4490
  %v4513 = vpack.c.b16 %v4493, %v4492
  %v4514 = vpack.c.b16 %v4495, %v4494
  %v4515 = vpack.c.b16 %v4497, %v4496
  %v4516 = vpack.c.b16 %v4499, %v4498
  %v4517 = vpack.c.b16 %v4501, %v4500
  %4534 = vmatpush.bf16.msra.mxu0 %v4509
  %4535 = vmatpush.bf16.msra.mxu0 %v4508
  %4536 = vmatpush.bf16.msra.mxu0 %v4507
  %4537 = vmatpush.bf16.msra.mxu0 %v4506
  %4538 = vmatpush.bf16.msra.mxu0 %v4505
  %4539 = vmatpush.bf16.msra.mxu0 %v4504
  %4540 = vmatpush.bf16.msra.mxu0 %v4503
  %4541 = vmatpush.bf16.msra.mxu0 %v4502
  %4542 = vmatmul.bf16.gmra.mxu0 %v4400
  %v4543 = vpop.f32.mrf.mxu0
  %v4544 = vadd.f32 %v4436, %v4543
  %v4545 = vpop.f32.mrf.mxu0
  %4546 = vdwg.mxu0
  %4547 = vmatpush.bf16.msra.mxu0 %v4517
  %4548 = vmatpush.bf16.msra.mxu0 %v4516
  %4549 = vmatpush.bf16.msra.mxu0 %v4515
  %4550 = vmatpush.bf16.msra.mxu0 %v4514
  %4551 = vmatpush.bf16.msra.mxu0 %v4513
  %4552 = vmatpush.bf16.msra.mxu0 %v4512
  %4553 = vmatpush.bf16.msra.mxu0 %v4511
  %4554 = vmatpush.bf16.msra.mxu0 %v4510
  %4555 = vmatmul.bf16.gmra.mxu0 %v4401
  %v4556 = vpop.f32.mrf.mxu0
  %v4557 = vadd.f32 %v4544, %v4556
  %v4558 = vpop.f32.mrf.mxu0
  %4559 = vdwg.mxu0
  %v4560 = vmax.f32 %v4557, 0.0
  %v4561 = vpack.c.bf16 %v4560, %v4560
  %v4562 = vld [vmem:[%s18] sm:$0xf]
  %v4563 = vld [vmem:[%s18 + $0x4] sm:$0xf]
  %v4564 = vld [vmem:[%s18 + $0x8] sm:$0xf]
  %v4565 = vld [vmem:[%s18 + $0xc] sm:$0xf]
  %v4566 = vld [vmem:[%s18 + $0x10] sm:$0xf]
  %v4567 = vld [vmem:[%s18 + $0x14] sm:$0xf]
  %v4568 = vld [vmem:[%s18 + $0x18] sm:$0xf]
  %v4569 = vld [vmem:[%s18 + $0x1c] sm:$0xf]
  %v4570 = vld [vmem:[%s18 + $0x20] sm:$0xf]
  %v4571 = vld [vmem:[%s18 + $0x24] sm:$0xf]
  %v4572 = vld [vmem:[%s18 + $0x28] sm:$0xf]
  %v4573 = vld [vmem:[%s18 + $0x2c] sm:$0xf]
  %v4574 = vld [vmem:[%s18 + $0x30] sm:$0xf]
  %v4575 = vld [vmem:[%s18 + $0x34] sm:$0xf]
  %v4576 = vld [vmem:[%s18 + $0x38] sm:$0xf]
  %v4577 = vld [vmem:[%s18 + $0x3c] sm:$0xf]
  %v4594 = vunpack.c.l.b16 %v4562
  %v4595 = vunpack.c.l.b16 %v4563
  %v4596 = vunpack.c.l.b16 %v4564
  %v4597 = vunpack.c.l.b16 %v4565
  %v4598 = vunpack.c.l.b16 %v4566
  %v4599 = vunpack.c.l.b16 %v4567
  %v4600 = vunpack.c.l.b16 %v4568
  %v4601 = vunpack.c.l.b16 %v4569
  %v4602 = vunpack.c.l.b16 %v4570
  %v4603 = vunpack.c.l.b16 %v4571
  %v4604 = vunpack.c.l.b16 %v4572
  %v4605 = vunpack.c.l.b16 %v4573
  %v4606 = vunpack.c.l.b16 %v4574
  %v4607 = vunpack.c.l.b16 %v4575
  %v4608 = vunpack.c.l.b16 %v4576
  %v4609 = vunpack.c.l.b16 %v4577
  %v4610 = vpack.c.b16 %v4595, %v4594
  %v4611 = vpack.c.b16 %v4597, %v4596
  %v4612 = vpack.c.b16 %v4599, %v4598
  %v4613 = vpack.c.b16 %v4601, %v4600
  %v4614 = vpack.c.b16 %v4603, %v4602
  %v4615 = vpack.c.b16 %v4605, %v4604
  %v4616 = vpack.c.b16 %v4607, %v4606
  %v4617 = vpack.c.b16 %v4609, %v4608
  %4626 = vmatpush.bf16.xpose.msra.mxu0 %v4617
  %4627 = vmatpush.bf16.xpose.msra.mxu0 %v4616
  %4628 = vmatpush.bf16.xpose.msra.mxu0 %v4615
  %4629 = vmatpush.bf16.xpose.msra.mxu0 %v4614
  %4630 = vmatpush.bf16.xpose.msra.mxu0 %v4613
  %4631 = vmatpush.bf16.xpose.msra.mxu0 %v4612
  %4632 = vmatpush.bf16.xpose.msra.mxu0 %v4611
  %4633 = vmatpush.bf16.xpose.msra.mxu0 %v4610
  %4634 = vmatmul.bf16.gmra.mxu0 %v4561
  %v4635 = vpop.f32.mrf.mxu0
  %v4636 = vadd.f32 0.0, %v4635
  %v4637 = vpop.f32.mrf.mxu0
  %4638 = vdwg.mxu0
  %v4639 = vmul.f32 %v4636, %v94
  %v4640 = vsel %vm194, %v4639, 0.0
  %v4641 = vrot.slane %v4640, 4
  %v4642 = vadd.f32 %v4640, %v4641
  %v4643 = vrot.slane %v4642, 2
  %v4644 = vadd.f32 %v4642, %v4643
  %v4645 = vrot.slane %v4644, 1
  %v4646 = vadd.f32 %v4644, %v4645
  %v4647 = vsub.f32 0.0, %v4646
  %v4648 = vmul.f32 %v4647, 1.442695
  %v4649 = vpow.pop %v4648
  %v4650 = vadd.f32 %v4649, 1.0
  %v4651 = vrcp.pop %v4650
  %v4652 = vmin.f32 %v4651, 1.0
  %4653 = vst [vmem:[%s19] sm:$0x1] %v4652
  // Predicated region
  $region78: #{net_forward.1} parent=0 // pred_check
    _
  $region79: #{net_forward.1} parent=0 // pred_check_branch
    %4655 = sbr.rel (0) target = $region81
  $region80: #{net_forward.1} parent=0 // pred_region
    _
  $region81: #{net_forward.1} parent=0 // pred_fallthru
    _
  // Predicated region
  $region82: #{net_forward.1} parent=0 // pred_check
    _
  $region83: #{net_forward.1} parent=0 // pred_check_branch
    %4657 = sbr.rel (0) target = $region85
  $region84: #{net_forward.1} parent=0 // pred_region
    _
  $region85: #{net_forward.1} parent=0 // pred_fallthru
    _

</llo_original>
